<compile_context>
chip_gen: v5e
topology: v5e:2x2
jax: 0.10.0
libtpu: 0.0.40
codegen_flags: <defaults>
</compile_context>

<pallas_src>
import jax
import jax.numpy as jnp
from jax import lax
from jax.experimental import pallas as pl
from jax.experimental.pallas import tpu as pltpu


# ----------------------------------------------------------------------------
# Small helpers
# ----------------------------------------------------------------------------
def _round_up(x, m):
    return (x + m - 1) // m * m


def _pick_tile_m(M, target, unit=16):
    """Row tile: a multiple of `unit`, <= target, and <= M//2 whenever M is big
    enough so the "parallel" grid axis has >= 2 steps (v7x megacore + pipeline
    overlap).  Prefers a tile that divides M exactly to avoid padding."""
    if M <= unit:
        return unit
    cap = min(target, M)
    if M >= 2 * unit:
        cap = min(cap, M // 2)
    cap = max(unit, cap // unit * unit)
    for tm in range(cap, unit - 1, -unit):
        if M % tm == 0:
            return tm
    return cap


_COMPILER_PARAMS = pltpu.CompilerParams(
    dimension_semantics=("parallel",),
    vmem_limit_bytes=32 * 1024 * 1024,
)


# ----------------------------------------------------------------------------
# Pallas kernel 1: fused conv-as-matmul + 2x2 max-pool + bias + ReLU
#   Inputs are the 4 pool-corner im2col matrices; the kernel computes
#   relu(max_c(x_c @ w) + b) and stores the pooled rows directly (bf16).
# ----------------------------------------------------------------------------
def _conv_pool_relu_kernel(x0_ref, x1_ref, x2_ref, x3_ref, w_ref, b_ref, o_ref):
    w = w_ref[...]
    z = jnp.dot(x0_ref[...], w, preferred_element_type=jnp.float32)
    z = jnp.maximum(z, jnp.dot(x1_ref[...], w, preferred_element_type=jnp.float32))
    z = jnp.maximum(z, jnp.dot(x2_ref[...], w, preferred_element_type=jnp.float32))
    z = jnp.maximum(z, jnp.dot(x3_ref[...], w, preferred_element_type=jnp.float32))
    o_ref[...] = jnp.maximum(z + b_ref[...], 0.0).astype(o_ref.dtype)


def conv_pool_relu(x_groups, w, b, *, tm_target):
    """x_groups: 4 x (M, K) bf16 pool-corner patch matrices; w: (K, N) bf16;
    b: (1, N) f32.  Returns pooled activations (M, N) in bf16."""
    M, K = x_groups[0].shape
    K2, N = w.shape
    assert K == K2 and b.shape == (1, N)
    for g in x_groups:
        assert g.shape == (M, K)

    tm = _pick_tile_m(M, tm_target)
    Mp = _round_up(M, tm)
    if Mp != M:
        x_groups = [jnp.pad(g, ((0, Mp - M), (0, 0))) for g in x_groups]

    act_spec = pl.BlockSpec((tm, K), lambda i: (i, 0))       # tiled over pooled rows
    out = pl.pallas_call(
        _conv_pool_relu_kernel,
        out_shape=jax.ShapeDtypeStruct((Mp, N), jnp.bfloat16),
        grid=(Mp // tm,),
        in_specs=[act_spec, act_spec, act_spec, act_spec,
                  pl.BlockSpec((K, N), lambda i: (0, 0)),    # weights: resident
                  pl.BlockSpec((1, N), lambda i: (0, 0))],   # bias: resident
        out_specs=pl.BlockSpec((tm, N), lambda i: (i, 0)),
        compiler_params=_COMPILER_PARAMS,
    )(*(g.astype(jnp.bfloat16) for g in x_groups),
      w.astype(jnp.bfloat16), b.astype(jnp.float32))
    return out if Mp == M else out[:M]


# ----------------------------------------------------------------------------
# Pallas kernel 2: fused MLP head  fc1 -> ReLU -> fc2 -> log_softmax
#   fc2 is pre-padded to 128 output columns (lane-dense store); padded columns
#   carry f32 bias -1e30 so they contribute exp(.) == 0 to the softmax sum.
# ----------------------------------------------------------------------------
def _mlp_head_kernel(x_ref, w1_ref, b1_ref, w2_ref, b2_ref, o_ref):
    h = jnp.dot(x_ref[...], w1_ref[...], preferred_element_type=jnp.float32)
    h = jnp.maximum(h + b1_ref[...], 0.0)
    z = jnp.dot(h.astype(jnp.bfloat16), w2_ref[...],
                preferred_element_type=jnp.float32)
    z = z + b2_ref[...]
    m = jnp.max(z, axis=-1, keepdims=True)
    e = jnp.exp(z - m)
    o_ref[...] = (z - m) - jnp.log(jnp.sum(e, axis=-1, keepdims=True))


def mlp_head(x, w1, b1, w2, b2, *, tm_target=512):
    M, K = x.shape
    K1, N1 = w1.shape
    K2, N2 = w2.shape
    assert K == K1 and N1 == K2 and b1.shape == (1, N1) and b2.shape == (1, N2)
    tm = _pick_tile_m(M, tm_target)
    Mp = _round_up(M, tm)
    xp = x if Mp == M else jnp.pad(x, ((0, Mp - M), (0, 0)))

    out = pl.pallas_call(
        _mlp_head_kernel,
        out_shape=jax.ShapeDtypeStruct((Mp, N2), jnp.float32),
        grid=(Mp // tm,),
        in_specs=[
            pl.BlockSpec((tm, K), lambda i: (i, 0)),
            pl.BlockSpec((K, N1), lambda i: (0, 0)),
            pl.BlockSpec((1, N1), lambda i: (0, 0)),
            pl.BlockSpec((N1, N2), lambda i: (0, 0)),
            pl.BlockSpec((1, N2), lambda i: (0, 0)),
        ],
        out_specs=pl.BlockSpec((tm, N2), lambda i: (i, 0)),
        compiler_params=_COMPILER_PARAMS,
    )(xp.astype(jnp.bfloat16), w1.astype(jnp.bfloat16), b1.astype(jnp.float32),
      w2.astype(jnp.bfloat16), b2.astype(jnp.float32))
    return out if Mp == M else out[:M]


# ----------------------------------------------------------------------------
# Plain-JAX glue: im2col split into the 4 pool-corner groups (bf16, NHWC).
# Rows of each group are ordered (batch, pooled_row, pooled_col); columns are
# ordered (kh, kw, cin), matching the conv-weight repack below.
# ----------------------------------------------------------------------------
def im2col_pool_groups(x, kh, kw):
    B, H, W, C = x.shape
    Ho, Wo = H - kh + 1, W - kw + 1
    patches = [x[:, i:i + Ho, j:j + Wo, :] for i in range(kh) for j in range(kw)]
    p = jnp.stack(patches, axis=3).reshape(B, Ho, Wo, kh * kw * C)
    hp, wp = Ho // 2, Wo // 2
    groups = [p[:, a::2, b::2, :].reshape(B * hp * wp, kh * kw * C)
              for a in range(2) for b in range(2)]
    return groups, hp, wp


# ----------------------------------------------------------------------------
# Parameters (PyTorch layout) and one-time repack into kernel layout
# ----------------------------------------------------------------------------
def init_params(key):
    ks = jax.random.split(key, 8)
    scale = 0.1
    return {
        "conv1_w": scale * jax.random.normal(ks[0], (20, 1, 5, 5), jnp.float32),
        "conv1_b": scale * jax.random.normal(ks[1], (20,), jnp.float32),
        "conv2_w": scale * jax.random.normal(ks[2], (50, 20, 5, 5), jnp.float32),
        "conv2_b": scale * jax.random.normal(ks[3], (50,), jnp.float32),
        "fc1_w": scale * jax.random.normal(ks[4], (500, 800), jnp.float32),
        "fc1_b": scale * jax.random.normal(ks[5], (500,), jnp.float32),
        "fc2_w": scale * jax.random.normal(ks[6], (10, 500), jnp.float32),
        "fc2_b": scale * jax.random.normal(ks[7], (10,), jnp.float32),
    }


def prepare_params(params):
    """One-time repack of PyTorch-layout weights into the kernel (NHWC/bf16) layout."""
    # conv weights (O, I, kh, kw) -> (kh*kw*I, O), matching im2col (i, j, c) order
    w1 = params["conv1_w"].transpose(2, 3, 1, 0).reshape(5 * 5 * 1, 20)
    w2 = params["conv2_w"].transpose(2, 3, 1, 0).reshape(5 * 5 * 20, 50)
    # fc1 consumes the NHWC flatten (4,4,50); permute its NCHW-ordered columns once
    perm = jnp.arange(4 * 4 * 50).reshape(50, 4, 4).transpose(1, 2, 0).reshape(-1)
    wf1 = params["fc1_w"][:, perm].T                                    # (800, 500)
    # fc2: pad N 10 -> 128 for lane-dense stores; padded logits get f32 bias -1e30
    wf2 = jnp.pad(params["fc2_w"].T, ((0, 0), (0, 128 - 10)))           # (500, 128)
    bf2 = jnp.pad(params["fc2_b"], (0, 128 - 10), constant_values=-1e30)
    return {
        "conv1_w": w1.astype(jnp.bfloat16),
        "conv1_b": params["conv1_b"][None, :].astype(jnp.float32),
        "conv2_w": w2.astype(jnp.bfloat16),
        "conv2_b": params["conv2_b"][None, :].astype(jnp.float32),
        "fc1_w": wf1.astype(jnp.bfloat16),
        "fc1_b": params["fc1_b"][None, :].astype(jnp.float32),
        "fc2_w": wf2.astype(jnp.bfloat16),
        "fc2_b": bf2[None, :].astype(jnp.float32),
    }


# ----------------------------------------------------------------------------
# Forward pass (NCHW input, like PyTorch; NHWC + bf16 internally)
# ----------------------------------------------------------------------------
@jax.jit
def net_forward(x, kp):
    x = jnp.transpose(x, (0, 2, 3, 1)).astype(jnp.bfloat16)       # (B,28,28,1) NHWC bf16
    B = x.shape[0]

    # conv1 (1 -> 20, 5x5) + ReLU + fused 2x2 max pool
    g1, hp, wp = im2col_pool_groups(x, 5, 5)                      # 4 x (B*12*12, 25)
    y = conv_pool_relu(g1, kp["conv1_w"], kp["conv1_b"], tm_target=1024)
    y = y.reshape(B, hp, wp, 20)                                  # (B,12,12,20) bf16

    # conv2 (20 -> 50, 5x5) + ReLU + fused 2x2 max pool
    g2, hp, wp = im2col_pool_groups(y, 5, 5)                      # 4 x (B*4*4, 500)
    y = conv_pool_relu(g2, kp["conv2_w"], kp["conv2_b"], tm_target=256)

    # NHWC flatten (fc1 weights were column-permuted to match PyTorch's NCHW view)
    y = y.reshape(B, hp * wp * 50)                                # (B, 800) bf16

    # fused fc1 + ReLU + fc2 + log_softmax (fc2 padded to 128 lanes)
    logits = mlp_head(y, kp["fc1_w"], kp["fc1_b"], kp["fc2_w"], kp["fc2_b"],
                      tm_target=512)
    return logits[:, :10]                                         # (B, 10) f32


# ----------------------------------------------------------------------------
# Pure-JAX f32 reference (direct transcription of the PyTorch module)
# ----------------------------------------------------------------------------
@jax.jit
def reference_forward(x, params):
    dn = ("NCHW", "OIHW", "NCHW")
    y = lax.conv_general_dilated(x, params["conv1_w"], (1, 1), "VALID",
                                 dimension_numbers=dn)
    y = jax.nn.relu(y + params["conv1_b"][None, :, None, None])
    y = lax.reduce_window(y, -jnp.inf, lax.max, (1, 1, 2, 2), (1, 1, 2, 2), "VALID")
    y = lax.conv_general_dilated(y, params["conv2_w"], (1, 1), "VALID",
                                 dimension_numbers=dn)
    y = jax.nn.relu(y + params["conv2_b"][None, :, None, None])
    y = lax.reduce_window(y, -jnp.inf, lax.max, (1, 1, 2, 2), (1, 1, 2, 2), "VALID")
    y = y.reshape(y.shape[0], -1)
    y = jax.nn.relu(y @ params["fc1_w"].T + params["fc1_b"])
    y = y @ params["fc2_w"].T + params["fc2_b"]
    return jax.nn.log_softmax(y, axis=1)


if __name__ == "__main__":
    key = jax.random.PRNGKey(0)
    kx, kparam = jax.random.split(key)
    # MNIST-shaped input (28x28 is required by fc1's 4*4*50 expectation)
    x = jax.random.normal(kx, (2, 1, 28, 28), jnp.float32)
    params = init_params(kparam)
    kernel_params = prepare_params(params)

    out = jax.block_until_ready(net_forward(x, kernel_params))
    ref = jax.block_until_ready(reference_forward(x, params))

    assert out.shape == (2, 10)
    assert bool(jnp.all(jnp.isfinite(out)))
    # log_softmax rows exponentiate-and-sum to ~1 (padded columns contribute 0)
    assert jnp.allclose(jnp.sum(jnp.exp(out), axis=1), 1.0, atol=1e-4)
    # matches the PyTorch-semantics f32 reference (bf16 activations -> loose tol)
    assert jnp.allclose(out, ref, atol=0.2), (out, ref)
    print("KERNEL_OK")
</pallas_src>

<mosaic_0001>
module attributes {stable_mosaic.version = 11 : i64} {
  func.func @_conv_pool_relu_kernel(%arg0: i32, %arg1: memref<144x25xbf16, #tpu.memory_space<vmem>>, %arg2: memref<144x25xbf16, #tpu.memory_space<vmem>>, %arg3: memref<144x25xbf16, #tpu.memory_space<vmem>>, %arg4: memref<144x25xbf16, #tpu.memory_space<vmem>>, %arg5: memref<25x20xbf16, #tpu.memory_space<vmem>>, %arg6: memref<1x20xf32, #tpu.memory_space<vmem>>, %arg7: memref<144x20xbf16, #tpu.memory_space<vmem>>) attributes {dimension_semantics = [#tpu.dimension_semantics<parallel>], iteration_bounds = array<i64: 2>, scalar_prefetch = 0 : i64, scratch_operands = 0 : i64, tpu.core_type = #tpu.core_type<tc>, window_params = [{transform_indices = @transform_0, window_bounds = array<i64: 144, 25>}, {transform_indices = @transform_1, window_bounds = array<i64: 144, 25>}, {transform_indices = @transform_2, window_bounds = array<i64: 144, 25>}, {transform_indices = @transform_3, window_bounds = array<i64: 144, 25>}, {pipeline_mode = #tpu.pipeline_mode<synchronous>, transform_indices = @transform_4, window_bounds = array<i64: 25, 20>}, {pipeline_mode = #tpu.pipeline_mode<synchronous>, transform_indices = @transform_5, window_bounds = array<i64: 1, 20>}, {transform_indices = @transform_6, window_bounds = array<i64: 144, 20>}]} {
    %c0 = arith.constant 0 : index
    %c0_0 = arith.constant 0 : index
    %0 = vector.load %arg5[%c0, %c0_0] : memref<25x20xbf16, #tpu.memory_space<vmem>>, vector<25x20xbf16>
    %c0_1 = arith.constant 0 : index
    %c0_2 = arith.constant 0 : index
    %1 = vector.load %arg1[%c0_1, %c0_2] : memref<144x25xbf16, #tpu.memory_space<vmem>>, vector<144x25xbf16>
    %cst = arith.constant dense<0.000000e+00> : vector<144x20xf32>
    %2 = tpu.matmul %1, %0, %cst {dimension_numbers = #tpu.dot_dimension_numbers<[1], [0], [0], [1], [0, 0, 1, 1], [], []>} : vector<144x25xbf16>, vector<25x20xbf16>, vector<144x20xf32> -> vector<144x20xf32>
    %c0_3 = arith.constant 0 : index
    %c0_4 = arith.constant 0 : index
    %3 = vector.load %arg2[%c0_3, %c0_4] : memref<144x25xbf16, #tpu.memory_space<vmem>>, vector<144x25xbf16>
    %cst_5 = arith.constant dense<0.000000e+00> : vector<144x20xf32>
    %4 = tpu.matmul %3, %0, %cst_5 {dimension_numbers = #tpu.dot_dimension_numbers<[1], [0], [0], [1], [0, 0, 1, 1], [], []>} : vector<144x25xbf16>, vector<25x20xbf16>, vector<144x20xf32> -> vector<144x20xf32>
    %5 = arith.maximumf %2, %4 : vector<144x20xf32>
    %c0_6 = arith.constant 0 : index
    %c0_7 = arith.constant 0 : index
    %6 = vector.load %arg3[%c0_6, %c0_7] : memref<144x25xbf16, #tpu.memory_space<vmem>>, vector<144x25xbf16>
    %cst_8 = arith.constant dense<0.000000e+00> : vector<144x20xf32>
    %7 = tpu.matmul %6, %0, %cst_8 {dimension_numbers = #tpu.dot_dimension_numbers<[1], [0], [0], [1], [0, 0, 1, 1], [], []>} : vector<144x25xbf16>, vector<25x20xbf16>, vector<144x20xf32> -> vector<144x20xf32>
    %8 = arith.maximumf %5, %7 : vector<144x20xf32>
    %c0_9 = arith.constant 0 : index
    %c0_10 = arith.constant 0 : index
    %9 = vector.load %arg4[%c0_9, %c0_10] : memref<144x25xbf16, #tpu.memory_space<vmem>>, vector<144x25xbf16>
    %cst_11 = arith.constant dense<0.000000e+00> : vector<144x20xf32>
    %10 = tpu.matmul %9, %0, %cst_11 {dimension_numbers = #tpu.dot_dimension_numbers<[1], [0], [0], [1], [0, 0, 1, 1], [], []>} : vector<144x25xbf16>, vector<25x20xbf16>, vector<144x20xf32> -> vector<144x20xf32>
    %11 = arith.maximumf %8, %10 : vector<144x20xf32>
    %c0_12 = arith.constant 0 : index
    %c0_13 = arith.constant 0 : index
    %12 = vector.load %arg6[%c0_12, %c0_13] : memref<1x20xf32, #tpu.memory_space<vmem>>, vector<1x20xf32>
    %13 = vector.broadcast %12 : vector<1x20xf32> to vector<144x20xf32>
    %14 = arith.addf %11, %13 : vector<144x20xf32>
    %cst_14 = arith.constant 0.000000e+00 : f32
    %15 = vector.broadcast %cst_14 : f32 to vector<144x20xf32>
    %16 = arith.maximumf %14, %15 : vector<144x20xf32>
    %17 = arith.truncf %16 : vector<144x20xf32> to vector<144x20xbf16>
    %c0_15 = arith.constant 0 : index
    %c0_16 = arith.constant 0 : index
    %18 = vector.load %arg7[%c0_15, %c0_16] : memref<144x20xbf16, #tpu.memory_space<vmem>>, vector<144x20xbf16>
    tpu.vector_store %arg7[%c0_15, %c0_16], %17 {strides = array<i32>} : memref<144x20xbf16, #tpu.memory_space<vmem>>, vector<144x20xbf16>,
    return
  }
  func.func @transform_0(%arg0: i32) -> (i32, i32) {
    %c0_i32 = arith.constant 0 : i32
    %c0_i32_0 = arith.constant 0 : i32
    return %arg0, %c0_i32 : i32, i32
  }
  func.func @transform_1(%arg0: i32) -> (i32, i32) {
    %c0_i32 = arith.constant 0 : i32
    %c0_i32_0 = arith.constant 0 : i32
    return %arg0, %c0_i32 : i32, i32
  }
  func.func @transform_2(%arg0: i32) -> (i32, i32) {
    %c0_i32 = arith.constant 0 : i32
    %c0_i32_0 = arith.constant 0 : i32
    return %arg0, %c0_i32 : i32, i32
  }
  func.func @transform_3(%arg0: i32) -> (i32, i32) {
    %c0_i32 = arith.constant 0 : i32
    %c0_i32_0 = arith.constant 0 : i32
    return %arg0, %c0_i32 : i32, i32
  }
  func.func @transform_4(%arg0: i32) -> (i32, i32) {
    %c0_i32 = arith.constant 0 : i32
    %c0_i32_0 = arith.constant 0 : i32
    %c0_i32_1 = arith.constant 0 : i32
    return %c0_i32, %c0_i32_0 : i32, i32
  }
  func.func @transform_5(%arg0: i32) -> (i32, i32) {
    %c0_i32 = arith.constant 0 : i32
    %c0_i32_0 = arith.constant 0 : i32
    %c0_i32_1 = arith.constant 0 : i32
    return %c0_i32, %c0_i32_0 : i32, i32
  }
  func.func @transform_6(%arg0: i32) -> (i32, i32) {
    %c0_i32 = arith.constant 0 : i32
    %c0_i32_0 = arith.constant 0 : i32
    return %arg0, %c0_i32 : i32, i32
  }
}

module attributes {stable_mosaic.version = 11 : i64} {
  func.func @_conv_pool_relu_kernel(%arg0: i32, %arg1: memref<16x500xbf16, #tpu.memory_space<vmem>>, %arg2: memref<16x500xbf16, #tpu.memory_space<vmem>>, %arg3: memref<16x500xbf16, #tpu.memory_space<vmem>>, %arg4: memref<16x500xbf16, #tpu.memory_space<vmem>>, %arg5: memref<500x50xbf16, #tpu.memory_space<vmem>>, %arg6: memref<1x50xf32, #tpu.memory_space<vmem>>, %arg7: memref<16x50xbf16, #tpu.memory_space<vmem>>) attributes {dimension_semantics = [#tpu.dimension_semantics<parallel>], iteration_bounds = array<i64: 2>, scalar_prefetch = 0 : i64, scratch_operands = 0 : i64, tpu.core_type = #tpu.core_type<tc>, window_params = [{transform_indices = @transform_0, window_bounds = array<i64: 16, 500>}, {transform_indices = @transform_1, window_bounds = array<i64: 16, 500>}, {transform_indices = @transform_2, window_bounds = array<i64: 16, 500>}, {transform_indices = @transform_3, window_bounds = array<i64: 16, 500>}, {pipeline_mode = #tpu.pipeline_mode<synchronous>, transform_indices = @transform_4, window_bounds = array<i64: 500, 50>}, {pipeline_mode = #tpu.pipeline_mode<synchronous>, transform_indices = @transform_5, window_bounds = array<i64: 1, 50>}, {transform_indices = @transform_6, window_bounds = array<i64: 16, 50>}]} {
    %c0 = arith.constant 0 : index
    %c0_0 = arith.constant 0 : index
    %0 = vector.load %arg5[%c0, %c0_0] : memref<500x50xbf16, #tpu.memory_space<vmem>>, vector<500x50xbf16>
    %c0_1 = arith.constant 0 : index
    %c0_2 = arith.constant 0 : index
    %1 = vector.load %arg1[%c0_1, %c0_2] : memref<16x500xbf16, #tpu.memory_space<vmem>>, vector<16x500xbf16>
    %cst = arith.constant dense<0.000000e+00> : vector<16x50xf32>
    %2 = tpu.matmul %1, %0, %cst {dimension_numbers = #tpu.dot_dimension_numbers<[1], [0], [0], [1], [0, 0, 1, 1], [], []>} : vector<16x500xbf16>, vector<500x50xbf16>, vector<16x50xf32> -> vector<16x50xf32>
    %c0_3 = arith.constant 0 : index
    %c0_4 = arith.constant 0 : index
    %3 = vector.load %arg2[%c0_3, %c0_4] : memref<16x500xbf16, #tpu.memory_space<vmem>>, vector<16x500xbf16>
    %cst_5 = arith.constant dense<0.000000e+00> : vector<16x50xf32>
    %4 = tpu.matmul %3, %0, %cst_5 {dimension_numbers = #tpu.dot_dimension_numbers<[1], [0], [0], [1], [0, 0, 1, 1], [], []>} : vector<16x500xbf16>, vector<500x50xbf16>, vector<16x50xf32> -> vector<16x50xf32>
    %5 = arith.maximumf %2, %4 : vector<16x50xf32>
    %c0_6 = arith.constant 0 : index
    %c0_7 = arith.constant 0 : index
    %6 = vector.load %arg3[%c0_6, %c0_7] : memref<16x500xbf16, #tpu.memory_space<vmem>>, vector<16x500xbf16>
    %cst_8 = arith.constant dense<0.000000e+00> : vector<16x50xf32>
    %7 = tpu.matmul %6, %0, %cst_8 {dimension_numbers = #tpu.dot_dimension_numbers<[1], [0], [0], [1], [0, 0, 1, 1], [], []>} : vector<16x500xbf16>, vector<500x50xbf16>, vector<16x50xf32> -> vector<16x50xf32>
    %8 = arith.maximumf %5, %7 : vector<16x50xf32>
    %c0_9 = arith.constant 0 : index
    %c0_10 = arith.constant 0 : index
    %9 = vector.load %arg4[%c0_9, %c0_10] : memref<16x500xbf16, #tpu.memory_space<vmem>>, vector<16x500xbf16>
    %cst_11 = arith.constant dense<0.000000e+00> : vector<16x50xf32>
    %10 = tpu.matmul %9, %0, %cst_11 {dimension_numbers = #tpu.dot_dimension_numbers<[1], [0], [0], [1], [0, 0, 1, 1], [], []>} : vector<16x500xbf16>, vector<500x50xbf16>, vector<16x50xf32> -> vector<16x50xf32>
    %11 = arith.maximumf %8, %10 : vector<16x50xf32>
    %c0_12 = arith.constant 0 : index
    %c0_13 = arith.constant 0 : index
    %12 = vector.load %arg6[%c0_12, %c0_13] : memref<1x50xf32, #tpu.memory_space<vmem>>, vector<1x50xf32>
    %13 = vector.broadcast %12 : vector<1x50xf32> to vector<16x50xf32>
    %14 = arith.addf %11, %13 : vector<16x50xf32>
    %cst_14 = arith.constant 0.000000e+00 : f32
    %15 = vector.broadcast %cst_14 : f32 to vector<16x50xf32>
    %16 = arith.maximumf %14, %15 : vector<16x50xf32>
    %17 = arith.truncf %16 : vector<16x50xf32> to vector<16x50xbf16>
    %c0_15 = arith.constant 0 : index
    %c0_16 = arith.constant 0 : index
    %18 = vector.load %arg7[%c0_15, %c0_16] : memref<16x50xbf16, #tpu.memory_space<vmem>>, vector<16x50xbf16>
    tpu.vector_store %arg7[%c0_15, %c0_16], %17 {strides = array<i32>} : memref<16x50xbf16, #tpu.memory_space<vmem>>, vector<16x50xbf16>,
    return
  }
  func.func @transform_0(%arg0: i32) -> (i32, i32) {
    %c0_i32 = arith.constant 0 : i32
    %c0_i32_0 = arith.constant 0 : i32
    return %arg0, %c0_i32 : i32, i32
  }
  func.func @transform_1(%arg0: i32) -> (i32, i32) {
    %c0_i32 = arith.constant 0 : i32
    %c0_i32_0 = arith.constant 0 : i32
    return %arg0, %c0_i32 : i32, i32
  }
  func.func @transform_2(%arg0: i32) -> (i32, i32) {
    %c0_i32 = arith.constant 0 : i32
    %c0_i32_0 = arith.constant 0 : i32
    return %arg0, %c0_i32 : i32, i32
  }
  func.func @transform_3(%arg0: i32) -> (i32, i32) {
    %c0_i32 = arith.constant 0 : i32
    %c0_i32_0 = arith.constant 0 : i32
    return %arg0, %c0_i32 : i32, i32
  }
  func.func @transform_4(%arg0: i32) -> (i32, i32) {
    %c0_i32 = arith.constant 0 : i32
    %c0_i32_0 = arith.constant 0 : i32
    %c0_i32_1 = arith.constant 0 : i32
    return %c0_i32, %c0_i32_0 : i32, i32
  }
  func.func @transform_5(%arg0: i32) -> (i32, i32) {
    %c0_i32 = arith.constant 0 : i32
    %c0_i32_0 = arith.constant 0 : i32
    %c0_i32_1 = arith.constant 0 : i32
    return %c0_i32, %c0_i32_0 : i32, i32
  }
  func.func @transform_6(%arg0: i32) -> (i32, i32) {
    %c0_i32 = arith.constant 0 : i32
    %c0_i32_0 = arith.constant 0 : i32
    return %arg0, %c0_i32 : i32, i32
  }
}

module attributes {stable_mosaic.version = 11 : i64} {
  func.func @_mlp_head_kernel(%arg0: i32, %arg1: memref<16x800xbf16, #tpu.memory_space<vmem>>, %arg2: memref<800x500xbf16, #tpu.memory_space<vmem>>, %arg3: memref<1x500xf32, #tpu.memory_space<vmem>>, %arg4: memref<500x128xbf16, #tpu.memory_space<vmem>>, %arg5: memref<1x128xf32, #tpu.memory_space<vmem>>, %arg6: memref<16x128xf32, #tpu.memory_space<vmem>>) attributes {dimension_semantics = [#tpu.dimension_semantics<parallel>], iteration_bounds = array<i64: 1>, scalar_prefetch = 0 : i64, scratch_operands = 0 : i64, tpu.core_type = #tpu.core_type<tc>, window_params = [{transform_indices = @transform_0, window_bounds = array<i64: 16, 800>}, {pipeline_mode = #tpu.pipeline_mode<synchronous>, transform_indices = @transform_1, window_bounds = array<i64: 800, 500>}, {pipeline_mode = #tpu.pipeline_mode<synchronous>, transform_indices = @transform_2, window_bounds = array<i64: 1, 500>}, {pipeline_mode = #tpu.pipeline_mode<synchronous>, transform_indices = @transform_3, window_bounds = array<i64: 500, 128>}, {pipeline_mode = #tpu.pipeline_mode<synchronous>, transform_indices = @transform_4, window_bounds = array<i64: 1, 128>}, {transform_indices = @transform_5, window_bounds = array<i64: 16, 128>}]} {
    %c0 = arith.constant 0 : index
    %c0_0 = arith.constant 0 : index
    %0 = vector.load %arg1[%c0, %c0_0] : memref<16x800xbf16, #tpu.memory_space<vmem>>, vector<16x800xbf16>
    %c0_1 = arith.constant 0 : index
    %c0_2 = arith.constant 0 : index
    %1 = vector.load %arg2[%c0_1, %c0_2] : memref<800x500xbf16, #tpu.memory_space<vmem>>, vector<800x500xbf16>
    %cst = arith.constant dense<0.000000e+00> : vector<16x500xf32>
    %2 = tpu.matmul %0, %1, %cst {dimension_numbers = #tpu.dot_dimension_numbers<[1], [0], [0], [1], [0, 0, 1, 1], [], []>} : vector<16x800xbf16>, vector<800x500xbf16>, vector<16x500xf32> -> vector<16x500xf32>
    %c0_3 = arith.constant 0 : index
    %c0_4 = arith.constant 0 : index
    %3 = vector.load %arg3[%c0_3, %c0_4] : memref<1x500xf32, #tpu.memory_space<vmem>>, vector<1x500xf32>
    %4 = vector.broadcast %3 : vector<1x500xf32> to vector<16x500xf32>
    %5 = arith.addf %2, %4 : vector<16x500xf32>
    %cst_5 = arith.constant 0.000000e+00 : f32
    %6 = vector.broadcast %cst_5 : f32 to vector<16x500xf32>
    %7 = arith.maximumf %5, %6 : vector<16x500xf32>
    %8 = arith.truncf %7 : vector<16x500xf32> to vector<16x500xbf16>
    %c0_6 = arith.constant 0 : index
    %c0_7 = arith.constant 0 : index
    %9 = vector.load %arg4[%c0_6, %c0_7] : memref<500x128xbf16, #tpu.memory_space<vmem>>, vector<500x128xbf16>
    %cst_8 = arith.constant dense<0.000000e+00> : vector<16x128xf32>
    %10 = tpu.matmul %8, %9, %cst_8 {dimension_numbers = #tpu.dot_dimension_numbers<[1], [0], [0], [1], [0, 0, 1, 1], [], []>} : vector<16x500xbf16>, vector<500x128xbf16>, vector<16x128xf32> -> vector<16x128xf32>
    %c0_9 = arith.constant 0 : index
    %c0_10 = arith.constant 0 : index
    %11 = vector.load %arg5[%c0_9, %c0_10] : memref<1x128xf32, #tpu.memory_space<vmem>>, vector<1x128xf32>
    %12 = vector.broadcast %11 : vector<1x128xf32> to vector<16x128xf32>
    %13 = arith.addf %10, %12 : vector<16x128xf32>
    %cst_11 = arith.constant dense<0xFF800000> : vector<16xf32>
    %14 = vector.multi_reduction <maximumf>, %13, %cst_11 [1] : vector<16x128xf32> to vector<16xf32>
    %15 = vector.shape_cast %14 : vector<16xf32> to vector<16x1xf32>
    %16 = vector.broadcast %15 : vector<16x1xf32> to vector<16x128xf32>
    %17 = arith.subf %13, %16 : vector<16x128xf32>
    %18 = math.exp %17 : vector<16x128xf32>
    %19 = vector.broadcast %15 : vector<16x1xf32> to vector<16x128xf32>
    %20 = arith.subf %13, %19 : vector<16x128xf32>
    %cst_12 = arith.constant dense<0.000000e+00> : vector<16xf32>
    %21 = vector.multi_reduction <add>, %18, %cst_12 [1] : vector<16x128xf32> to vector<16xf32>
    %22 = vector.shape_cast %21 : vector<16xf32> to vector<16x1xf32>
    %23 = math.log %22 : vector<16x1xf32>
    %24 = vector.broadcast %23 : vector<16x1xf32> to vector<16x128xf32>
    %25 = arith.subf %20, %24 : vector<16x128xf32>
    %c0_13 = arith.constant 0 : index
    %c0_14 = arith.constant 0 : index
    %26 = vector.load %arg6[%c0_13, %c0_14] : memref<16x128xf32, #tpu.memory_space<vmem>>, vector<16x128xf32>
    tpu.vector_store %arg6[%c0_13, %c0_14], %25 {strides = array<i32>} : memref<16x128xf32, #tpu.memory_space<vmem>>, vector<16x128xf32>,
    return
  }
  func.func @transform_0(%arg0: i32) -> (i32, i32) {
    %c0_i32 = arith.constant 0 : i32
    %c0_i32_0 = arith.constant 0 : i32
    return %arg0, %c0_i32 : i32, i32
  }
  func.func @transform_1(%arg0: i32) -> (i32, i32) {
    %c0_i32 = arith.constant 0 : i32
    %c0_i32_0 = arith.constant 0 : i32
    %c0_i32_1 = arith.constant 0 : i32
    return %c0_i32, %c0_i32_0 : i32, i32
  }
  func.func @transform_2(%arg0: i32) -> (i32, i32) {
    %c0_i32 = arith.constant 0 : i32
    %c0_i32_0 = arith.constant 0 : i32
    %c0_i32_1 = arith.constant 0 : i32
    return %c0_i32, %c0_i32_0 : i32, i32
  }
  func.func @transform_3(%arg0: i32) -> (i32, i32) {
    %c0_i32 = arith.constant 0 : i32
    %c0_i32_0 = arith.constant 0 : i32
    %c0_i32_1 = arith.constant 0 : i32
    return %c0_i32, %c0_i32_0 : i32, i32
  }
  func.func @transform_4(%arg0: i32) -> (i32, i32) {
    %c0_i32 = arith.constant 0 : i32
    %c0_i32_0 = arith.constant 0 : i32
    %c0_i32_1 = arith.constant 0 : i32
    return %c0_i32, %c0_i32_0 : i32, i32
  }
  func.func @transform_5(%arg0: i32) -> (i32, i32) {
    %c0_i32 = arith.constant 0 : i32
    %c0_i32_0 = arith.constant 0 : i32
    return %arg0, %c0_i32 : i32, i32
  }
}

</mosaic_0001>

<llo_original>
// kernel: net_forward.3
$region0: #{net_forward.3}
  #allocation0 [shape = 'u32[]', space=smem, size = 0x4, offset = 0x4, fixed_abs, tag = 'smem constant byte address 0x4 - core index']
  #allocation1 [shape = 'u32[72,128]{1,0:T(1,128)}', space=vmem, size = 0x9000, scoped, tag = 'internal scratch']
  %s0 = inlined_call_operand.vmem [shape: bf16[288,25], index: 0, kind: input, shape index: {}]
  %s1 = inlined_call_operand.vmem [shape: bf16[288,25], index: 1, kind: input, shape index: {}]
  %s2 = inlined_call_operand.vmem [shape: bf16[288,25], index: 2, kind: input, shape index: {}]
  %s3 = inlined_call_operand.vmem [shape: bf16[288,25], index: 3, kind: input, shape index: {}]
  %s4 = inlined_call_operand.vmem [shape: bf16[25,20], index: 4, kind: input, shape index: {}]
  %s5 = inlined_call_operand.vmem [shape: f32[1,20], index: 5, kind: input, shape index: {}]
  %s6 = inlined_call_operand.vmem [shape: bf16[288,20], index: 6, kind: output, shape index: {}]
  %s7 = sld [smem:[#allocation0]]
  $region57: #{net_forward.3} parent=0
    _
  %s9 = ssub.s32 1, %s7
  %s10 = scalar_select 0, %s9, %s7
  loop: start=0, step=1, limit=4
  $region2: #{net_forward.3} parent=0 // loop_pre_header
    _
  $region3: #{net_forward.3} parent=0 // loop_header
    %s12 = sphi 0, %s16
    %p13 = scmp.ge.s32.totalorder %s12, 4
    %s22 = sphi 0, %s24
    %s25 = sphi 0, %s22
    %s26 = sphi 0, %s25
    %s42 = sphi 0, %s26
    %s48 = sphi 0, %s50
    %s51 = sphi 0, %s48
    %s52 = sphi 0, %s51
    %s68 = sphi 0, %s52
    %s74 = sphi 0, %s76
    %s77 = sphi 0, %s74
    %s78 = sphi 0, %s77
    %s94 = sphi 0, %s78
    %s100 = sphi 0, %s102
    %s103 = sphi 0, %s100
    %s104 = sphi 0, %s103
    %s120 = sphi 0, %s104
    %s124 = sphi 0, %s124
    %s126 = sphi 0, %s124
    %s127 = sphi 0, %s126
    %s141 = sphi 0, %s127
    %s145 = sphi 0, %s145
    %s147 = sphi 0, %s145
    %s148 = sphi 0, %s147
    %s162 = sphi 0, %s148
    %s168 = sphi 0, %s170
    %s171 = sphi 0, %s168
    %s172 = sphi 0, %s171
    %s188 = sphi 0, %s172
  $region4: #{net_forward.3} parent=0 // loop_header_branch
    %15 = sbr.rel (%p13) target = $region8
  $region5: #{net_forward.3} parent=0 // loop_body
    %s17 = ssub.s32 %s12, 1
    %s18 = ssub.s32 %s12, 2
    %s19 = sadd.s32 %s12, 1
    %s20 = ssub.s32 %s12, %s19
    %p21 = scmp.eq.s32.totalorder %s20, 0
    %s23 = sadd.s32 %s22, 1
    %s24 = scalar_select %p21, %s22, %s23
    %p27 = pneg %p21
    %p28 = scmp.eq.s32.totalorder %s12, 1
    %p29 = por %p27, %p28
    %p30 = scmp.ne.s32.totalorder %s22, %s25
    %p31 = scmp.eq.s32.totalorder %s12, 0
    %p32 = por %p30, %p31
    %p33 = scmp.ne.s32.totalorder %s22, %s25
    %p34 = scmp.eq.s32.totalorder %s17, 1
    %p35 = por %p33, %p34
    %p36 = scmp.ne.s32.totalorder %s25, %s26
    %p37 = scmp.eq.s32.totalorder %s17, 0
    %p38 = por %p36, %p37
    %p39 = scmp.ne.s32.totalorder %s25, %s26
    %p40 = scmp.eq.s32.totalorder %s18, 1
    %p41 = por %p39, %p40
    %p43 = scmp.ne.s32.totalorder %s26, %s42
    %p44 = scmp.eq.s32.totalorder %s18, 0
    %p45 = por %p43, %p44
    %s46 = ssub.s32 %s12, %s19
    %p47 = scmp.eq.s32.totalorder %s46, 0
    %s49 = sadd.s32 %s48, 1
    %s50 = scalar_select %p47, %s48, %s49
    %p53 = pneg %p47
    %p54 = scmp.eq.s32.totalorder %s12, 1
    %p55 = por %p53, %p54
    %p56 = scmp.ne.s32.totalorder %s48, %s51
    %p57 = scmp.eq.s32.totalorder %s12, 0
    %p58 = por %p56, %p57
    %p59 = scmp.ne.s32.totalorder %s48, %s51
    %p60 = scmp.eq.s32.totalorder %s17, 1
    %p61 = por %p59, %p60
    %p62 = scmp.ne.s32.totalorder %s51, %s52
    %p63 = scmp.eq.s32.totalorder %s17, 0
    %p64 = por %p62, %p63
    %p65 = scmp.ne.s32.totalorder %s51, %s52
    %p66 = scmp.eq.s32.totalorder %s18, 1
    %p67 = por %p65, %p66
    %p69 = scmp.ne.s32.totalorder %s52, %s68
    %p70 = scmp.eq.s32.totalorder %s18, 0
    %p71 = por %p69, %p70
    %s72 = ssub.s32 %s12, %s19
    %p73 = scmp.eq.s32.totalorder %s72, 0
    %s75 = sadd.s32 %s74, 1
    %s76 = scalar_select %p73, %s74, %s75
    %p79 = pneg %p73
    %p80 = scmp.eq.s32.totalorder %s12, 1
    %p81 = por %p79, %p80
    %p82 = scmp.ne.s32.totalorder %s74, %s77
    %p83 = scmp.eq.s32.totalorder %s12, 0
    %p84 = por %p82, %p83
    %p85 = scmp.ne.s32.totalorder %s74, %s77
    %p86 = scmp.eq.s32.totalorder %s17, 1
    %p87 = por %p85, %p86
    %p88 = scmp.ne.s32.totalorder %s77, %s78
    %p89 = scmp.eq.s32.totalorder %s17, 0
    %p90 = por %p88, %p89
    %p91 = scmp.ne.s32.totalorder %s77, %s78
    %p92 = scmp.eq.s32.totalorder %s18, 1
    %p93 = por %p91, %p92
    %p95 = scmp.ne.s32.totalorder %s78, %s94
    %p96 = scmp.eq.s32.totalorder %s18, 0
    %p97 = por %p95, %p96
    %s98 = ssub.s32 %s12, %s19
    %p99 = scmp.eq.s32.totalorder %s98, 0
    %s101 = sadd.s32 %s100, 1
    %s102 = scalar_select %p99, %s100, %s101
    %p105 = pneg %p99
    %p106 = scmp.eq.s32.totalorder %s12, 1
    %p107 = por %p105, %p106
    %p108 = scmp.ne.s32.totalorder %s100, %s103
    %p109 = scmp.eq.s32.totalorder %s12, 0
    %p110 = por %p108, %p109
    %p111 = scmp.ne.s32.totalorder %s100, %s103
    %p112 = scmp.eq.s32.totalorder %s17, 1
    %p113 = por %p111, %p112
    %p114 = scmp.ne.s32.totalorder %s103, %s104
    %p115 = scmp.eq.s32.totalorder %s17, 0
    %p116 = por %p114, %p115
    %p117 = scmp.ne.s32.totalorder %s103, %s104
    %p118 = scmp.eq.s32.totalorder %s18, 1
    %p119 = por %p117, %p118
    %p121 = scmp.ne.s32.totalorder %s104, %s120
    %p122 = scmp.eq.s32.totalorder %s18, 0
    %p123 = por %p121, %p122
    %s125 = sadd.s32 %s124, 1
    %p128 = scmp.eq.s32.totalorder %s12, 1
    %p129 = scmp.ne.s32.totalorder %s124, %s126
    %p130 = scmp.eq.s32.totalorder %s12, 0
    %p131 = por %p129, %p130
    %p132 = scmp.ne.s32.totalorder %s124, %s126
    %p133 = scmp.eq.s32.totalorder %s17, 1
    %p134 = por %p132, %p133
    %p135 = scmp.ne.s32.totalorder %s126, %s127
    %p136 = scmp.eq.s32.totalorder %s17, 0
    %p137 = por %p135, %p136
    %p138 = scmp.ne.s32.totalorder %s126, %s127
    %p139 = scmp.eq.s32.totalorder %s18, 1
    %p140 = por %p138, %p139
    %p142 = scmp.ne.s32.totalorder %s127, %s141
    %p143 = scmp.eq.s32.totalorder %s18, 0
    %p144 = por %p142, %p143
    %s146 = sadd.s32 %s145, 1
    %p149 = scmp.eq.s32.totalorder %s12, 1
    %p150 = scmp.ne.s32.totalorder %s145, %s147
    %p151 = scmp.eq.s32.totalorder %s12, 0
    %p152 = por %p150, %p151
    %p153 = scmp.ne.s32.totalorder %s145, %s147
    %p154 = scmp.eq.s32.totalorder %s17, 1
    %p155 = por %p153, %p154
    %p156 = scmp.ne.s32.totalorder %s147, %s148
    %p157 = scmp.eq.s32.totalorder %s17, 0
    %p158 = por %p156, %p157
    %p159 = scmp.ne.s32.totalorder %s147, %s148
    %p160 = scmp.eq.s32.totalorder %s18, 1
    %p161 = por %p159, %p160
    %p163 = scmp.ne.s32.totalorder %s148, %s162
    %p164 = scmp.eq.s32.totalorder %s18, 0
    %p165 = por %p163, %p164
    %s166 = ssub.s32 %s12, %s19
    %p167 = scmp.eq.s32.totalorder %s166, 0
    %s169 = sadd.s32 %s168, 1
    %s170 = scalar_select %p167, %s168, %s169
    %p173 = pneg %p167
    %p174 = scmp.eq.s32.totalorder %s12, 1
    %p175 = por %p173, %p174
    %p176 = scmp.ne.s32.totalorder %s168, %s171
    %p177 = scmp.eq.s32.totalorder %s12, 0
    %p178 = por %p176, %p177
    %p179 = scmp.ne.s32.totalorder %s168, %s171
    %p180 = scmp.eq.s32.totalorder %s17, 1
    %p181 = por %p179, %p180
    %p182 = scmp.ne.s32.totalorder %s171, %s172
    %p183 = scmp.eq.s32.totalorder %s17, 0
    %p184 = por %p182, %p183
    %p185 = scmp.ne.s32.totalorder %s171, %s172
    %p186 = scmp.eq.s32.totalorder %s18, 1
    %p187 = por %p185, %p186
    %p189 = scmp.ne.s32.totalorder %s172, %s188
    %p190 = scmp.eq.s32.totalorder %s18, 0
    %p191 = por %p189, %p190
    %p192 = scmp.le.s32.totalorder 1, %s12
    %p193 = scmp.lt.s32.totalorder %s12, 3
    %p194 = pnand %p192, %p193
    %p195 = pneg %p194
    // Predicated region
    $region9: #{net_forward.3} parent=5 // pred_check
      _
    $region10: #{net_forward.3} parent=5 // pred_check_branch
      %197 = sbr.rel (%p194) target = $region12
    $region11: #{net_forward.3} parent=5 // pred_region
      %s198 = ssub.s32 %s12, 1
      // Predicated region
      $region13: #{net_forward.3} parent=11 // pred_check
        %p199 = pneg %p137
      $region14: #{net_forward.3} parent=11 // pred_check_branch
        %201 = sbr.rel (%p199) target = $region16
      $region15: #{net_forward.3} parent=11 // pred_region
        _
      $region16: #{net_forward.3} parent=11 // pred_fallthru
        _
      // Predicated region
      $region17: #{net_forward.3} parent=11 // pred_check
        %p202 = pneg %p158
      $region18: #{net_forward.3} parent=11 // pred_check_branch
        %204 = sbr.rel (%p202) target = $region20
      $region19: #{net_forward.3} parent=11 // pred_region
        _
      $region20: #{net_forward.3} parent=11 // pred_fallthru
        _
    $region12: #{net_forward.3} parent=5 // pred_fallthru
      _
    %p205 = scmp.lt.s32.totalorder %s12, 2
    // Predicated region
    $region21: #{net_forward.3} parent=5 // pred_check
      %p206 = pneg %p205
    $region22: #{net_forward.3} parent=5 // pred_check_branch
      %208 = sbr.rel (%p206) target = $region24
    $region23: #{net_forward.3} parent=5 // pred_region
      // Predicated region
      $region25: #{net_forward.3} parent=23 // pred_check
        %p209 = pneg %p32
      $region26: #{net_forward.3} parent=23 // pred_check_branch
        %211 = sbr.rel (%p209) target = $region28
      $region27: #{net_forward.3} parent=23 // pred_region
        %s212 = smul.u32 18, %s12
        %p213 = scmp.lt.s32.totalorder %s212, 35
        %s214 = scalar_select %p213, %s212, 35
        %s215 = smul.addr %s214, 4
        %s216 = scalar_lea.vmem %s0, %s215
        %s217 = smul.u32 18, %s12
      $region28: #{net_forward.3} parent=23 // pred_fallthru
        _
      // Predicated region
      $region29: #{net_forward.3} parent=23 // pred_check
        %p218 = pneg %p58
      $region30: #{net_forward.3} parent=23 // pred_check_branch
        %220 = sbr.rel (%p218) target = $region32
      $region31: #{net_forward.3} parent=23 // pred_region
        %s221 = smul.u32 18, %s12
        %p222 = scmp.lt.s32.totalorder %s221, 35
        %s223 = scalar_select %p222, %s221, 35
        %s224 = smul.addr %s223, 4
        %s225 = scalar_lea.vmem %s1, %s224
        %s226 = smul.u32 18, %s12
      $region32: #{net_forward.3} parent=23 // pred_fallthru
        _
      // Predicated region
      $region33: #{net_forward.3} parent=23 // pred_check
        %p227 = pneg %p84
      $region34: #{net_forward.3} parent=23 // pred_check_branch
        %229 = sbr.rel (%p227) target = $region36
      $region35: #{net_forward.3} parent=23 // pred_region
        %s230 = smul.u32 18, %s12
        %p231 = scmp.lt.s32.totalorder %s230, 35
        %s232 = scalar_select %p231, %s230, 35
        %s233 = smul.addr %s232, 4
        %s234 = scalar_lea.vmem %s2, %s233
        %s235 = smul.u32 18, %s12
      $region36: #{net_forward.3} parent=23 // pred_fallthru
        _
      // Predicated region
      $region37: #{net_forward.3} parent=23 // pred_check
        %p236 = pneg %p110
      $region38: #{net_forward.3} parent=23 // pred_check_branch
        %238 = sbr.rel (%p236) target = $region40
      $region39: #{net_forward.3} parent=23 // pred_region
        %s239 = smul.u32 18, %s12
        %p240 = scmp.lt.s32.totalorder %s239, 35
        %s241 = scalar_select %p240, %s239, 35
        %s242 = smul.addr %s241, 4
        %s243 = scalar_lea.vmem %s3, %s242
        %s244 = smul.u32 18, %s12
      $region40: #{net_forward.3} parent=23 // pred_fallthru
        _
    $region24: #{net_forward.3} parent=5 // pred_fallthru
      _
    %p245 = scmp.le.s32.totalorder 1, %s12
    %p246 = scmp.lt.s32.totalorder %s12, 3
    %p247 = pnand %p245, %p246
    %p248 = pneg %p247
    // Predicated region
    $region41: #{net_forward.3} parent=5 // pred_check
      _
    $region42: #{net_forward.3} parent=5 // pred_check_branch
      %250 = sbr.rel (%p247) target = $region44
    $region43: #{net_forward.3} parent=5 // pred_region
      %s251 = ssub.s32 %s12, 1
      %s252 = smul.u32 18, %s17
      %p253 = scmp.lt.s32.totalorder %s252, 35
      %s254 = scalar_select %p253, %s252, 35
      %s255 = smul.addr %s254, 4
      %s256 = scalar_lea.vmem %s0, %s255
      %p257 = pneg %p38
      %p258 = pneg %p35
      %s259 = smul.u32 18, %s17
      %p260 = scmp.lt.s32.totalorder %s259, 35
      %s261 = scalar_select %p260, %s259, 35
      %s262 = smul.addr %s261, 4
      %s263 = scalar_lea.vmem %s1, %s262
      %p264 = pneg %p64
      %p265 = pneg %p61
      %s266 = smul.u32 18, %s17
      %p267 = scmp.lt.s32.totalorder %s266, 35
      %s268 = scalar_select %p267, %s266, 35
      %s269 = smul.addr %s268, 4
      %s270 = scalar_lea.vmem %s2, %s269
      %p271 = pneg %p90
      %p272 = pneg %p87
      %s273 = smul.u32 18, %s17
      %p274 = scmp.lt.s32.totalorder %s273, 35
      %s275 = scalar_select %p274, %s273, 35
      %s276 = smul.addr %s275, 4
      %s277 = scalar_lea.vmem %s3, %s276
      %p278 = pneg %p116
      %p279 = pneg %p113
      %p280 = pneg %p137
      %p281 = pneg %p134
      %p282 = pneg %p158
      %p283 = pneg %p155
      %p284 = pneg %p184
      %p285 = pneg %p181
      %s286 = smul.u32 18, %s17
      %p287 = scmp.lt.s32.totalorder %s286, 35
      %s288 = scalar_select %p287, %s286, 35
      %s289 = smul.addr %s288, 4
      %s290 = scalar_lea.vmem %s6, %s289
      %s291 = smul.u32 18, %s17
      %p292 = scmp.lt.s32.totalorder %s291, 35
      %s293 = scalar_select %p292, %s291, 35
      %s294 = smul.addr %s293, 4
      %s295 = scalar_lea.vmem %s0, %s294
      %s296 = smul.u32 18, %s17
      %s297 = smul.u32 18, %s17
      %p298 = scmp.lt.s32.totalorder %s297, 35
      %s299 = scalar_select %p298, %s297, 35
      %s300 = smul.addr %s299, 4
      %s301 = scalar_lea.vmem %s1, %s300
      %s302 = smul.u32 18, %s17
      %s303 = smul.u32 18, %s17
      %p304 = scmp.lt.s32.totalorder %s303, 35
      %s305 = scalar_select %p304, %s303, 35
      %s306 = smul.addr %s305, 4
      %s307 = scalar_lea.vmem %s2, %s306
      %s308 = smul.u32 18, %s17
      %s309 = smul.u32 18, %s17
      %p310 = scmp.lt.s32.totalorder %s309, 35
      %s311 = scalar_select %p310, %s309, 35
      %s312 = smul.addr %s311, 4
      %s313 = scalar_lea.vmem %s3, %s312
      %s314 = smul.u32 18, %s17
      %s315 = smul.u32 18, %s17
      %p316 = scmp.lt.s32.totalorder %s315, 35
      %s317 = scalar_select %p316, %s315, 35
      %s318 = smul.addr %s317, 4
      %s319 = scalar_lea.vmem %s6, %s318
      %s320 = smul.u32 18, %s17
      %v322 = vld [vmem:[%s4] sm:$0xf]
      %v323 = vld [vmem:[%s4 + $0x4] sm:$0xf]
      %v324 = vld [vmem:[%s4 + $0x8] sm:$0xf]
      %v325 = vld [vmem:[%s4 + $0xc] sm:$0x1]
      %v326 = vld [vmem:[%s295] sm:$0xf]
      %v327 = vld [vmem:[%s295 + $0x4] sm:$0xf]
      %v328 = vld [vmem:[%s295 + $0x8] sm:$0xf]
      %v329 = vld [vmem:[%s295 + $0xc] sm:$0xf]
      %v330 = vld [vmem:[%s295 + $0x10] sm:$0xf]
      %v331 = vld [vmem:[%s295 + $0x14] sm:$0xf]
      %v332 = vld [vmem:[%s295 + $0x18] sm:$0xf]
      %v333 = vld [vmem:[%s295 + $0x1c] sm:$0xf]
      %v334 = vld [vmem:[%s295 + $0x20] sm:$0xf]
      %v335 = vld [vmem:[%s295 + $0x24] sm:$0xf]
      %v336 = vld [vmem:[%s295 + $0x28] sm:$0xf]
      %v337 = vld [vmem:[%s295 + $0x2c] sm:$0xf]
      %v338 = vld [vmem:[%s295 + $0x30] sm:$0xf]
      %v339 = vld [vmem:[%s295 + $0x34] sm:$0xf]
      %v340 = vld [vmem:[%s295 + $0x38] sm:$0xf]
      %v341 = vld [vmem:[%s295 + $0x3c] sm:$0xf]
      %v342 = vld [vmem:[%s295 + $0x40] sm:$0xf]
      %v343 = vld [vmem:[%s295 + $0x44] sm:$0xf]
      %v362 = vunpack.c.l.b16 %v326
      %v363 = vunpack.c.l.b16 %v327
      %v364 = vunpack.c.l.b16 %v328
      %v365 = vunpack.c.l.b16 %v329
      %v366 = vunpack.c.l.b16 %v330
      %v367 = vunpack.c.l.b16 %v331
      %v368 = vunpack.c.l.b16 %v332
      %v369 = vunpack.c.l.b16 %v333
      %v370 = vunpack.c.l.b16 %v334
      %v371 = vunpack.c.l.b16 %v335
      %v372 = vunpack.c.l.b16 %v336
      %v373 = vunpack.c.l.b16 %v337
      %v374 = vunpack.c.l.b16 %v338
      %v375 = vunpack.c.l.b16 %v339
      %v376 = vunpack.c.l.b16 %v340
      %v377 = vunpack.c.l.b16 %v341
      %v378 = vunpack.c.l.b16 %v342
      %v379 = vunpack.c.l.b16 %v343
      %v380 = vpack.c.b16 %v363, %v362
      %v381 = vpack.c.b16 %v365, %v364
      %v382 = vpack.c.b16 %v367, %v366
      %v383 = vpack.c.b16 %v369, %v368
      %v384 = vpack.c.b16 %v371, %v370
      %v385 = vpack.c.b16 %v373, %v372
      %v386 = vpack.c.b16 %v375, %v374
      %v387 = vpack.c.b16 %v377, %v376
      %v388 = vpack.c.b16 %v379, %v378
      %v393 = vunpack.c.l.b16 %v322
      %v394 = vunpack.c.l.b16 %v323
      %v395 = vunpack.c.l.b16 %v324
      %v396 = vunpack.c.l.b16 %v325
      %v397 = vpack.c.b16 %v394, %v393
      %v398 = vpack.c.b16 %v396, %v395
      %vm400 = vcmask 203776
      %v402 = vsel %vm400, %v380, 0
      %v405 = vsel %vm400, %v381, 0
      %v408 = vsel %vm400, %v382, 0
      %v411 = vsel %vm400, %v383, 0
      %v414 = vsel %vm400, %v384, 0
      %v417 = vsel %vm400, %v385, 0
      %v420 = vsel %vm400, %v386, 0
      %v423 = vsel %vm400, %v387, 0
      %v426 = vsel %vm400, %v388, 0
      %vm428 = vcmask 1043456
      %vm429 = vcmask 1044480
      %v430 = vsel %vm428, 4294967295, 65535
      %v431 = vsel %vm429, %v430, 0
      %v433 = vand.u32 %v398, %v431
      %435 = vmatpush.bf16.msra.mxu0 0
      %436 = vmatpush.bf16.msra.mxu0 0
      %437 = vmatpush.bf16.msra.mxu0 0
      %438 = vmatpush.bf16.msra.mxu0 0
      %439 = vmatpush.bf16.msra.mxu0 0
      %440 = vmatpush.bf16.msra.mxu0 0
      %441 = vmatpush.bf16.msra.mxu0 %v433
      %442 = vmatpush.bf16.msra.mxu0 %v397
      %443 = vmatmul.bf16.gmra.mxu0 %v402
      %v444 = vpop.f32.mrf.mxu0
      %v445 = vadd.f32 0.0, %v444
      %v446 = vpop.f32.mrf.mxu0
      %v447 = vadd.f32 0.0, %v446
      %448 = vmatmul.bf16.gmra.mxu0 %v405
      %v449 = vpop.f32.mrf.mxu0
      %v450 = vadd.f32 0.0, %v449
      %v451 = vpop.f32.mrf.mxu0
      %v452 = vadd.f32 0.0, %v451
      %453 = vmatmul.bf16.gmra.mxu0 %v408
      %v454 = vpop.f32.mrf.mxu0
      %v455 = vadd.f32 0.0, %v454
      %v456 = vpop.f32.mrf.mxu0
      %v457 = vadd.f32 0.0, %v456
      %458 = vmatmul.bf16.gmra.mxu0 %v411
      %v459 = vpop.f32.mrf.mxu0
      %v460 = vadd.f32 0.0, %v459
      %v461 = vpop.f32.mrf.mxu0
      %v462 = vadd.f32 0.0, %v461
      %463 = vmatmul.bf16.gmra.mxu0 %v414
      %v464 = vpop.f32.mrf.mxu0
      %v465 = vadd.f32 0.0, %v464
      %v466 = vpop.f32.mrf.mxu0
      %v467 = vadd.f32 0.0, %v466
      %468 = vmatmul.bf16.gmra.mxu0 %v417
      %v469 = vpop.f32.mrf.mxu0
      %v470 = vadd.f32 0.0, %v469
      %v471 = vpop.f32.mrf.mxu0
      %v472 = vadd.f32 0.0, %v471
      %473 = vmatmul.bf16.gmra.mxu0 %v420
      %v474 = vpop.f32.mrf.mxu0
      %v475 = vadd.f32 0.0, %v474
      %v476 = vpop.f32.mrf.mxu0
      %v477 = vadd.f32 0.0, %v476
      %478 = vmatmul.bf16.gmra.mxu0 %v423
      %v479 = vpop.f32.mrf.mxu0
      %v480 = vadd.f32 0.0, %v479
      %v481 = vpop.f32.mrf.mxu0
      %v482 = vadd.f32 0.0, %v481
      %483 = vmatmul.bf16.gmra.mxu0 %v426
      %v484 = vpop.f32.mrf.mxu0
      %v485 = vadd.f32 0.0, %v484
      %v486 = vpop.f32.mrf.mxu0
      %v487 = vadd.f32 0.0, %v486
      %488 = vdwg.mxu0
      %v489 = vld [vmem:[%s301] sm:$0xf]
      %v490 = vld [vmem:[%s301 + $0x4] sm:$0xf]
      %v491 = vld [vmem:[%s301 + $0x8] sm:$0xf]
      %v492 = vld [vmem:[%s301 + $0xc] sm:$0xf]
      %v493 = vld [vmem:[%s301 + $0x10] sm:$0xf]
      %v494 = vld [vmem:[%s301 + $0x14] sm:$0xf]
      %v495 = vld [vmem:[%s301 + $0x18] sm:$0xf]
      %v496 = vld [vmem:[%s301 + $0x1c] sm:$0xf]
      %v497 = vld [vmem:[%s301 + $0x20] sm:$0xf]
      %v498 = vld [vmem:[%s301 + $0x24] sm:$0xf]
      %v499 = vld [vmem:[%s301 + $0x28] sm:$0xf]
      %v500 = vld [vmem:[%s301 + $0x2c] sm:$0xf]
      %v501 = vld [vmem:[%s301 + $0x30] sm:$0xf]
      %v502 = vld [vmem:[%s301 + $0x34] sm:$0xf]
      %v503 = vld [vmem:[%s301 + $0x38] sm:$0xf]
      %v504 = vld [vmem:[%s301 + $0x3c] sm:$0xf]
      %v505 = vld [vmem:[%s301 + $0x40] sm:$0xf]
      %v506 = vld [vmem:[%s301 + $0x44] sm:$0xf]
      %v525 = vunpack.c.l.b16 %v489
      %v526 = vunpack.c.l.b16 %v490
      %v527 = vunpack.c.l.b16 %v491
      %v528 = vunpack.c.l.b16 %v492
      %v529 = vunpack.c.l.b16 %v493
      %v530 = vunpack.c.l.b16 %v494
      %v531 = vunpack.c.l.b16 %v495
      %v532 = vunpack.c.l.b16 %v496
      %v533 = vunpack.c.l.b16 %v497
      %v534 = vunpack.c.l.b16 %v498
      %v535 = vunpack.c.l.b16 %v499
      %v536 = vunpack.c.l.b16 %v500
      %v537 = vunpack.c.l.b16 %v501
      %v538 = vunpack.c.l.b16 %v502
      %v539 = vunpack.c.l.b16 %v503
      %v540 = vunpack.c.l.b16 %v504
      %v541 = vunpack.c.l.b16 %v505
      %v542 = vunpack.c.l.b16 %v506
      %v543 = vpack.c.b16 %v526, %v525
      %v544 = vpack.c.b16 %v528, %v527
      %v545 = vpack.c.b16 %v530, %v529
      %v546 = vpack.c.b16 %v532, %v531
      %v547 = vpack.c.b16 %v534, %v533
      %v548 = vpack.c.b16 %v536, %v535
      %v549 = vpack.c.b16 %v538, %v537
      %v550 = vpack.c.b16 %v540, %v539
      %v551 = vpack.c.b16 %v542, %v541
      %v553 = vsel %vm400, %v543, 0
      %v556 = vsel %vm400, %v544, 0
      %v559 = vsel %vm400, %v545, 0
      %v562 = vsel %vm400, %v546, 0
      %v565 = vsel %vm400, %v547, 0
      %v568 = vsel %vm400, %v548, 0
      %v571 = vsel %vm400, %v549, 0
      %v574 = vsel %vm400, %v550, 0
      %v577 = vsel %vm400, %v551, 0
      %579 = vmatpush.bf16.msra.mxu0 0
      %580 = vmatpush.bf16.msra.mxu0 0
      %581 = vmatpush.bf16.msra.mxu0 0
      %582 = vmatpush.bf16.msra.mxu0 0
      %583 = vmatpush.bf16.msra.mxu0 0
      %584 = vmatpush.bf16.msra.mxu0 0
      %585 = vmatpush.bf16.msra.mxu0 %v433
      %586 = vmatpush.bf16.msra.mxu0 %v397
      %587 = vmatmul.bf16.gmra.mxu0 %v553
      %v588 = vpop.f32.mrf.mxu0
      %v589 = vadd.f32 0.0, %v588
      %v590 = vpop.f32.mrf.mxu0
      %v591 = vadd.f32 0.0, %v590
      %592 = vmatmul.bf16.gmra.mxu0 %v556
      %v593 = vpop.f32.mrf.mxu0
      %v594 = vadd.f32 0.0, %v593
      %v595 = vpop.f32.mrf.mxu0
      %v596 = vadd.f32 0.0, %v595
      %597 = vmatmul.bf16.gmra.mxu0 %v559
      %v598 = vpop.f32.mrf.mxu0
      %v599 = vadd.f32 0.0, %v598
      %v600 = vpop.f32.mrf.mxu0
      %v601 = vadd.f32 0.0, %v600
      %602 = vmatmul.bf16.gmra.mxu0 %v562
      %v603 = vpop.f32.mrf.mxu0
      %v604 = vadd.f32 0.0, %v603
      %v605 = vpop.f32.mrf.mxu0
      %v606 = vadd.f32 0.0, %v605
      %607 = vmatmul.bf16.gmra.mxu0 %v565
      %v608 = vpop.f32.mrf.mxu0
      %v609 = vadd.f32 0.0, %v608
      %v610 = vpop.f32.mrf.mxu0
      %v611 = vadd.f32 0.0, %v610
      %612 = vmatmul.bf16.gmra.mxu0 %v568
      %v613 = vpop.f32.mrf.mxu0
      %v614 = vadd.f32 0.0, %v613
      %v615 = vpop.f32.mrf.mxu0
      %v616 = vadd.f32 0.0, %v615
      %617 = vmatmul.bf16.gmra.mxu0 %v571
      %v618 = vpop.f32.mrf.mxu0
      %v619 = vadd.f32 0.0, %v618
      %v620 = vpop.f32.mrf.mxu0
      %v621 = vadd.f32 0.0, %v620
      %622 = vmatmul.bf16.gmra.mxu0 %v574
      %v623 = vpop.f32.mrf.mxu0
      %v624 = vadd.f32 0.0, %v623
      %v625 = vpop.f32.mrf.mxu0
      %v626 = vadd.f32 0.0, %v625
      %627 = vmatmul.bf16.gmra.mxu0 %v577
      %v628 = vpop.f32.mrf.mxu0
      %v629 = vadd.f32 0.0, %v628
      %v630 = vpop.f32.mrf.mxu0
      %v631 = vadd.f32 0.0, %v630
      %632 = vdwg.mxu0
      %v633 = vmax.f32 %v445, %v589
      %v634 = vmax.f32 %v447, %v591
      %v635 = vmax.f32 %v450, %v594
      %v636 = vmax.f32 %v452, %v596
      %v637 = vmax.f32 %v455, %v599
      %v638 = vmax.f32 %v457, %v601
      %v639 = vmax.f32 %v460, %v604
      %v640 = vmax.f32 %v462, %v606
      %v641 = vmax.f32 %v465, %v609
      %v642 = vmax.f32 %v467, %v611
      %v643 = vmax.f32 %v470, %v614
      %v644 = vmax.f32 %v472, %v616
      %v645 = vmax.f32 %v475, %v619
      %v646 = vmax.f32 %v477, %v621
      %v647 = vmax.f32 %v480, %v624
      %v648 = vmax.f32 %v482, %v626
      %v649 = vmax.f32 %v485, %v629
      %v650 = vmax.f32 %v487, %v631
      %v651 = vld [vmem:[%s307] sm:$0xf]
      %v652 = vld [vmem:[%s307 + $0x4] sm:$0xf]
      %v653 = vld [vmem:[%s307 + $0x8] sm:$0xf]
      %v654 = vld [vmem:[%s307 + $0xc] sm:$0xf]
      %v655 = vld [vmem:[%s307 + $0x10] sm:$0xf]
      %v656 = vld [vmem:[%s307 + $0x14] sm:$0xf]
      %v657 = vld [vmem:[%s307 + $0x18] sm:$0xf]
      %v658 = vld [vmem:[%s307 + $0x1c] sm:$0xf]
      %v659 = vld [vmem:[%s307 + $0x20] sm:$0xf]
      %v660 = vld [vmem:[%s307 + $0x24] sm:$0xf]
      %v661 = vld [vmem:[%s307 + $0x28] sm:$0xf]
      %v662 = vld [vmem:[%s307 + $0x2c] sm:$0xf]
      %v663 = vld [vmem:[%s307 + $0x30] sm:$0xf]
      %v664 = vld [vmem:[%s307 + $0x34] sm:$0xf]
      %v665 = vld [vmem:[%s307 + $0x38] sm:$0xf]
      %v666 = vld [vmem:[%s307 + $0x3c] sm:$0xf]
      %v667 = vld [vmem:[%s307 + $0x40] sm:$0xf]
      %v668 = vld [vmem:[%s307 + $0x44] sm:$0xf]
      %v687 = vunpack.c.l.b16 %v651
      %v688 = vunpack.c.l.b16 %v652
      %v689 = vunpack.c.l.b16 %v653
      %v690 = vunpack.c.l.b16 %v654
      %v691 = vunpack.c.l.b16 %v655
      %v692 = vunpack.c.l.b16 %v656
      %v693 = vunpack.c.l.b16 %v657
      %v694 = vunpack.c.l.b16 %v658
      %v695 = vunpack.c.l.b16 %v659
      %v696 = vunpack.c.l.b16 %v660
      %v697 = vunpack.c.l.b16 %v661
      %v698 = vunpack.c.l.b16 %v662
      %v699 = vunpack.c.l.b16 %v663
      %v700 = vunpack.c.l.b16 %v664
      %v701 = vunpack.c.l.b16 %v665
      %v702 = vunpack.c.l.b16 %v666
      %v703 = vunpack.c.l.b16 %v667
      %v704 = vunpack.c.l.b16 %v668
      %v705 = vpack.c.b16 %v688, %v687
      %v706 = vpack.c.b16 %v690, %v689
      %v707 = vpack.c.b16 %v692, %v691
      %v708 = vpack.c.b16 %v694, %v693
      %v709 = vpack.c.b16 %v696, %v695
      %v710 = vpack.c.b16 %v698, %v697
      %v711 = vpack.c.b16 %v700, %v699
      %v712 = vpack.c.b16 %v702, %v701
      %v713 = vpack.c.b16 %v704, %v703
      %v715 = vsel %vm400, %v705, 0
      %v718 = vsel %vm400, %v706, 0
      %v721 = vsel %vm400, %v707, 0
      %v724 = vsel %vm400, %v708, 0
      %v727 = vsel %vm400, %v709, 0
      %v730 = vsel %vm400, %v710, 0
      %v733 = vsel %vm400, %v711, 0
      %v736 = vsel %vm400, %v712, 0
      %v739 = vsel %vm400, %v713, 0
      %741 = vmatpush.bf16.msra.mxu0 0
      %742 = vmatpush.bf16.msra.mxu0 0
      %743 = vmatpush.bf16.msra.mxu0 0
      %744 = vmatpush.bf16.msra.mxu0 0
      %745 = vmatpush.bf16.msra.mxu0 0
      %746 = vmatpush.bf16.msra.mxu0 0
      %747 = vmatpush.bf16.msra.mxu0 %v433
      %748 = vmatpush.bf16.msra.mxu0 %v397
      %749 = vmatmul.bf16.gmra.mxu0 %v715
      %v750 = vpop.f32.mrf.mxu0
      %v751 = vadd.f32 0.0, %v750
      %v752 = vpop.f32.mrf.mxu0
      %v753 = vadd.f32 0.0, %v752
      %754 = vmatmul.bf16.gmra.mxu0 %v718
      %v755 = vpop.f32.mrf.mxu0
      %v756 = vadd.f32 0.0, %v755
      %v757 = vpop.f32.mrf.mxu0
      %v758 = vadd.f32 0.0, %v757
      %759 = vmatmul.bf16.gmra.mxu0 %v721
      %v760 = vpop.f32.mrf.mxu0
      %v761 = vadd.f32 0.0, %v760
      %v762 = vpop.f32.mrf.mxu0
      %v763 = vadd.f32 0.0, %v762
      %764 = vmatmul.bf16.gmra.mxu0 %v724
      %v765 = vpop.f32.mrf.mxu0
      %v766 = vadd.f32 0.0, %v765
      %v767 = vpop.f32.mrf.mxu0
      %v768 = vadd.f32 0.0, %v767
      %769 = vmatmul.bf16.gmra.mxu0 %v727
      %v770 = vpop.f32.mrf.mxu0
      %v771 = vadd.f32 0.0, %v770
      %v772 = vpop.f32.mrf.mxu0
      %v773 = vadd.f32 0.0, %v772
      %774 = vmatmul.bf16.gmra.mxu0 %v730
      %v775 = vpop.f32.mrf.mxu0
      %v776 = vadd.f32 0.0, %v775
      %v777 = vpop.f32.mrf.mxu0
      %v778 = vadd.f32 0.0, %v777
      %779 = vmatmul.bf16.gmra.mxu0 %v733
      %v780 = vpop.f32.mrf.mxu0
      %v781 = vadd.f32 0.0, %v780
      %v782 = vpop.f32.mrf.mxu0
      %v783 = vadd.f32 0.0, %v782
      %784 = vmatmul.bf16.gmra.mxu0 %v736
      %v785 = vpop.f32.mrf.mxu0
      %v786 = vadd.f32 0.0, %v785
      %v787 = vpop.f32.mrf.mxu0
      %v788 = vadd.f32 0.0, %v787
      %789 = vmatmul.bf16.gmra.mxu0 %v739
      %v790 = vpop.f32.mrf.mxu0
      %v791 = vadd.f32 0.0, %v790
      %v792 = vpop.f32.mrf.mxu0
      %v793 = vadd.f32 0.0, %v792
      %794 = vdwg.mxu0
      %v795 = vmax.f32 %v633, %v751
      %v796 = vmax.f32 %v634, %v753
      %v797 = vmax.f32 %v635, %v756
      %v798 = vmax.f32 %v636, %v758
      %v799 = vmax.f32 %v637, %v761
      %v800 = vmax.f32 %v638, %v763
      %v801 = vmax.f32 %v639, %v766
      %v802 = vmax.f32 %v640, %v768
      %v803 = vmax.f32 %v641, %v771
      %v804 = vmax.f32 %v642, %v773
      %v805 = vmax.f32 %v643, %v776
      %v806 = vmax.f32 %v644, %v778
      %v807 = vmax.f32 %v645, %v781
      %v808 = vmax.f32 %v646, %v783
      %v809 = vmax.f32 %v647, %v786
      %v810 = vmax.f32 %v648, %v788
      %v811 = vmax.f32 %v649, %v791
      %v812 = vmax.f32 %v650, %v793
      %v813 = vld [vmem:[%s313] sm:$0xf]
      %v814 = vld [vmem:[%s313 + $0x4] sm:$0xf]
      %v815 = vld [vmem:[%s313 + $0x8] sm:$0xf]
      %v816 = vld [vmem:[%s313 + $0xc] sm:$0xf]
      %v817 = vld [vmem:[%s313 + $0x10] sm:$0xf]
      %v818 = vld [vmem:[%s313 + $0x14] sm:$0xf]
      %v819 = vld [vmem:[%s313 + $0x18] sm:$0xf]
      %v820 = vld [vmem:[%s313 + $0x1c] sm:$0xf]
      %v821 = vld [vmem:[%s313 + $0x20] sm:$0xf]
      %v822 = vld [vmem:[%s313 + $0x24] sm:$0xf]
      %v823 = vld [vmem:[%s313 + $0x28] sm:$0xf]
      %v824 = vld [vmem:[%s313 + $0x2c] sm:$0xf]
      %v825 = vld [vmem:[%s313 + $0x30] sm:$0xf]
      %v826 = vld [vmem:[%s313 + $0x34] sm:$0xf]
      %v827 = vld [vmem:[%s313 + $0x38] sm:$0xf]
      %v828 = vld [vmem:[%s313 + $0x3c] sm:$0xf]
      %v829 = vld [vmem:[%s313 + $0x40] sm:$0xf]
      %v830 = vld [vmem:[%s313 + $0x44] sm:$0xf]
      %v849 = vunpack.c.l.b16 %v813
      %v850 = vunpack.c.l.b16 %v814
      %v851 = vunpack.c.l.b16 %v815
      %v852 = vunpack.c.l.b16 %v816
      %v853 = vunpack.c.l.b16 %v817
      %v854 = vunpack.c.l.b16 %v818
      %v855 = vunpack.c.l.b16 %v819
      %v856 = vunpack.c.l.b16 %v820
      %v857 = vunpack.c.l.b16 %v821
      %v858 = vunpack.c.l.b16 %v822
      %v859 = vunpack.c.l.b16 %v823
      %v860 = vunpack.c.l.b16 %v824
      %v861 = vunpack.c.l.b16 %v825
      %v862 = vunpack.c.l.b16 %v826
      %v863 = vunpack.c.l.b16 %v827
      %v864 = vunpack.c.l.b16 %v828
      %v865 = vunpack.c.l.b16 %v829
      %v866 = vunpack.c.l.b16 %v830
      %v867 = vpack.c.b16 %v850, %v849
      %v868 = vpack.c.b16 %v852, %v851
      %v869 = vpack.c.b16 %v854, %v853
      %v870 = vpack.c.b16 %v856, %v855
      %v871 = vpack.c.b16 %v858, %v857
      %v872 = vpack.c.b16 %v860, %v859
      %v873 = vpack.c.b16 %v862, %v861
      %v874 = vpack.c.b16 %v864, %v863
      %v875 = vpack.c.b16 %v866, %v865
      %v877 = vsel %vm400, %v867, 0
      %v880 = vsel %vm400, %v868, 0
      %v883 = vsel %vm400, %v869, 0
      %v886 = vsel %vm400, %v870, 0
      %v889 = vsel %vm400, %v871, 0
      %v892 = vsel %vm400, %v872, 0
      %v895 = vsel %vm400, %v873, 0
      %v898 = vsel %vm400, %v874, 0
      %v901 = vsel %vm400, %v875, 0
      %903 = vmatpush.bf16.msra.mxu0 0
      %904 = vmatpush.bf16.msra.mxu0 0
      %905 = vmatpush.bf16.msra.mxu0 0
      %906 = vmatpush.bf16.msra.mxu0 0
      %907 = vmatpush.bf16.msra.mxu0 0
      %908 = vmatpush.bf16.msra.mxu0 0
      %909 = vmatpush.bf16.msra.mxu0 %v433
      %910 = vmatpush.bf16.msra.mxu0 %v397
      %911 = vmatmul.bf16.gmra.mxu0 %v877
      %v912 = vpop.f32.mrf.mxu0
      %v913 = vadd.f32 0.0, %v912
      %v914 = vpop.f32.mrf.mxu0
      %v915 = vadd.f32 0.0, %v914
      %916 = vmatmul.bf16.gmra.mxu0 %v880
      %v917 = vpop.f32.mrf.mxu0
      %v918 = vadd.f32 0.0, %v917
      %v919 = vpop.f32.mrf.mxu0
      %v920 = vadd.f32 0.0, %v919
      %921 = vmatmul.bf16.gmra.mxu0 %v883
      %v922 = vpop.f32.mrf.mxu0
      %v923 = vadd.f32 0.0, %v922
      %v924 = vpop.f32.mrf.mxu0
      %v925 = vadd.f32 0.0, %v924
      %926 = vmatmul.bf16.gmra.mxu0 %v886
      %v927 = vpop.f32.mrf.mxu0
      %v928 = vadd.f32 0.0, %v927
      %v929 = vpop.f32.mrf.mxu0
      %v930 = vadd.f32 0.0, %v929
      %931 = vmatmul.bf16.gmra.mxu0 %v889
      %v932 = vpop.f32.mrf.mxu0
      %v933 = vadd.f32 0.0, %v932
      %v934 = vpop.f32.mrf.mxu0
      %v935 = vadd.f32 0.0, %v934
      %936 = vmatmul.bf16.gmra.mxu0 %v892
      %v937 = vpop.f32.mrf.mxu0
      %v938 = vadd.f32 0.0, %v937
      %v939 = vpop.f32.mrf.mxu0
      %v940 = vadd.f32 0.0, %v939
      %941 = vmatmul.bf16.gmra.mxu0 %v895
      %v942 = vpop.f32.mrf.mxu0
      %v943 = vadd.f32 0.0, %v942
      %v944 = vpop.f32.mrf.mxu0
      %v945 = vadd.f32 0.0, %v944
      %946 = vmatmul.bf16.gmra.mxu0 %v898
      %v947 = vpop.f32.mrf.mxu0
      %v948 = vadd.f32 0.0, %v947
      %v949 = vpop.f32.mrf.mxu0
      %v950 = vadd.f32 0.0, %v949
      %951 = vmatmul.bf16.gmra.mxu0 %v901
      %v952 = vpop.f32.mrf.mxu0
      %v953 = vadd.f32 0.0, %v952
      %v954 = vpop.f32.mrf.mxu0
      %v955 = vadd.f32 0.0, %v954
      %956 = vdwg.mxu0
      %v957 = vmax.f32 %v795, %v913
      %v958 = vmax.f32 %v796, %v915
      %v959 = vmax.f32 %v797, %v918
      %v960 = vmax.f32 %v798, %v920
      %v961 = vmax.f32 %v799, %v923
      %v962 = vmax.f32 %v800, %v925
      %v963 = vmax.f32 %v801, %v928
      %v964 = vmax.f32 %v802, %v930
      %v965 = vmax.f32 %v803, %v933
      %v966 = vmax.f32 %v804, %v935
      %v967 = vmax.f32 %v805, %v938
      %v968 = vmax.f32 %v806, %v940
      %v969 = vmax.f32 %v807, %v943
      %v970 = vmax.f32 %v808, %v945
      %v971 = vmax.f32 %v809, %v948
      %v972 = vmax.f32 %v810, %v950
      %v973 = vmax.f32 %v811, %v953
      %v974 = vmax.f32 %v812, %v955
      %v975 = vld [vmem:[%s5] sm:$0x1]
      %v977 = vperm.slane %v975, 0
      %v979 = vadd.f32 %v957, %v977
      %v980 = vadd.f32 %v958, %v977
      %v981 = vadd.f32 %v959, %v977
      %v982 = vadd.f32 %v960, %v977
      %v983 = vadd.f32 %v961, %v977
      %v984 = vadd.f32 %v962, %v977
      %v985 = vadd.f32 %v963, %v977
      %v986 = vadd.f32 %v964, %v977
      %v987 = vadd.f32 %v965, %v977
      %v988 = vadd.f32 %v966, %v977
      %v989 = vadd.f32 %v967, %v977
      %v990 = vadd.f32 %v968, %v977
      %v991 = vadd.f32 %v969, %v977
      %v992 = vadd.f32 %v970, %v977
      %v993 = vadd.f32 %v971, %v977
      %v994 = vadd.f32 %v972, %v977
      %v995 = vadd.f32 %v973, %v977
      %v996 = vadd.f32 %v974, %v977
      %v997 = vmax.f32 %v979, 0.0
      %v998 = vmax.f32 %v980, 0.0
      %v999 = vmax.f32 %v981, 0.0
      %v1000 = vmax.f32 %v982, 0.0
      %v1001 = vmax.f32 %v983, 0.0
      %v1002 = vmax.f32 %v984, 0.0
      %v1003 = vmax.f32 %v985, 0.0
      %v1004 = vmax.f32 %v986, 0.0
      %v1005 = vmax.f32 %v987, 0.0
      %v1006 = vmax.f32 %v988, 0.0
      %v1007 = vmax.f32 %v989, 0.0
      %v1008 = vmax.f32 %v990, 0.0
      %v1009 = vmax.f32 %v991, 0.0
      %v1010 = vmax.f32 %v992, 0.0
      %v1011 = vmax.f32 %v993, 0.0
      %v1012 = vmax.f32 %v994, 0.0
      %v1013 = vmax.f32 %v995, 0.0
      %v1014 = vmax.f32 %v996, 0.0
      %v1015 = vpack.c.bf16 %v997, %v997
      %v1016 = vpack.c.bf16 %v998, %v998
      %v1017 = vpack.c.bf16 %v999, %v999
      %v1018 = vpack.c.bf16 %v1000, %v1000
      %v1019 = vpack.c.bf16 %v1001, %v1001
      %v1020 = vpack.c.bf16 %v1002, %v1002
      %v1021 = vpack.c.bf16 %v1003, %v1003
      %v1022 = vpack.c.bf16 %v1004, %v1004
      %v1023 = vpack.c.bf16 %v1005, %v1005
      %v1024 = vpack.c.bf16 %v1006, %v1006
      %v1025 = vpack.c.bf16 %v1007, %v1007
      %v1026 = vpack.c.bf16 %v1008, %v1008
      %v1027 = vpack.c.bf16 %v1009, %v1009
      %v1028 = vpack.c.bf16 %v1010, %v1010
      %v1029 = vpack.c.bf16 %v1011, %v1011
      %v1030 = vpack.c.bf16 %v1012, %v1012
      %v1031 = vpack.c.bf16 %v1013, %v1013
      %v1032 = vpack.c.bf16 %v1014, %v1014
      %vm1033 = vcmask 158720
      %1034 = vst.msk [vmem:[%s319] sm:$0xf] %vm1033, %v1015
      %1035 = vst.msk [vmem:[%s319 + $0x4] sm:$0xf] %vm1033, %v1016
      %1036 = vst.msk [vmem:[%s319 + $0x8] sm:$0xf] %vm1033, %v1017
      %1037 = vst.msk [vmem:[%s319 + $0xc] sm:$0xf] %vm1033, %v1018
      %1038 = vst.msk [vmem:[%s319 + $0x10] sm:$0xf] %vm1033, %v1019
      %1039 = vst.msk [vmem:[%s319 + $0x14] sm:$0xf] %vm1033, %v1020
      %1040 = vst.msk [vmem:[%s319 + $0x18] sm:$0xf] %vm1033, %v1021
      %1041 = vst.msk [vmem:[%s319 + $0x1c] sm:$0xf] %vm1033, %v1022
      %1042 = vst.msk [vmem:[%s319 + $0x20] sm:$0xf] %vm1033, %v1023
      %1043 = vst.msk [vmem:[%s319 + $0x24] sm:$0xf] %vm1033, %v1024
      %1044 = vst.msk [vmem:[%s319 + $0x28] sm:$0xf] %vm1033, %v1025
      %1045 = vst.msk [vmem:[%s319 + $0x2c] sm:$0xf] %vm1033, %v1026
      %1046 = vst.msk [vmem:[%s319 + $0x30] sm:$0xf] %vm1033, %v1027
      %1047 = vst.msk [vmem:[%s319 + $0x34] sm:$0xf] %vm1033, %v1028
      %1048 = vst.msk [vmem:[%s319 + $0x38] sm:$0xf] %vm1033, %v1029
      %1049 = vst.msk [vmem:[%s319 + $0x3c] sm:$0xf] %vm1033, %v1030
      %1050 = vst.msk [vmem:[%s319 + $0x40] sm:$0xf] %vm1033, %v1031
      %1051 = vst.msk [vmem:[%s319 + $0x44] sm:$0xf] %vm1033, %v1032
      %s1052 = smul.u32 18, %s17
      %p1053 = scmp.lt.s32.totalorder %s1052, 35
      %s1054 = scalar_select %p1053, %s1052, 35
      %s1055 = smul.addr %s1054, 4
      %s1056 = scalar_lea.vmem %s6, %s1055
      // Predicated region
      $region45: #{net_forward.3} parent=43 // pred_check
        %p1057 = pneg %p181
      $region46: #{net_forward.3} parent=43 // pred_check_branch
        %1059 = sbr.rel (%p1057) target = $region48
      $region47: #{net_forward.3} parent=43 // pred_region
        %s1060 = smul.u32 18, %s17
      $region48: #{net_forward.3} parent=43 // pred_fallthru
        _
    $region44: #{net_forward.3} parent=5 // pred_fallthru
      _
    %p1061 = scmp.le.s32.totalorder 2, %s12
    // Predicated region
    $region49: #{net_forward.3} parent=5 // pred_check
      %p1062 = pneg %p1061
    $region50: #{net_forward.3} parent=5 // pred_check_branch
      %1064 = sbr.rel (%p1062) target = $region52
    $region51: #{net_forward.3} parent=5 // pred_region
      %s1065 = ssub.s32 %s12, 2
      // Predicated region
      $region53: #{net_forward.3} parent=51 // pred_check
        %p1066 = pneg %p187
      $region54: #{net_forward.3} parent=51 // pred_check_branch
        %1068 = sbr.rel (%p1066) target = $region56
      $region55: #{net_forward.3} parent=51 // pred_region
        %s1069 = smul.u32 18, %s18
        %p1070 = scmp.lt.s32.totalorder %s1069, 35
        %s1071 = scalar_select %p1070, %s1069, 35
        %s1072 = smul.addr %s1071, 4
        %s1073 = scalar_lea.vmem %s6, %s1072
      $region56: #{net_forward.3} parent=51 // pred_fallthru
        _
    $region52: #{net_forward.3} parent=5 // pred_fallthru
      _
  $region6: #{net_forward.3} parent=0 // loop_footer
    %s16 = sadd.s32 1, %s12
  $region7: #{net_forward.3} parent=0 // loop_footer_branch
    %11 = sbr.rel target = $region3
  $region8: #{net_forward.3} parent=0 // loop_exit
    _

// kernel: net_forward.4
$region0: #{net_forward.4}
  #allocation0 [shape = 'u32[]', space=smem, size = 0x4, offset = 0x4, fixed_abs, tag = 'smem constant byte address 0x4 - core index']
  #allocation1 [shape = 'u32[72,128]{1,0:T(1,128)}', space=vmem, size = 0x9000, scoped, tag = 'internal scratch']
  %s0 = inlined_call_operand.vmem [shape: bf16[32,500], index: 0, kind: input, shape index: {}]
  %s1 = inlined_call_operand.vmem [shape: bf16[32,500], index: 1, kind: input, shape index: {}]
  %s2 = inlined_call_operand.vmem [shape: bf16[32,500], index: 2, kind: input, shape index: {}]
  %s3 = inlined_call_operand.vmem [shape: bf16[32,500], index: 3, kind: input, shape index: {}]
  %s4 = inlined_call_operand.vmem [shape: bf16[500,50], index: 4, kind: input, shape index: {}]
  %s5 = inlined_call_operand.vmem [shape: f32[1,50], index: 5, kind: input, shape index: {}]
  %s6 = inlined_call_operand.vmem [shape: bf16[32,50], index: 6, kind: output, shape index: {}]
  %s7 = sld [smem:[#allocation0]]
  $region57: #{net_forward.4} parent=0
    _
  %s9 = ssub.s32 1, %s7
  %s10 = scalar_select 0, %s9, %s7
  loop: start=0, step=1, limit=4
  $region2: #{net_forward.4} parent=0 // loop_pre_header
    _
  $region3: #{net_forward.4} parent=0 // loop_header
    %s12 = sphi 0, %s16
    %p13 = scmp.ge.s32.totalorder %s12, 4
    %s22 = sphi 0, %s24
    %s25 = sphi 0, %s22
    %s26 = sphi 0, %s25
    %s42 = sphi 0, %s26
    %s48 = sphi 0, %s50
    %s51 = sphi 0, %s48
    %s52 = sphi 0, %s51
    %s68 = sphi 0, %s52
    %s74 = sphi 0, %s76
    %s77 = sphi 0, %s74
    %s78 = sphi 0, %s77
    %s94 = sphi 0, %s78
    %s100 = sphi 0, %s102
    %s103 = sphi 0, %s100
    %s104 = sphi 0, %s103
    %s120 = sphi 0, %s104
    %s124 = sphi 0, %s124
    %s126 = sphi 0, %s124
    %s127 = sphi 0, %s126
    %s141 = sphi 0, %s127
    %s145 = sphi 0, %s145
    %s147 = sphi 0, %s145
    %s148 = sphi 0, %s147
    %s162 = sphi 0, %s148
    %s168 = sphi 0, %s170
    %s171 = sphi 0, %s168
    %s172 = sphi 0, %s171
    %s188 = sphi 0, %s172
  $region4: #{net_forward.4} parent=0 // loop_header_branch
    %15 = sbr.rel (%p13) target = $region8
  $region5: #{net_forward.4} parent=0 // loop_body
    %s17 = ssub.s32 %s12, 1
    %s18 = ssub.s32 %s12, 2
    %s19 = sadd.s32 %s12, 1
    %s20 = ssub.s32 %s12, %s19
    %p21 = scmp.eq.s32.totalorder %s20, 0
    %s23 = sadd.s32 %s22, 1
    %s24 = scalar_select %p21, %s22, %s23
    %p27 = pneg %p21
    %p28 = scmp.eq.s32.totalorder %s12, 1
    %p29 = por %p27, %p28
    %p30 = scmp.ne.s32.totalorder %s22, %s25
    %p31 = scmp.eq.s32.totalorder %s12, 0
    %p32 = por %p30, %p31
    %p33 = scmp.ne.s32.totalorder %s22, %s25
    %p34 = scmp.eq.s32.totalorder %s17, 1
    %p35 = por %p33, %p34
    %p36 = scmp.ne.s32.totalorder %s25, %s26
    %p37 = scmp.eq.s32.totalorder %s17, 0
    %p38 = por %p36, %p37
    %p39 = scmp.ne.s32.totalorder %s25, %s26
    %p40 = scmp.eq.s32.totalorder %s18, 1
    %p41 = por %p39, %p40
    %p43 = scmp.ne.s32.totalorder %s26, %s42
    %p44 = scmp.eq.s32.totalorder %s18, 0
    %p45 = por %p43, %p44
    %s46 = ssub.s32 %s12, %s19
    %p47 = scmp.eq.s32.totalorder %s46, 0
    %s49 = sadd.s32 %s48, 1
    %s50 = scalar_select %p47, %s48, %s49
    %p53 = pneg %p47
    %p54 = scmp.eq.s32.totalorder %s12, 1
    %p55 = por %p53, %p54
    %p56 = scmp.ne.s32.totalorder %s48, %s51
    %p57 = scmp.eq.s32.totalorder %s12, 0
    %p58 = por %p56, %p57
    %p59 = scmp.ne.s32.totalorder %s48, %s51
    %p60 = scmp.eq.s32.totalorder %s17, 1
    %p61 = por %p59, %p60
    %p62 = scmp.ne.s32.totalorder %s51, %s52
    %p63 = scmp.eq.s32.totalorder %s17, 0
    %p64 = por %p62, %p63
    %p65 = scmp.ne.s32.totalorder %s51, %s52
    %p66 = scmp.eq.s32.totalorder %s18, 1
    %p67 = por %p65, %p66
    %p69 = scmp.ne.s32.totalorder %s52, %s68
    %p70 = scmp.eq.s32.totalorder %s18, 0
    %p71 = por %p69, %p70
    %s72 = ssub.s32 %s12, %s19
    %p73 = scmp.eq.s32.totalorder %s72, 0
    %s75 = sadd.s32 %s74, 1
    %s76 = scalar_select %p73, %s74, %s75
    %p79 = pneg %p73
    %p80 = scmp.eq.s32.totalorder %s12, 1
    %p81 = por %p79, %p80
    %p82 = scmp.ne.s32.totalorder %s74, %s77
    %p83 = scmp.eq.s32.totalorder %s12, 0
    %p84 = por %p82, %p83
    %p85 = scmp.ne.s32.totalorder %s74, %s77
    %p86 = scmp.eq.s32.totalorder %s17, 1
    %p87 = por %p85, %p86
    %p88 = scmp.ne.s32.totalorder %s77, %s78
    %p89 = scmp.eq.s32.totalorder %s17, 0
    %p90 = por %p88, %p89
    %p91 = scmp.ne.s32.totalorder %s77, %s78
    %p92 = scmp.eq.s32.totalorder %s18, 1
    %p93 = por %p91, %p92
    %p95 = scmp.ne.s32.totalorder %s78, %s94
    %p96 = scmp.eq.s32.totalorder %s18, 0
    %p97 = por %p95, %p96
    %s98 = ssub.s32 %s12, %s19
    %p99 = scmp.eq.s32.totalorder %s98, 0
    %s101 = sadd.s32 %s100, 1
    %s102 = scalar_select %p99, %s100, %s101
    %p105 = pneg %p99
    %p106 = scmp.eq.s32.totalorder %s12, 1
    %p107 = por %p105, %p106
    %p108 = scmp.ne.s32.totalorder %s100, %s103
    %p109 = scmp.eq.s32.totalorder %s12, 0
    %p110 = por %p108, %p109
    %p111 = scmp.ne.s32.totalorder %s100, %s103
    %p112 = scmp.eq.s32.totalorder %s17, 1
    %p113 = por %p111, %p112
    %p114 = scmp.ne.s32.totalorder %s103, %s104
    %p115 = scmp.eq.s32.totalorder %s17, 0
    %p116 = por %p114, %p115
    %p117 = scmp.ne.s32.totalorder %s103, %s104
    %p118 = scmp.eq.s32.totalorder %s18, 1
    %p119 = por %p117, %p118
    %p121 = scmp.ne.s32.totalorder %s104, %s120
    %p122 = scmp.eq.s32.totalorder %s18, 0
    %p123 = por %p121, %p122
    %s125 = sadd.s32 %s124, 1
    %p128 = scmp.eq.s32.totalorder %s12, 1
    %p129 = scmp.ne.s32.totalorder %s124, %s126
    %p130 = scmp.eq.s32.totalorder %s12, 0
    %p131 = por %p129, %p130
    %p132 = scmp.ne.s32.totalorder %s124, %s126
    %p133 = scmp.eq.s32.totalorder %s17, 1
    %p134 = por %p132, %p133
    %p135 = scmp.ne.s32.totalorder %s126, %s127
    %p136 = scmp.eq.s32.totalorder %s17, 0
    %p137 = por %p135, %p136
    %p138 = scmp.ne.s32.totalorder %s126, %s127
    %p139 = scmp.eq.s32.totalorder %s18, 1
    %p140 = por %p138, %p139
    %p142 = scmp.ne.s32.totalorder %s127, %s141
    %p143 = scmp.eq.s32.totalorder %s18, 0
    %p144 = por %p142, %p143
    %s146 = sadd.s32 %s145, 1
    %p149 = scmp.eq.s32.totalorder %s12, 1
    %p150 = scmp.ne.s32.totalorder %s145, %s147
    %p151 = scmp.eq.s32.totalorder %s12, 0
    %p152 = por %p150, %p151
    %p153 = scmp.ne.s32.totalorder %s145, %s147
    %p154 = scmp.eq.s32.totalorder %s17, 1
    %p155 = por %p153, %p154
    %p156 = scmp.ne.s32.totalorder %s147, %s148
    %p157 = scmp.eq.s32.totalorder %s17, 0
    %p158 = por %p156, %p157
    %p159 = scmp.ne.s32.totalorder %s147, %s148
    %p160 = scmp.eq.s32.totalorder %s18, 1
    %p161 = por %p159, %p160
    %p163 = scmp.ne.s32.totalorder %s148, %s162
    %p164 = scmp.eq.s32.totalorder %s18, 0
    %p165 = por %p163, %p164
    %s166 = ssub.s32 %s12, %s19
    %p167 = scmp.eq.s32.totalorder %s166, 0
    %s169 = sadd.s32 %s168, 1
    %s170 = scalar_select %p167, %s168, %s169
    %p173 = pneg %p167
    %p174 = scmp.eq.s32.totalorder %s12, 1
    %p175 = por %p173, %p174
    %p176 = scmp.ne.s32.totalorder %s168, %s171
    %p177 = scmp.eq.s32.totalorder %s12, 0
    %p178 = por %p176, %p177
    %p179 = scmp.ne.s32.totalorder %s168, %s171
    %p180 = scmp.eq.s32.totalorder %s17, 1
    %p181 = por %p179, %p180
    %p182 = scmp.ne.s32.totalorder %s171, %s172
    %p183 = scmp.eq.s32.totalorder %s17, 0
    %p184 = por %p182, %p183
    %p185 = scmp.ne.s32.totalorder %s171, %s172
    %p186 = scmp.eq.s32.totalorder %s18, 1
    %p187 = por %p185, %p186
    %p189 = scmp.ne.s32.totalorder %s172, %s188
    %p190 = scmp.eq.s32.totalorder %s18, 0
    %p191 = por %p189, %p190
    %p192 = scmp.le.s32.totalorder 1, %s12
    %p193 = scmp.lt.s32.totalorder %s12, 3
    %p194 = pnand %p192, %p193
    %p195 = pneg %p194
    // Predicated region
    $region9: #{net_forward.4} parent=5 // pred_check
      _
    $region10: #{net_forward.4} parent=5 // pred_check_branch
      %197 = sbr.rel (%p194) target = $region12
    $region11: #{net_forward.4} parent=5 // pred_region
      %s198 = ssub.s32 %s12, 1
      // Predicated region
      $region13: #{net_forward.4} parent=11 // pred_check
        %p199 = pneg %p137
      $region14: #{net_forward.4} parent=11 // pred_check_branch
        %201 = sbr.rel (%p199) target = $region16
      $region15: #{net_forward.4} parent=11 // pred_region
        _
      $region16: #{net_forward.4} parent=11 // pred_fallthru
        _
      // Predicated region
      $region17: #{net_forward.4} parent=11 // pred_check
        %p202 = pneg %p158
      $region18: #{net_forward.4} parent=11 // pred_check_branch
        %204 = sbr.rel (%p202) target = $region20
      $region19: #{net_forward.4} parent=11 // pred_region
        _
      $region20: #{net_forward.4} parent=11 // pred_fallthru
        _
    $region12: #{net_forward.4} parent=5 // pred_fallthru
      _
    %p205 = scmp.lt.s32.totalorder %s12, 2
    // Predicated region
    $region21: #{net_forward.4} parent=5 // pred_check
      %p206 = pneg %p205
    $region22: #{net_forward.4} parent=5 // pred_check_branch
      %208 = sbr.rel (%p206) target = $region24
    $region23: #{net_forward.4} parent=5 // pred_region
      // Predicated region
      $region25: #{net_forward.4} parent=23 // pred_check
        %p209 = pneg %p32
      $region26: #{net_forward.4} parent=23 // pred_check_branch
        %211 = sbr.rel (%p209) target = $region28
      $region27: #{net_forward.4} parent=23 // pred_region
        %s212 = smul.u32 2, %s12
        %p213 = scmp.lt.s32.totalorder %s212, 3
        %s214 = scalar_select %p213, %s212, 3
        %s215 = smul.addr %s214, 4
        %s216 = smul.addr %s215, 4
        %s217 = scalar_lea.vmem %s0, %s216
        %s218 = smul.u32 2, %s12
      $region28: #{net_forward.4} parent=23 // pred_fallthru
        _
      // Predicated region
      $region29: #{net_forward.4} parent=23 // pred_check
        %p219 = pneg %p58
      $region30: #{net_forward.4} parent=23 // pred_check_branch
        %221 = sbr.rel (%p219) target = $region32
      $region31: #{net_forward.4} parent=23 // pred_region
        %s222 = smul.u32 2, %s12
        %p223 = scmp.lt.s32.totalorder %s222, 3
        %s224 = scalar_select %p223, %s222, 3
        %s225 = smul.addr %s224, 4
        %s226 = smul.addr %s225, 4
        %s227 = scalar_lea.vmem %s1, %s226
        %s228 = smul.u32 2, %s12
      $region32: #{net_forward.4} parent=23 // pred_fallthru
        _
      // Predicated region
      $region33: #{net_forward.4} parent=23 // pred_check
        %p229 = pneg %p84
      $region34: #{net_forward.4} parent=23 // pred_check_branch
        %231 = sbr.rel (%p229) target = $region36
      $region35: #{net_forward.4} parent=23 // pred_region
        %s232 = smul.u32 2, %s12
        %p233 = scmp.lt.s32.totalorder %s232, 3
        %s234 = scalar_select %p233, %s232, 3
        %s235 = smul.addr %s234, 4
        %s236 = smul.addr %s235, 4
        %s237 = scalar_lea.vmem %s2, %s236
        %s238 = smul.u32 2, %s12
      $region36: #{net_forward.4} parent=23 // pred_fallthru
        _
      // Predicated region
      $region37: #{net_forward.4} parent=23 // pred_check
        %p239 = pneg %p110
      $region38: #{net_forward.4} parent=23 // pred_check_branch
        %241 = sbr.rel (%p239) target = $region40
      $region39: #{net_forward.4} parent=23 // pred_region
        %s242 = smul.u32 2, %s12
        %p243 = scmp.lt.s32.totalorder %s242, 3
        %s244 = scalar_select %p243, %s242, 3
        %s245 = smul.addr %s244, 4
        %s246 = smul.addr %s245, 4
        %s247 = scalar_lea.vmem %s3, %s246
        %s248 = smul.u32 2, %s12
      $region40: #{net_forward.4} parent=23 // pred_fallthru
        _
    $region24: #{net_forward.4} parent=5 // pred_fallthru
      _
    %p249 = scmp.le.s32.totalorder 1, %s12
    %p250 = scmp.lt.s32.totalorder %s12, 3
    %p251 = pnand %p249, %p250
    %p252 = pneg %p251
    // Predicated region
    $region41: #{net_forward.4} parent=5 // pred_check
      _
    $region42: #{net_forward.4} parent=5 // pred_check_branch
      %254 = sbr.rel (%p251) target = $region44
    $region43: #{net_forward.4} parent=5 // pred_region
      %s255 = ssub.s32 %s12, 1
      %s256 = smul.u32 2, %s17
      %p257 = scmp.lt.s32.totalorder %s256, 3
      %s258 = scalar_select %p257, %s256, 3
      %s259 = smul.addr %s258, 4
      %s260 = smul.addr %s259, 4
      %s261 = scalar_lea.vmem %s0, %s260
      %p262 = pneg %p38
      %p263 = pneg %p35
      %s264 = smul.u32 2, %s17
      %p265 = scmp.lt.s32.totalorder %s264, 3
      %s266 = scalar_select %p265, %s264, 3
      %s267 = smul.addr %s266, 4
      %s268 = smul.addr %s267, 4
      %s269 = scalar_lea.vmem %s1, %s268
      %p270 = pneg %p64
      %p271 = pneg %p61
      %s272 = smul.u32 2, %s17
      %p273 = scmp.lt.s32.totalorder %s272, 3
      %s274 = scalar_select %p273, %s272, 3
      %s275 = smul.addr %s274, 4
      %s276 = smul.addr %s275, 4
      %s277 = scalar_lea.vmem %s2, %s276
      %p278 = pneg %p90
      %p279 = pneg %p87
      %s280 = smul.u32 2, %s17
      %p281 = scmp.lt.s32.totalorder %s280, 3
      %s282 = scalar_select %p281, %s280, 3
      %s283 = smul.addr %s282, 4
      %s284 = smul.addr %s283, 4
      %s285 = scalar_lea.vmem %s3, %s284
      %p286 = pneg %p116
      %p287 = pneg %p113
      %p288 = pneg %p137
      %p289 = pneg %p134
      %p290 = pneg %p158
      %p291 = pneg %p155
      %p292 = pneg %p184
      %p293 = pneg %p181
      %s294 = smul.u32 2, %s17
      %p295 = scmp.lt.s32.totalorder %s294, 3
      %s296 = scalar_select %p295, %s294, 3
      %s297 = smul.addr %s296, 4
      %s298 = scalar_lea.vmem %s6, %s297
      %s299 = smul.u32 2, %s17
      %p300 = scmp.lt.s32.totalorder %s299, 3
      %s301 = scalar_select %p300, %s299, 3
      %s302 = smul.addr %s301, 4
      %s303 = smul.addr %s302, 4
      %s304 = scalar_lea.vmem %s0, %s303
      %s305 = smul.u32 2, %s17
      %s306 = smul.u32 2, %s17
      %p307 = scmp.lt.s32.totalorder %s306, 3
      %s308 = scalar_select %p307, %s306, 3
      %s309 = smul.addr %s308, 4
      %s310 = smul.addr %s309, 4
      %s311 = scalar_lea.vmem %s1, %s310
      %s312 = smul.u32 2, %s17
      %s313 = smul.u32 2, %s17
      %p314 = scmp.lt.s32.totalorder %s313, 3
      %s315 = scalar_select %p314, %s313, 3
      %s316 = smul.addr %s315, 4
      %s317 = smul.addr %s316, 4
      %s318 = scalar_lea.vmem %s2, %s317
      %s319 = smul.u32 2, %s17
      %s320 = smul.u32 2, %s17
      %p321 = scmp.lt.s32.totalorder %s320, 3
      %s322 = scalar_select %p321, %s320, 3
      %s323 = smul.addr %s322, 4
      %s324 = smul.addr %s323, 4
      %s325 = scalar_lea.vmem %s3, %s324
      %s326 = smul.u32 2, %s17
      %s327 = smul.u32 2, %s17
      %p328 = scmp.lt.s32.totalorder %s327, 3
      %s329 = scalar_select %p328, %s327, 3
      %s330 = smul.addr %s329, 4
      %s331 = scalar_lea.vmem %s6, %s330
      %s332 = smul.u32 2, %s17
      %v333 = vld [vmem:[%s4] sm:$0xf]
      %v334 = vld [vmem:[%s4 + $0x4] sm:$0xf]
      %v335 = vld [vmem:[%s4 + $0x8] sm:$0xf]
      %v336 = vld [vmem:[%s4 + $0xc] sm:$0xf]
      %v337 = vld [vmem:[%s4 + $0x10] sm:$0xf]
      %v338 = vld [vmem:[%s4 + $0x14] sm:$0xf]
      %v339 = vld [vmem:[%s4 + $0x18] sm:$0xf]
      %v340 = vld [vmem:[%s4 + $0x1c] sm:$0xf]
      %v341 = vld [vmem:[%s4 + $0x20] sm:$0xf]
      %v342 = vld [vmem:[%s4 + $0x24] sm:$0xf]
      %v343 = vld [vmem:[%s4 + $0x28] sm:$0xf]
      %v344 = vld [vmem:[%s4 + $0x2c] sm:$0xf]
      %v345 = vld [vmem:[%s4 + $0x30] sm:$0xf]
      %v346 = vld [vmem:[%s4 + $0x34] sm:$0xf]
      %v347 = vld [vmem:[%s4 + $0x38] sm:$0xf]
      %v348 = vld [vmem:[%s4 + $0x3c] sm:$0xf]
      %v349 = vld [vmem:[%s4 + $0x40] sm:$0xf]
      %v350 = vld [vmem:[%s4 + $0x44] sm:$0xf]
      %v351 = vld [vmem:[%s4 + $0x48] sm:$0xf]
      %v352 = vld [vmem:[%s4 + $0x4c] sm:$0xf]
      %v353 = vld [vmem:[%s4 + $0x50] sm:$0xf]
      %v354 = vld [vmem:[%s4 + $0x54] sm:$0xf]
      %v355 = vld [vmem:[%s4 + $0x58] sm:$0xf]
      %v356 = vld [vmem:[%s4 + $0x5c] sm:$0xf]
      %v357 = vld [vmem:[%s4 + $0x60] sm:$0xf]
      %v358 = vld [vmem:[%s4 + $0x64] sm:$0xf]
      %v359 = vld [vmem:[%s4 + $0x68] sm:$0xf]
      %v360 = vld [vmem:[%s4 + $0x6c] sm:$0xf]
      %v361 = vld [vmem:[%s4 + $0x70] sm:$0xf]
      %v362 = vld [vmem:[%s4 + $0x74] sm:$0xf]
      %v363 = vld [vmem:[%s4 + $0x78] sm:$0xf]
      %v364 = vld [vmem:[%s4 + $0x7c] sm:$0xf]
      %v365 = vld [vmem:[%s4 + $0x80] sm:$0xf]
      %v366 = vld [vmem:[%s4 + $0x84] sm:$0xf]
      %v367 = vld [vmem:[%s4 + $0x88] sm:$0xf]
      %v368 = vld [vmem:[%s4 + $0x8c] sm:$0xf]
      %v369 = vld [vmem:[%s4 + $0x90] sm:$0xf]
      %v370 = vld [vmem:[%s4 + $0x94] sm:$0xf]
      %v371 = vld [vmem:[%s4 + $0x98] sm:$0xf]
      %v372 = vld [vmem:[%s4 + $0x9c] sm:$0xf]
      %v373 = vld [vmem:[%s4 + $0xa0] sm:$0xf]
      %v374 = vld [vmem:[%s4 + $0xa4] sm:$0xf]
      %v375 = vld [vmem:[%s4 + $0xa8] sm:$0xf]
      %v376 = vld [vmem:[%s4 + $0xac] sm:$0xf]
      %v377 = vld [vmem:[%s4 + $0xb0] sm:$0xf]
      %v378 = vld [vmem:[%s4 + $0xb4] sm:$0xf]
      %v379 = vld [vmem:[%s4 + $0xb8] sm:$0xf]
      %v380 = vld [vmem:[%s4 + $0xbc] sm:$0xf]
      %v381 = vld [vmem:[%s4 + $0xc0] sm:$0xf]
      %v382 = vld [vmem:[%s4 + $0xc4] sm:$0xf]
      %v383 = vld [vmem:[%s4 + $0xc8] sm:$0xf]
      %v384 = vld [vmem:[%s4 + $0xcc] sm:$0xf]
      %v385 = vld [vmem:[%s4 + $0xd0] sm:$0xf]
      %v386 = vld [vmem:[%s4 + $0xd4] sm:$0xf]
      %v387 = vld [vmem:[%s4 + $0xd8] sm:$0xf]
      %v388 = vld [vmem:[%s4 + $0xdc] sm:$0xf]
      %v389 = vld [vmem:[%s4 + $0xe0] sm:$0xf]
      %v390 = vld [vmem:[%s4 + $0xe4] sm:$0xf]
      %v391 = vld [vmem:[%s4 + $0xe8] sm:$0xf]
      %v392 = vld [vmem:[%s4 + $0xec] sm:$0xf]
      %v393 = vld [vmem:[%s4 + $0xf0] sm:$0xf]
      %v394 = vld [vmem:[%s4 + $0xf4] sm:$0xf]
      %v395 = vld [vmem:[%s4 + $0xf8] sm:$0x3]
      %v396 = vld [vmem:[%s304] sm:$0xff]
      %v397 = vld [vmem:[%s304 + $0x8] sm:$0xff]
      %v398 = vld [vmem:[%s304 + $0x10] sm:$0xff]
      %v399 = vld [vmem:[%s304 + $0x18] sm:$0xff]
      %v404 = vunpack.c.l.b16 %v396
      %v405 = vunpack.c.h.b16 %v396
      %v406 = vunpack.c.l.b16 %v397
      %v407 = vunpack.c.h.b16 %v397
      %v408 = vunpack.c.l.b16 %v398
      %v409 = vunpack.c.h.b16 %v398
      %v410 = vunpack.c.l.b16 %v399
      %v411 = vunpack.c.h.b16 %v399
      %v412 = vpack.c.b16 %v408, %v404
      %v413 = vpack.c.b16 %v409, %v405
      %v414 = vpack.c.b16 %v410, %v406
      %v415 = vpack.c.b16 %v411, %v407
      %v482 = vunpack.c.l.b16 %v333
      %v483 = vunpack.c.l.b16 %v334
      %v484 = vunpack.c.l.b16 %v335
      %v485 = vunpack.c.l.b16 %v336
      %v486 = vunpack.c.l.b16 %v337
      %v487 = vunpack.c.l.b16 %v338
      %v488 = vunpack.c.l.b16 %v339
      %v489 = vunpack.c.l.b16 %v340
      %v490 = vunpack.c.l.b16 %v341
      %v491 = vunpack.c.l.b16 %v342
      %v492 = vunpack.c.l.b16 %v343
      %v493 = vunpack.c.l.b16 %v344
      %v494 = vunpack.c.l.b16 %v345
      %v495 = vunpack.c.l.b16 %v346
      %v496 = vunpack.c.l.b16 %v347
      %v497 = vunpack.c.l.b16 %v348
      %v498 = vunpack.c.l.b16 %v349
      %v499 = vunpack.c.l.b16 %v350
      %v500 = vunpack.c.l.b16 %v351
      %v501 = vunpack.c.l.b16 %v352
      %v502 = vunpack.c.l.b16 %v353
      %v503 = vunpack.c.l.b16 %v354
      %v504 = vunpack.c.l.b16 %v355
      %v505 = vunpack.c.l.b16 %v356
      %v506 = vunpack.c.l.b16 %v357
      %v507 = vunpack.c.l.b16 %v358
      %v508 = vunpack.c.l.b16 %v359
      %v509 = vunpack.c.l.b16 %v360
      %v510 = vunpack.c.l.b16 %v361
      %v511 = vunpack.c.l.b16 %v362
      %v512 = vunpack.c.l.b16 %v363
      %v513 = vunpack.c.l.b16 %v364
      %v514 = vunpack.c.l.b16 %v365
      %v515 = vunpack.c.l.b16 %v366
      %v516 = vunpack.c.l.b16 %v367
      %v517 = vunpack.c.l.b16 %v368
      %v518 = vunpack.c.l.b16 %v369
      %v519 = vunpack.c.l.b16 %v370
      %v520 = vunpack.c.l.b16 %v371
      %v521 = vunpack.c.l.b16 %v372
      %v522 = vunpack.c.l.b16 %v373
      %v523 = vunpack.c.l.b16 %v374
      %v524 = vunpack.c.l.b16 %v375
      %v525 = vunpack.c.l.b16 %v376
      %v526 = vunpack.c.l.b16 %v377
      %v527 = vunpack.c.l.b16 %v378
      %v528 = vunpack.c.l.b16 %v379
      %v529 = vunpack.c.l.b16 %v380
      %v530 = vunpack.c.l.b16 %v381
      %v531 = vunpack.c.l.b16 %v382
      %v532 = vunpack.c.l.b16 %v383
      %v533 = vunpack.c.l.b16 %v384
      %v534 = vunpack.c.l.b16 %v385
      %v535 = vunpack.c.l.b16 %v386
      %v536 = vunpack.c.l.b16 %v387
      %v537 = vunpack.c.l.b16 %v388
      %v538 = vunpack.c.l.b16 %v389
      %v539 = vunpack.c.l.b16 %v390
      %v540 = vunpack.c.l.b16 %v391
      %v541 = vunpack.c.l.b16 %v392
      %v542 = vunpack.c.l.b16 %v393
      %v543 = vunpack.c.l.b16 %v394
      %v544 = vunpack.c.l.b16 %v395
      %v545 = vpack.c.b16 %v483, %v482
      %v546 = vpack.c.b16 %v485, %v484
      %v547 = vpack.c.b16 %v487, %v486
      %v548 = vpack.c.b16 %v489, %v488
      %v549 = vpack.c.b16 %v491, %v490
      %v550 = vpack.c.b16 %v493, %v492
      %v551 = vpack.c.b16 %v495, %v494
      %v552 = vpack.c.b16 %v497, %v496
      %v553 = vpack.c.b16 %v499, %v498
      %v554 = vpack.c.b16 %v501, %v500
      %v555 = vpack.c.b16 %v503, %v502
      %v556 = vpack.c.b16 %v505, %v504
      %v557 = vpack.c.b16 %v507, %v506
      %v558 = vpack.c.b16 %v509, %v508
      %v559 = vpack.c.b16 %v511, %v510
      %v560 = vpack.c.b16 %v513, %v512
      %v561 = vpack.c.b16 %v515, %v514
      %v562 = vpack.c.b16 %v517, %v516
      %v563 = vpack.c.b16 %v519, %v518
      %v564 = vpack.c.b16 %v521, %v520
      %v565 = vpack.c.b16 %v523, %v522
      %v566 = vpack.c.b16 %v525, %v524
      %v567 = vpack.c.b16 %v527, %v526
      %v568 = vpack.c.b16 %v529, %v528
      %v569 = vpack.c.b16 %v531, %v530
      %v570 = vpack.c.b16 %v533, %v532
      %v571 = vpack.c.b16 %v535, %v534
      %v572 = vpack.c.b16 %v537, %v536
      %v573 = vpack.c.b16 %v539, %v538
      %v574 = vpack.c.b16 %v541, %v540
      %v575 = vpack.c.b16 %v543, %v542
      %v576 = vpack.c.b16 %v544, %v544
      %vm608 = vcmask 949248
      %v610 = vsel %vm608, %v415, 0
      %vm612 = vcmask 1041408
      %v614 = vsel %vm612, %v576, 0
      %616 = vmatpush.bf16.msra.mxu0 %v552
      %617 = vmatpush.bf16.msra.mxu0 %v551
      %618 = vmatpush.bf16.msra.mxu0 %v550
      %619 = vmatpush.bf16.msra.mxu0 %v549
      %620 = vmatpush.bf16.msra.mxu0 %v548
      %621 = vmatpush.bf16.msra.mxu0 %v547
      %622 = vmatpush.bf16.msra.mxu0 %v546
      %623 = vmatpush.bf16.msra.mxu0 %v545
      %624 = vmatmul.bf16.gmra.mxu0 %v412
      %v625 = vpop.f32.mrf.mxu0
      %v626 = vadd.f32 0.0, %v625
      %v627 = vpop.f32.mrf.mxu0
      %v628 = vadd.f32 0.0, %v627
      %629 = vdwg.mxu0
      %630 = vmatpush.bf16.msra.mxu0 %v560
      %631 = vmatpush.bf16.msra.mxu0 %v559
      %632 = vmatpush.bf16.msra.mxu0 %v558
      %633 = vmatpush.bf16.msra.mxu0 %v557
      %634 = vmatpush.bf16.msra.mxu0 %v556
      %635 = vmatpush.bf16.msra.mxu0 %v555
      %636 = vmatpush.bf16.msra.mxu0 %v554
      %637 = vmatpush.bf16.msra.mxu0 %v553
      %638 = vmatmul.bf16.gmra.mxu0 %v413
      %v639 = vpop.f32.mrf.mxu0
      %v640 = vadd.f32 %v626, %v639
      %v641 = vpop.f32.mrf.mxu0
      %v642 = vadd.f32 %v628, %v641
      %643 = vdwg.mxu0
      %644 = vmatpush.bf16.msra.mxu0 %v568
      %645 = vmatpush.bf16.msra.mxu0 %v567
      %646 = vmatpush.bf16.msra.mxu0 %v566
      %647 = vmatpush.bf16.msra.mxu0 %v565
      %648 = vmatpush.bf16.msra.mxu0 %v564
      %649 = vmatpush.bf16.msra.mxu0 %v563
      %650 = vmatpush.bf16.msra.mxu0 %v562
      %651 = vmatpush.bf16.msra.mxu0 %v561
      %652 = vmatmul.bf16.gmra.mxu0 %v414
      %v653 = vpop.f32.mrf.mxu0
      %v654 = vadd.f32 %v640, %v653
      %v655 = vpop.f32.mrf.mxu0
      %v656 = vadd.f32 %v642, %v655
      %657 = vdwg.mxu0
      %658 = vmatpush.bf16.msra.mxu0 %v614
      %659 = vmatpush.bf16.msra.mxu0 %v575
      %660 = vmatpush.bf16.msra.mxu0 %v574
      %661 = vmatpush.bf16.msra.mxu0 %v573
      %662 = vmatpush.bf16.msra.mxu0 %v572
      %663 = vmatpush.bf16.msra.mxu0 %v571
      %664 = vmatpush.bf16.msra.mxu0 %v570
      %665 = vmatpush.bf16.msra.mxu0 %v569
      %666 = vmatmul.bf16.gmra.mxu0 %v610
      %v667 = vpop.f32.mrf.mxu0
      %v668 = vadd.f32 %v654, %v667
      %v669 = vpop.f32.mrf.mxu0
      %v670 = vadd.f32 %v656, %v669
      %671 = vdwg.mxu0
      %v672 = vld [vmem:[%s311] sm:$0xff]
      %v673 = vld [vmem:[%s311 + $0x8] sm:$0xff]
      %v674 = vld [vmem:[%s311 + $0x10] sm:$0xff]
      %v675 = vld [vmem:[%s311 + $0x18] sm:$0xff]
      %v680 = vunpack.c.l.b16 %v672
      %v681 = vunpack.c.h.b16 %v672
      %v682 = vunpack.c.l.b16 %v673
      %v683 = vunpack.c.h.b16 %v673
      %v684 = vunpack.c.l.b16 %v674
      %v685 = vunpack.c.h.b16 %v674
      %v686 = vunpack.c.l.b16 %v675
      %v687 = vunpack.c.h.b16 %v675
      %v688 = vpack.c.b16 %v684, %v680
      %v689 = vpack.c.b16 %v685, %v681
      %v690 = vpack.c.b16 %v686, %v682
      %v691 = vpack.c.b16 %v687, %v683
      %v696 = vsel %vm608, %v691, 0
      %698 = vmatpush.bf16.msra.mxu0 %v552
      %699 = vmatpush.bf16.msra.mxu0 %v551
      %700 = vmatpush.bf16.msra.mxu0 %v550
      %701 = vmatpush.bf16.msra.mxu0 %v549
      %702 = vmatpush.bf16.msra.mxu0 %v548
      %703 = vmatpush.bf16.msra.mxu0 %v547
      %704 = vmatpush.bf16.msra.mxu0 %v546
      %705 = vmatpush.bf16.msra.mxu0 %v545
      %706 = vmatmul.bf16.gmra.mxu0 %v688
      %v707 = vpop.f32.mrf.mxu0
      %v708 = vadd.f32 0.0, %v707
      %v709 = vpop.f32.mrf.mxu0
      %v710 = vadd.f32 0.0, %v709
      %711 = vdwg.mxu0
      %712 = vmatpush.bf16.msra.mxu0 %v560
      %713 = vmatpush.bf16.msra.mxu0 %v559
      %714 = vmatpush.bf16.msra.mxu0 %v558
      %715 = vmatpush.bf16.msra.mxu0 %v557
      %716 = vmatpush.bf16.msra.mxu0 %v556
      %717 = vmatpush.bf16.msra.mxu0 %v555
      %718 = vmatpush.bf16.msra.mxu0 %v554
      %719 = vmatpush.bf16.msra.mxu0 %v553
      %720 = vmatmul.bf16.gmra.mxu0 %v689
      %v721 = vpop.f32.mrf.mxu0
      %v722 = vadd.f32 %v708, %v721
      %v723 = vpop.f32.mrf.mxu0
      %v724 = vadd.f32 %v710, %v723
      %725 = vdwg.mxu0
      %726 = vmatpush.bf16.msra.mxu0 %v568
      %727 = vmatpush.bf16.msra.mxu0 %v567
      %728 = vmatpush.bf16.msra.mxu0 %v566
      %729 = vmatpush.bf16.msra.mxu0 %v565
      %730 = vmatpush.bf16.msra.mxu0 %v564
      %731 = vmatpush.bf16.msra.mxu0 %v563
      %732 = vmatpush.bf16.msra.mxu0 %v562
      %733 = vmatpush.bf16.msra.mxu0 %v561
      %734 = vmatmul.bf16.gmra.mxu0 %v690
      %v735 = vpop.f32.mrf.mxu0
      %v736 = vadd.f32 %v722, %v735
      %v737 = vpop.f32.mrf.mxu0
      %v738 = vadd.f32 %v724, %v737
      %739 = vdwg.mxu0
      %740 = vmatpush.bf16.msra.mxu0 %v614
      %741 = vmatpush.bf16.msra.mxu0 %v575
      %742 = vmatpush.bf16.msra.mxu0 %v574
      %743 = vmatpush.bf16.msra.mxu0 %v573
      %744 = vmatpush.bf16.msra.mxu0 %v572
      %745 = vmatpush.bf16.msra.mxu0 %v571
      %746 = vmatpush.bf16.msra.mxu0 %v570
      %747 = vmatpush.bf16.msra.mxu0 %v569
      %748 = vmatmul.bf16.gmra.mxu0 %v696
      %v749 = vpop.f32.mrf.mxu0
      %v750 = vadd.f32 %v736, %v749
      %v751 = vpop.f32.mrf.mxu0
      %v752 = vadd.f32 %v738, %v751
      %753 = vdwg.mxu0
      %v754 = vmax.f32 %v668, %v750
      %v755 = vmax.f32 %v670, %v752
      %v756 = vld [vmem:[%s318] sm:$0xff]
      %v757 = vld [vmem:[%s318 + $0x8] sm:$0xff]
      %v758 = vld [vmem:[%s318 + $0x10] sm:$0xff]
      %v759 = vld [vmem:[%s318 + $0x18] sm:$0xff]
      %v764 = vunpack.c.l.b16 %v756
      %v765 = vunpack.c.h.b16 %v756
      %v766 = vunpack.c.l.b16 %v757
      %v767 = vunpack.c.h.b16 %v757
      %v768 = vunpack.c.l.b16 %v758
      %v769 = vunpack.c.h.b16 %v758
      %v770 = vunpack.c.l.b16 %v759
      %v771 = vunpack.c.h.b16 %v759
      %v772 = vpack.c.b16 %v768, %v764
      %v773 = vpack.c.b16 %v769, %v765
      %v774 = vpack.c.b16 %v770, %v766
      %v775 = vpack.c.b16 %v771, %v767
      %v780 = vsel %vm608, %v775, 0
      %782 = vmatpush.bf16.msra.mxu0 %v552
      %783 = vmatpush.bf16.msra.mxu0 %v551
      %784 = vmatpush.bf16.msra.mxu0 %v550
      %785 = vmatpush.bf16.msra.mxu0 %v549
      %786 = vmatpush.bf16.msra.mxu0 %v548
      %787 = vmatpush.bf16.msra.mxu0 %v547
      %788 = vmatpush.bf16.msra.mxu0 %v546
      %789 = vmatpush.bf16.msra.mxu0 %v545
      %790 = vmatmul.bf16.gmra.mxu0 %v772
      %v791 = vpop.f32.mrf.mxu0
      %v792 = vadd.f32 0.0, %v791
      %v793 = vpop.f32.mrf.mxu0
      %v794 = vadd.f32 0.0, %v793
      %795 = vdwg.mxu0
      %796 = vmatpush.bf16.msra.mxu0 %v560
      %797 = vmatpush.bf16.msra.mxu0 %v559
      %798 = vmatpush.bf16.msra.mxu0 %v558
      %799 = vmatpush.bf16.msra.mxu0 %v557
      %800 = vmatpush.bf16.msra.mxu0 %v556
      %801 = vmatpush.bf16.msra.mxu0 %v555
      %802 = vmatpush.bf16.msra.mxu0 %v554
      %803 = vmatpush.bf16.msra.mxu0 %v553
      %804 = vmatmul.bf16.gmra.mxu0 %v773
      %v805 = vpop.f32.mrf.mxu0
      %v806 = vadd.f32 %v792, %v805
      %v807 = vpop.f32.mrf.mxu0
      %v808 = vadd.f32 %v794, %v807
      %809 = vdwg.mxu0
      %810 = vmatpush.bf16.msra.mxu0 %v568
      %811 = vmatpush.bf16.msra.mxu0 %v567
      %812 = vmatpush.bf16.msra.mxu0 %v566
      %813 = vmatpush.bf16.msra.mxu0 %v565
      %814 = vmatpush.bf16.msra.mxu0 %v564
      %815 = vmatpush.bf16.msra.mxu0 %v563
      %816 = vmatpush.bf16.msra.mxu0 %v562
      %817 = vmatpush.bf16.msra.mxu0 %v561
      %818 = vmatmul.bf16.gmra.mxu0 %v774
      %v819 = vpop.f32.mrf.mxu0
      %v820 = vadd.f32 %v806, %v819
      %v821 = vpop.f32.mrf.mxu0
      %v822 = vadd.f32 %v808, %v821
      %823 = vdwg.mxu0
      %824 = vmatpush.bf16.msra.mxu0 %v614
      %825 = vmatpush.bf16.msra.mxu0 %v575
      %826 = vmatpush.bf16.msra.mxu0 %v574
      %827 = vmatpush.bf16.msra.mxu0 %v573
      %828 = vmatpush.bf16.msra.mxu0 %v572
      %829 = vmatpush.bf16.msra.mxu0 %v571
      %830 = vmatpush.bf16.msra.mxu0 %v570
      %831 = vmatpush.bf16.msra.mxu0 %v569
      %832 = vmatmul.bf16.gmra.mxu0 %v780
      %v833 = vpop.f32.mrf.mxu0
      %v834 = vadd.f32 %v820, %v833
      %v835 = vpop.f32.mrf.mxu0
      %v836 = vadd.f32 %v822, %v835
      %837 = vdwg.mxu0
      %v838 = vmax.f32 %v754, %v834
      %v839 = vmax.f32 %v755, %v836
      %v840 = vld [vmem:[%s325] sm:$0xff]
      %v841 = vld [vmem:[%s325 + $0x8] sm:$0xff]
      %v842 = vld [vmem:[%s325 + $0x10] sm:$0xff]
      %v843 = vld [vmem:[%s325 + $0x18] sm:$0xff]
      %v848 = vunpack.c.l.b16 %v840
      %v849 = vunpack.c.h.b16 %v840
      %v850 = vunpack.c.l.b16 %v841
      %v851 = vunpack.c.h.b16 %v841
      %v852 = vunpack.c.l.b16 %v842
      %v853 = vunpack.c.h.b16 %v842
      %v854 = vunpack.c.l.b16 %v843
      %v855 = vunpack.c.h.b16 %v843
      %v856 = vpack.c.b16 %v852, %v848
      %v857 = vpack.c.b16 %v853, %v849
      %v858 = vpack.c.b16 %v854, %v850
      %v859 = vpack.c.b16 %v855, %v851
      %v864 = vsel %vm608, %v859, 0
      %866 = vmatpush.bf16.msra.mxu0 %v552
      %867 = vmatpush.bf16.msra.mxu0 %v551
      %868 = vmatpush.bf16.msra.mxu0 %v550
      %869 = vmatpush.bf16.msra.mxu0 %v549
      %870 = vmatpush.bf16.msra.mxu0 %v548
      %871 = vmatpush.bf16.msra.mxu0 %v547
      %872 = vmatpush.bf16.msra.mxu0 %v546
      %873 = vmatpush.bf16.msra.mxu0 %v545
      %874 = vmatmul.bf16.gmra.mxu0 %v856
      %v875 = vpop.f32.mrf.mxu0
      %v876 = vadd.f32 0.0, %v875
      %v877 = vpop.f32.mrf.mxu0
      %v878 = vadd.f32 0.0, %v877
      %879 = vdwg.mxu0
      %880 = vmatpush.bf16.msra.mxu0 %v560
      %881 = vmatpush.bf16.msra.mxu0 %v559
      %882 = vmatpush.bf16.msra.mxu0 %v558
      %883 = vmatpush.bf16.msra.mxu0 %v557
      %884 = vmatpush.bf16.msra.mxu0 %v556
      %885 = vmatpush.bf16.msra.mxu0 %v555
      %886 = vmatpush.bf16.msra.mxu0 %v554
      %887 = vmatpush.bf16.msra.mxu0 %v553
      %888 = vmatmul.bf16.gmra.mxu0 %v857
      %v889 = vpop.f32.mrf.mxu0
      %v890 = vadd.f32 %v876, %v889
      %v891 = vpop.f32.mrf.mxu0
      %v892 = vadd.f32 %v878, %v891
      %893 = vdwg.mxu0
      %894 = vmatpush.bf16.msra.mxu0 %v568
      %895 = vmatpush.bf16.msra.mxu0 %v567
      %896 = vmatpush.bf16.msra.mxu0 %v566
      %897 = vmatpush.bf16.msra.mxu0 %v565
      %898 = vmatpush.bf16.msra.mxu0 %v564
      %899 = vmatpush.bf16.msra.mxu0 %v563
      %900 = vmatpush.bf16.msra.mxu0 %v562
      %901 = vmatpush.bf16.msra.mxu0 %v561
      %902 = vmatmul.bf16.gmra.mxu0 %v858
      %v903 = vpop.f32.mrf.mxu0
      %v904 = vadd.f32 %v890, %v903
      %v905 = vpop.f32.mrf.mxu0
      %v906 = vadd.f32 %v892, %v905
      %907 = vdwg.mxu0
      %908 = vmatpush.bf16.msra.mxu0 %v614
      %909 = vmatpush.bf16.msra.mxu0 %v575
      %910 = vmatpush.bf16.msra.mxu0 %v574
      %911 = vmatpush.bf16.msra.mxu0 %v573
      %912 = vmatpush.bf16.msra.mxu0 %v572
      %913 = vmatpush.bf16.msra.mxu0 %v571
      %914 = vmatpush.bf16.msra.mxu0 %v570
      %915 = vmatpush.bf16.msra.mxu0 %v569
      %916 = vmatmul.bf16.gmra.mxu0 %v864
      %v917 = vpop.f32.mrf.mxu0
      %v918 = vadd.f32 %v904, %v917
      %v919 = vpop.f32.mrf.mxu0
      %v920 = vadd.f32 %v906, %v919
      %921 = vdwg.mxu0
      %v922 = vmax.f32 %v838, %v918
      %v923 = vmax.f32 %v839, %v920
      %v924 = vld [vmem:[%s5] sm:$0x1]
      %v926 = vperm.slane %v924, 0
      %v928 = vadd.f32 %v922, %v926
      %v929 = vadd.f32 %v923, %v926
      %v930 = vmax.f32 %v928, 0.0
      %v931 = vmax.f32 %v929, 0.0
      %v932 = vpack.c.bf16 %v930, %v930
      %v933 = vpack.c.bf16 %v931, %v931
      %vm934 = vcmask 404480
      %935 = vst.msk [vmem:[%s331] sm:$0xf] %vm934, %v932
      %936 = vst.msk [vmem:[%s331 + $0x4] sm:$0xf] %vm934, %v933
      %s937 = smul.u32 2, %s17
      %p938 = scmp.lt.s32.totalorder %s937, 3
      %s939 = scalar_select %p938, %s937, 3
      %s940 = smul.addr %s939, 4
      %s941 = scalar_lea.vmem %s6, %s940
      // Predicated region
      $region45: #{net_forward.4} parent=43 // pred_check
        %p942 = pneg %p181
      $region46: #{net_forward.4} parent=43 // pred_check_branch
        %944 = sbr.rel (%p942) target = $region48
      $region47: #{net_forward.4} parent=43 // pred_region
        %s945 = smul.u32 2, %s17
      $region48: #{net_forward.4} parent=43 // pred_fallthru
        _
    $region44: #{net_forward.4} parent=5 // pred_fallthru
      _
    %p946 = scmp.le.s32.totalorder 2, %s12
    // Predicated region
    $region49: #{net_forward.4} parent=5 // pred_check
      %p947 = pneg %p946
    $region50: #{net_forward.4} parent=5 // pred_check_branch
      %949 = sbr.rel (%p947) target = $region52
    $region51: #{net_forward.4} parent=5 // pred_region
      %s950 = ssub.s32 %s12, 2
      // Predicated region
      $region53: #{net_forward.4} parent=51 // pred_check
        %p951 = pneg %p187
      $region54: #{net_forward.4} parent=51 // pred_check_branch
        %953 = sbr.rel (%p951) target = $region56
      $region55: #{net_forward.4} parent=51 // pred_region
        %s954 = smul.u32 2, %s18
        %p955 = scmp.lt.s32.totalorder %s954, 3
        %s956 = scalar_select %p955, %s954, 3
        %s957 = smul.addr %s956, 4
        %s958 = scalar_lea.vmem %s6, %s957
      $region56: #{net_forward.4} parent=51 // pred_fallthru
        _
    $region52: #{net_forward.4} parent=5 // pred_fallthru
      _
  $region6: #{net_forward.4} parent=0 // loop_footer
    %s16 = sadd.s32 1, %s12
  $region7: #{net_forward.4} parent=0 // loop_footer_branch
    %11 = sbr.rel target = $region3
  $region8: #{net_forward.4} parent=0 // loop_exit
    _

// kernel: net_forward.5
$region0: #{net_forward.5}
  #allocation0 [shape = 'u32[]', space=smem, size = 0x4, offset = 0x4, fixed_abs, tag = 'smem constant byte address 0x4 - core index']
  #allocation1 [shape = 'u32[72,128]{1,0:T(1,128)}', space=vmem, size = 0x9000, scoped, tag = 'internal scratch']
  %s0 = inlined_call_operand.vmem [shape: bf16[16,800], index: 0, kind: input, shape index: {}]
  %s1 = inlined_call_operand.vmem [shape: bf16[800,500], index: 1, kind: input, shape index: {}]
  %s2 = inlined_call_operand.vmem [shape: f32[1,500], index: 2, kind: input, shape index: {}]
  %s3 = inlined_call_operand.vmem [shape: bf16[500,128], index: 3, kind: input, shape index: {}]
  %s4 = inlined_call_operand.vmem [shape: f32[1,128], index: 4, kind: input, shape index: {}]
  %s5 = inlined_call_operand.vmem [shape: f32[16,128], index: 5, kind: output, shape index: {}]
  %s6 = sld [smem:[#allocation0]]
  $region30: #{net_forward.5} parent=0
    _
  %s8 = ssub.s32 1, %s6
  %s9 = scalar_select 0, %s8, %s6
  // Predicated region
  $region2: #{net_forward.5} parent=0 // pred_check
    _
  $region3: #{net_forward.5} parent=0 // pred_check_branch
    %11 = sbr.rel (0) target = $region5
  $region4: #{net_forward.5} parent=0 // pred_region
    _
  $region5: #{net_forward.5} parent=0 // pred_fallthru
    _
  // Predicated region
  $region6: #{net_forward.5} parent=0 // pred_check
    _
  $region7: #{net_forward.5} parent=0 // pred_check_branch
    %13 = sbr.rel (0) target = $region9
  $region8: #{net_forward.5} parent=0 // pred_region
    _
  $region9: #{net_forward.5} parent=0 // pred_fallthru
    _
  // Predicated region
  $region10: #{net_forward.5} parent=0 // pred_check
    _
  $region11: #{net_forward.5} parent=0 // pred_check_branch
    %15 = sbr.rel (0) target = $region13
  $region12: #{net_forward.5} parent=0 // pred_region
    _
  $region13: #{net_forward.5} parent=0 // pred_fallthru
    _
  // Predicated region
  $region14: #{net_forward.5} parent=0 // pred_check
    _
  $region15: #{net_forward.5} parent=0 // pred_check_branch
    %17 = sbr.rel (0) target = $region17
  $region16: #{net_forward.5} parent=0 // pred_region
    _
  $region17: #{net_forward.5} parent=0 // pred_fallthru
    _
  // Predicated region
  $region18: #{net_forward.5} parent=0 // pred_check
    _
  $region19: #{net_forward.5} parent=0 // pred_check_branch
    %19 = sbr.rel (0) target = $region21
  $region20: #{net_forward.5} parent=0 // pred_region
    _
  $region21: #{net_forward.5} parent=0 // pred_fallthru
    _
  %v21 = vld [vmem:[%s0] sm:$0xff]
  %v22 = vld [vmem:[%s0 + $0x8] sm:$0xff]
  %v23 = vld [vmem:[%s0 + $0x10] sm:$0xff]
  %v24 = vld [vmem:[%s0 + $0x18] sm:$0xf]
  %v25 = vld [vmem:[%s0 + $0x1c] sm:$0xff]
  %v26 = vld [vmem:[%s0 + $0x24] sm:$0xff]
  %v27 = vld [vmem:[%s0 + $0x2c] sm:$0xff]
  %v28 = vld [vmem:[%s0 + $0x34] sm:$0xf]
  %v29 = vld [vmem:[%s1] sm:$0xff]
  %v30 = vld [vmem:[%s1 + $0x8] sm:$0xff]
  %v31 = vld [vmem:[%s1 + $0x10] sm:$0xff]
  %v32 = vld [vmem:[%s1 + $0x18] sm:$0xff]
  %v33 = vld [vmem:[%s1 + $0x20] sm:$0xff]
  %v34 = vld [vmem:[%s1 + $0x28] sm:$0xff]
  %v35 = vld [vmem:[%s1 + $0x30] sm:$0xff]
  %v36 = vld [vmem:[%s1 + $0x38] sm:$0xff]
  %v37 = vld [vmem:[%s1 + $0x40] sm:$0xff]
  %v38 = vld [vmem:[%s1 + $0x48] sm:$0xff]
  %v39 = vld [vmem:[%s1 + $0x50] sm:$0xff]
  %v40 = vld [vmem:[%s1 + $0x58] sm:$0xff]
  %v41 = vld [vmem:[%s1 + $0x60] sm:$0xff]
  %v42 = vld [vmem:[%s1 + $0x68] sm:$0xff]
  %v43 = vld [vmem:[%s1 + $0x70] sm:$0xff]
  %v44 = vld [vmem:[%s1 + $0x78] sm:$0xff]
  %v45 = vld [vmem:[%s1 + $0x80] sm:$0xff]
  %v46 = vld [vmem:[%s1 + $0x88] sm:$0xff]
  %v47 = vld [vmem:[%s1 + $0x90] sm:$0xff]
  %v48 = vld [vmem:[%s1 + $0x98] sm:$0xff]
  %v49 = vld [vmem:[%s1 + $0xa0] sm:$0xff]
  %v50 = vld [vmem:[%s1 + $0xa8] sm:$0xff]
  %v51 = vld [vmem:[%s1 + $0xb0] sm:$0xff]
  %v52 = vld [vmem:[%s1 + $0xb8] sm:$0xff]
  %v53 = vld [vmem:[%s1 + $0xc0] sm:$0xff]
  %v54 = vld [vmem:[%s1 + $0xc8] sm:$0xff]
  %v55 = vld [vmem:[%s1 + $0xd0] sm:$0xff]
  %v56 = vld [vmem:[%s1 + $0xd8] sm:$0xff]
  %v57 = vld [vmem:[%s1 + $0xe0] sm:$0xff]
  %v58 = vld [vmem:[%s1 + $0xe8] sm:$0xff]
  %v59 = vld [vmem:[%s1 + $0xf0] sm:$0xff]
  %v60 = vld [vmem:[%s1 + $0xf8] sm:$0xff]
  %v61 = vld [vmem:[%s1 + $0x100] sm:$0xff]
  %v62 = vld [vmem:[%s1 + $0x108] sm:$0xff]
  %v63 = vld [vmem:[%s1 + $0x110] sm:$0xff]
  %v64 = vld [vmem:[%s1 + $0x118] sm:$0xff]
  %v65 = vld [vmem:[%s1 + $0x120] sm:$0xff]
  %v66 = vld [vmem:[%s1 + $0x128] sm:$0xff]
  %v67 = vld [vmem:[%s1 + $0x130] sm:$0xff]
  %v68 = vld [vmem:[%s1 + $0x138] sm:$0xff]
  %v69 = vld [vmem:[%s1 + $0x140] sm:$0xff]
  %v70 = vld [vmem:[%s1 + $0x148] sm:$0xff]
  %v71 = vld [vmem:[%s1 + $0x150] sm:$0xff]
  %v72 = vld [vmem:[%s1 + $0x158] sm:$0xff]
  %v73 = vld [vmem:[%s1 + $0x160] sm:$0xff]
  %v74 = vld [vmem:[%s1 + $0x168] sm:$0xff]
  %v75 = vld [vmem:[%s1 + $0x170] sm:$0xff]
  %v76 = vld [vmem:[%s1 + $0x178] sm:$0xff]
  %v77 = vld [vmem:[%s1 + $0x180] sm:$0xff]
  %v78 = vld [vmem:[%s1 + $0x188] sm:$0xff]
  %v79 = vld [vmem:[%s1 + $0x190] sm:$0xff]
  %v80 = vld [vmem:[%s1 + $0x198] sm:$0xff]
  %v81 = vld [vmem:[%s1 + $0x1a0] sm:$0xff]
  %v82 = vld [vmem:[%s1 + $0x1a8] sm:$0xff]
  %v83 = vld [vmem:[%s1 + $0x1b0] sm:$0xff]
  %v84 = vld [vmem:[%s1 + $0x1b8] sm:$0xff]
  %v85 = vld [vmem:[%s1 + $0x1c0] sm:$0xff]
  %v86 = vld [vmem:[%s1 + $0x1c8] sm:$0xff]
  %v87 = vld [vmem:[%s1 + $0x1d0] sm:$0xff]
  %v88 = vld [vmem:[%s1 + $0x1d8] sm:$0xff]
  %v89 = vld [vmem:[%s1 + $0x1e0] sm:$0xff]
  %v90 = vld [vmem:[%s1 + $0x1e8] sm:$0xff]
  %v91 = vld [vmem:[%s1 + $0x1f0] sm:$0xff]
  %v92 = vld [vmem:[%s1 + $0x1f8] sm:$0xff]
  %v93 = vld [vmem:[%s1 + $0x200] sm:$0xff]
  %v94 = vld [vmem:[%s1 + $0x208] sm:$0xff]
  %v95 = vld [vmem:[%s1 + $0x210] sm:$0xff]
  %v96 = vld [vmem:[%s1 + $0x218] sm:$0xff]
  %v97 = vld [vmem:[%s1 + $0x220] sm:$0xff]
  %v98 = vld [vmem:[%s1 + $0x228] sm:$0xff]
  %v99 = vld [vmem:[%s1 + $0x230] sm:$0xff]
  %v100 = vld [vmem:[%s1 + $0x238] sm:$0xff]
  %v101 = vld [vmem:[%s1 + $0x240] sm:$0xff]
  %v102 = vld [vmem:[%s1 + $0x248] sm:$0xff]
  %v103 = vld [vmem:[%s1 + $0x250] sm:$0xff]
  %v104 = vld [vmem:[%s1 + $0x258] sm:$0xff]
  %v105 = vld [vmem:[%s1 + $0x260] sm:$0xff]
  %v106 = vld [vmem:[%s1 + $0x268] sm:$0xff]
  %v107 = vld [vmem:[%s1 + $0x270] sm:$0xff]
  %v108 = vld [vmem:[%s1 + $0x278] sm:$0xff]
  %v109 = vld [vmem:[%s1 + $0x280] sm:$0xff]
  %v110 = vld [vmem:[%s1 + $0x288] sm:$0xff]
  %v111 = vld [vmem:[%s1 + $0x290] sm:$0xff]
  %v112 = vld [vmem:[%s1 + $0x298] sm:$0xff]
  %v113 = vld [vmem:[%s1 + $0x2a0] sm:$0xff]
  %v114 = vld [vmem:[%s1 + $0x2a8] sm:$0xff]
  %v115 = vld [vmem:[%s1 + $0x2b0] sm:$0xff]
  %v116 = vld [vmem:[%s1 + $0x2b8] sm:$0xff]
  %v117 = vld [vmem:[%s1 + $0x2c0] sm:$0xff]
  %v118 = vld [vmem:[%s1 + $0x2c8] sm:$0xff]
  %v119 = vld [vmem:[%s1 + $0x2d0] sm:$0xff]
  %v120 = vld [vmem:[%s1 + $0x2d8] sm:$0xff]
  %v121 = vld [vmem:[%s1 + $0x2e0] sm:$0xff]
  %v122 = vld [vmem:[%s1 + $0x2e8] sm:$0xff]
  %v123 = vld [vmem:[%s1 + $0x2f0] sm:$0xff]
  %v124 = vld [vmem:[%s1 + $0x2f8] sm:$0xff]
  %v125 = vld [vmem:[%s1 + $0x300] sm:$0xff]
  %v126 = vld [vmem:[%s1 + $0x308] sm:$0xff]
  %v127 = vld [vmem:[%s1 + $0x310] sm:$0xff]
  %v128 = vld [vmem:[%s1 + $0x318] sm:$0xff]
  %v129 = vld [vmem:[%s1 + $0x320] sm:$0xff]
  %v130 = vld [vmem:[%s1 + $0x328] sm:$0xff]
  %v131 = vld [vmem:[%s1 + $0x330] sm:$0xff]
  %v132 = vld [vmem:[%s1 + $0x338] sm:$0xff]
  %v133 = vld [vmem:[%s1 + $0x340] sm:$0xff]
  %v134 = vld [vmem:[%s1 + $0x348] sm:$0xff]
  %v135 = vld [vmem:[%s1 + $0x350] sm:$0xff]
  %v136 = vld [vmem:[%s1 + $0x358] sm:$0xff]
  %v137 = vld [vmem:[%s1 + $0x360] sm:$0xff]
  %v138 = vld [vmem:[%s1 + $0x368] sm:$0xff]
  %v139 = vld [vmem:[%s1 + $0x370] sm:$0xff]
  %v140 = vld [vmem:[%s1 + $0x378] sm:$0xff]
  %v141 = vld [vmem:[%s1 + $0x380] sm:$0xff]
  %v142 = vld [vmem:[%s1 + $0x388] sm:$0xff]
  %v143 = vld [vmem:[%s1 + $0x390] sm:$0xff]
  %v144 = vld [vmem:[%s1 + $0x398] sm:$0xff]
  %v145 = vld [vmem:[%s1 + $0x3a0] sm:$0xff]
  %v146 = vld [vmem:[%s1 + $0x3a8] sm:$0xff]
  %v147 = vld [vmem:[%s1 + $0x3b0] sm:$0xff]
  %v148 = vld [vmem:[%s1 + $0x3b8] sm:$0xff]
  %v149 = vld [vmem:[%s1 + $0x3c0] sm:$0xff]
  %v150 = vld [vmem:[%s1 + $0x3c8] sm:$0xff]
  %v151 = vld [vmem:[%s1 + $0x3d0] sm:$0xff]
  %v152 = vld [vmem:[%s1 + $0x3d8] sm:$0xff]
  %v153 = vld [vmem:[%s1 + $0x3e0] sm:$0xff]
  %v154 = vld [vmem:[%s1 + $0x3e8] sm:$0xff]
  %v155 = vld [vmem:[%s1 + $0x3f0] sm:$0xff]
  %v156 = vld [vmem:[%s1 + $0x3f8] sm:$0xff]
  %v157 = vld [vmem:[%s1 + $0x400] sm:$0xff]
  %v158 = vld [vmem:[%s1 + $0x408] sm:$0xff]
  %v159 = vld [vmem:[%s1 + $0x410] sm:$0xff]
  %v160 = vld [vmem:[%s1 + $0x418] sm:$0xff]
  %v161 = vld [vmem:[%s1 + $0x420] sm:$0xff]
  %v162 = vld [vmem:[%s1 + $0x428] sm:$0xff]
  %v163 = vld [vmem:[%s1 + $0x430] sm:$0xff]
  %v164 = vld [vmem:[%s1 + $0x438] sm:$0xff]
  %v165 = vld [vmem:[%s1 + $0x440] sm:$0xff]
  %v166 = vld [vmem:[%s1 + $0x448] sm:$0xff]
  %v167 = vld [vmem:[%s1 + $0x450] sm:$0xff]
  %v168 = vld [vmem:[%s1 + $0x458] sm:$0xff]
  %v169 = vld [vmem:[%s1 + $0x460] sm:$0xff]
  %v170 = vld [vmem:[%s1 + $0x468] sm:$0xff]
  %v171 = vld [vmem:[%s1 + $0x470] sm:$0xff]
  %v172 = vld [vmem:[%s1 + $0x478] sm:$0xff]
  %v173 = vld [vmem:[%s1 + $0x480] sm:$0xff]
  %v174 = vld [vmem:[%s1 + $0x488] sm:$0xff]
  %v175 = vld [vmem:[%s1 + $0x490] sm:$0xff]
  %v176 = vld [vmem:[%s1 + $0x498] sm:$0xff]
  %v177 = vld [vmem:[%s1 + $0x4a0] sm:$0xff]
  %v178 = vld [vmem:[%s1 + $0x4a8] sm:$0xff]
  %v179 = vld [vmem:[%s1 + $0x4b0] sm:$0xff]
  %v180 = vld [vmem:[%s1 + $0x4b8] sm:$0xff]
  %v181 = vld [vmem:[%s1 + $0x4c0] sm:$0xff]
  %v182 = vld [vmem:[%s1 + $0x4c8] sm:$0xff]
  %v183 = vld [vmem:[%s1 + $0x4d0] sm:$0xff]
  %v184 = vld [vmem:[%s1 + $0x4d8] sm:$0xff]
  %v185 = vld [vmem:[%s1 + $0x4e0] sm:$0xff]
  %v186 = vld [vmem:[%s1 + $0x4e8] sm:$0xff]
  %v187 = vld [vmem:[%s1 + $0x4f0] sm:$0xff]
  %v188 = vld [vmem:[%s1 + $0x4f8] sm:$0xff]
  %v189 = vld [vmem:[%s1 + $0x500] sm:$0xff]
  %v190 = vld [vmem:[%s1 + $0x508] sm:$0xff]
  %v191 = vld [vmem:[%s1 + $0x510] sm:$0xff]
  %v192 = vld [vmem:[%s1 + $0x518] sm:$0xff]
  %v193 = vld [vmem:[%s1 + $0x520] sm:$0xff]
  %v194 = vld [vmem:[%s1 + $0x528] sm:$0xff]
  %v195 = vld [vmem:[%s1 + $0x530] sm:$0xff]
  %v196 = vld [vmem:[%s1 + $0x538] sm:$0xff]
  %v197 = vld [vmem:[%s1 + $0x540] sm:$0xff]
  %v198 = vld [vmem:[%s1 + $0x548] sm:$0xff]
  %v199 = vld [vmem:[%s1 + $0x550] sm:$0xff]
  %v200 = vld [vmem:[%s1 + $0x558] sm:$0xff]
  %v201 = vld [vmem:[%s1 + $0x560] sm:$0xff]
  %v202 = vld [vmem:[%s1 + $0x568] sm:$0xff]
  %v203 = vld [vmem:[%s1 + $0x570] sm:$0xff]
  %v204 = vld [vmem:[%s1 + $0x578] sm:$0xff]
  %v205 = vld [vmem:[%s1 + $0x580] sm:$0xff]
  %v206 = vld [vmem:[%s1 + $0x588] sm:$0xff]
  %v207 = vld [vmem:[%s1 + $0x590] sm:$0xff]
  %v208 = vld [vmem:[%s1 + $0x598] sm:$0xff]
  %v209 = vld [vmem:[%s1 + $0x5a0] sm:$0xff]
  %v210 = vld [vmem:[%s1 + $0x5a8] sm:$0xff]
  %v211 = vld [vmem:[%s1 + $0x5b0] sm:$0xff]
  %v212 = vld [vmem:[%s1 + $0x5b8] sm:$0xff]
  %v213 = vld [vmem:[%s1 + $0x5c0] sm:$0xff]
  %v214 = vld [vmem:[%s1 + $0x5c8] sm:$0xff]
  %v215 = vld [vmem:[%s1 + $0x5d0] sm:$0xff]
  %v216 = vld [vmem:[%s1 + $0x5d8] sm:$0xff]
  %v217 = vld [vmem:[%s1 + $0x5e0] sm:$0xff]
  %v218 = vld [vmem:[%s1 + $0x5e8] sm:$0xff]
  %v219 = vld [vmem:[%s1 + $0x5f0] sm:$0xff]
  %v220 = vld [vmem:[%s1 + $0x5f8] sm:$0xff]
  %v221 = vld [vmem:[%s1 + $0x600] sm:$0xff]
  %v222 = vld [vmem:[%s1 + $0x608] sm:$0xff]
  %v223 = vld [vmem:[%s1 + $0x610] sm:$0xff]
  %v224 = vld [vmem:[%s1 + $0x618] sm:$0xff]
  %v225 = vld [vmem:[%s1 + $0x620] sm:$0xff]
  %v226 = vld [vmem:[%s1 + $0x628] sm:$0xff]
  %v227 = vld [vmem:[%s1 + $0x630] sm:$0xff]
  %v228 = vld [vmem:[%s1 + $0x638] sm:$0xff]
  %v229 = vld [vmem:[%s2] sm:$0xf]
  %v231 = vperm.slane %v229, 0
  %v232 = vperm.slane %v229, 1
  %v233 = vperm.slane %v229, 2
  %v234 = vperm.slane %v229, 3
  %v247 = vunpack.c.l.b16 %v21
  %v248 = vunpack.c.h.b16 %v21
  %v249 = vunpack.c.l.b16 %v22
  %v250 = vunpack.c.h.b16 %v22
  %v251 = vunpack.c.l.b16 %v23
  %v252 = vunpack.c.h.b16 %v23
  %v253 = vunpack.c.l.b16 %v24
  %v254 = vunpack.c.l.b16 %v25
  %v255 = vunpack.c.h.b16 %v25
  %v256 = vunpack.c.l.b16 %v26
  %v257 = vunpack.c.h.b16 %v26
  %v258 = vunpack.c.l.b16 %v27
  %v259 = vunpack.c.h.b16 %v27
  %v260 = vunpack.c.l.b16 %v28
  %v261 = vpack.c.b16 %v254, %v247
  %v262 = vpack.c.b16 %v255, %v248
  %v263 = vpack.c.b16 %v256, %v249
  %v264 = vpack.c.b16 %v257, %v250
  %v265 = vpack.c.b16 %v258, %v251
  %v266 = vpack.c.b16 %v259, %v252
  %v267 = vpack.c.b16 %v260, %v253
  %v474 = vunpack.c.l.b16 %v29
  %v475 = vunpack.c.h.b16 %v29
  %v476 = vunpack.c.l.b16 %v30
  %v477 = vunpack.c.h.b16 %v30
  %v478 = vunpack.c.l.b16 %v31
  %v479 = vunpack.c.h.b16 %v31
  %v480 = vunpack.c.l.b16 %v32
  %v481 = vunpack.c.h.b16 %v32
  %v482 = vunpack.c.l.b16 %v33
  %v483 = vunpack.c.h.b16 %v33
  %v484 = vunpack.c.l.b16 %v34
  %v485 = vunpack.c.h.b16 %v34
  %v486 = vunpack.c.l.b16 %v35
  %v487 = vunpack.c.h.b16 %v35
  %v488 = vunpack.c.l.b16 %v36
  %v489 = vunpack.c.h.b16 %v36
  %v490 = vunpack.c.l.b16 %v37
  %v491 = vunpack.c.h.b16 %v37
  %v492 = vunpack.c.l.b16 %v38
  %v493 = vunpack.c.h.b16 %v38
  %v494 = vunpack.c.l.b16 %v39
  %v495 = vunpack.c.h.b16 %v39
  %v496 = vunpack.c.l.b16 %v40
  %v497 = vunpack.c.h.b16 %v40
  %v498 = vunpack.c.l.b16 %v41
  %v499 = vunpack.c.h.b16 %v41
  %v500 = vunpack.c.l.b16 %v42
  %v501 = vunpack.c.h.b16 %v42
  %v502 = vunpack.c.l.b16 %v43
  %v503 = vunpack.c.h.b16 %v43
  %v504 = vunpack.c.l.b16 %v44
  %v505 = vunpack.c.h.b16 %v44
  %v506 = vunpack.c.l.b16 %v45
  %v507 = vunpack.c.h.b16 %v45
  %v508 = vunpack.c.l.b16 %v46
  %v509 = vunpack.c.h.b16 %v46
  %v510 = vunpack.c.l.b16 %v47
  %v511 = vunpack.c.h.b16 %v47
  %v512 = vunpack.c.l.b16 %v48
  %v513 = vunpack.c.h.b16 %v48
  %v514 = vunpack.c.l.b16 %v49
  %v515 = vunpack.c.h.b16 %v49
  %v516 = vunpack.c.l.b16 %v50
  %v517 = vunpack.c.h.b16 %v50
  %v518 = vunpack.c.l.b16 %v51
  %v519 = vunpack.c.h.b16 %v51
  %v520 = vunpack.c.l.b16 %v52
  %v521 = vunpack.c.h.b16 %v52
  %v522 = vunpack.c.l.b16 %v53
  %v523 = vunpack.c.h.b16 %v53
  %v524 = vunpack.c.l.b16 %v54
  %v525 = vunpack.c.h.b16 %v54
  %v526 = vunpack.c.l.b16 %v55
  %v527 = vunpack.c.h.b16 %v55
  %v528 = vunpack.c.l.b16 %v56
  %v529 = vunpack.c.h.b16 %v56
  %v530 = vunpack.c.l.b16 %v57
  %v531 = vunpack.c.h.b16 %v57
  %v532 = vunpack.c.l.b16 %v58
  %v533 = vunpack.c.h.b16 %v58
  %v534 = vunpack.c.l.b16 %v59
  %v535 = vunpack.c.h.b16 %v59
  %v536 = vunpack.c.l.b16 %v60
  %v537 = vunpack.c.h.b16 %v60
  %v538 = vunpack.c.l.b16 %v61
  %v539 = vunpack.c.h.b16 %v61
  %v540 = vunpack.c.l.b16 %v62
  %v541 = vunpack.c.h.b16 %v62
  %v542 = vunpack.c.l.b16 %v63
  %v543 = vunpack.c.h.b16 %v63
  %v544 = vunpack.c.l.b16 %v64
  %v545 = vunpack.c.h.b16 %v64
  %v546 = vunpack.c.l.b16 %v65
  %v547 = vunpack.c.h.b16 %v65
  %v548 = vunpack.c.l.b16 %v66
  %v549 = vunpack.c.h.b16 %v66
  %v550 = vunpack.c.l.b16 %v67
  %v551 = vunpack.c.h.b16 %v67
  %v552 = vunpack.c.l.b16 %v68
  %v553 = vunpack.c.h.b16 %v68
  %v554 = vunpack.c.l.b16 %v69
  %v555 = vunpack.c.h.b16 %v69
  %v556 = vunpack.c.l.b16 %v70
  %v557 = vunpack.c.h.b16 %v70
  %v558 = vunpack.c.l.b16 %v71
  %v559 = vunpack.c.h.b16 %v71
  %v560 = vunpack.c.l.b16 %v72
  %v561 = vunpack.c.h.b16 %v72
  %v562 = vunpack.c.l.b16 %v73
  %v563 = vunpack.c.h.b16 %v73
  %v564 = vunpack.c.l.b16 %v74
  %v565 = vunpack.c.h.b16 %v74
  %v566 = vunpack.c.l.b16 %v75
  %v567 = vunpack.c.h.b16 %v75
  %v568 = vunpack.c.l.b16 %v76
  %v569 = vunpack.c.h.b16 %v76
  %v570 = vunpack.c.l.b16 %v77
  %v571 = vunpack.c.h.b16 %v77
  %v572 = vunpack.c.l.b16 %v78
  %v573 = vunpack.c.h.b16 %v78
  %v574 = vunpack.c.l.b16 %v79
  %v575 = vunpack.c.h.b16 %v79
  %v576 = vunpack.c.l.b16 %v80
  %v577 = vunpack.c.h.b16 %v80
  %v578 = vunpack.c.l.b16 %v81
  %v579 = vunpack.c.h.b16 %v81
  %v580 = vunpack.c.l.b16 %v82
  %v581 = vunpack.c.h.b16 %v82
  %v582 = vunpack.c.l.b16 %v83
  %v583 = vunpack.c.h.b16 %v83
  %v584 = vunpack.c.l.b16 %v84
  %v585 = vunpack.c.h.b16 %v84
  %v586 = vunpack.c.l.b16 %v85
  %v587 = vunpack.c.h.b16 %v85
  %v588 = vunpack.c.l.b16 %v86
  %v589 = vunpack.c.h.b16 %v86
  %v590 = vunpack.c.l.b16 %v87
  %v591 = vunpack.c.h.b16 %v87
  %v592 = vunpack.c.l.b16 %v88
  %v593 = vunpack.c.h.b16 %v88
  %v594 = vunpack.c.l.b16 %v89
  %v595 = vunpack.c.h.b16 %v89
  %v596 = vunpack.c.l.b16 %v90
  %v597 = vunpack.c.h.b16 %v90
  %v598 = vunpack.c.l.b16 %v91
  %v599 = vunpack.c.h.b16 %v91
  %v600 = vunpack.c.l.b16 %v92
  %v601 = vunpack.c.h.b16 %v92
  %v602 = vunpack.c.l.b16 %v93
  %v603 = vunpack.c.h.b16 %v93
  %v604 = vunpack.c.l.b16 %v94
  %v605 = vunpack.c.h.b16 %v94
  %v606 = vunpack.c.l.b16 %v95
  %v607 = vunpack.c.h.b16 %v95
  %v608 = vunpack.c.l.b16 %v96
  %v609 = vunpack.c.h.b16 %v96
  %v610 = vunpack.c.l.b16 %v97
  %v611 = vunpack.c.h.b16 %v97
  %v612 = vunpack.c.l.b16 %v98
  %v613 = vunpack.c.h.b16 %v98
  %v614 = vunpack.c.l.b16 %v99
  %v615 = vunpack.c.h.b16 %v99
  %v616 = vunpack.c.l.b16 %v100
  %v617 = vunpack.c.h.b16 %v100
  %v618 = vunpack.c.l.b16 %v101
  %v619 = vunpack.c.h.b16 %v101
  %v620 = vunpack.c.l.b16 %v102
  %v621 = vunpack.c.h.b16 %v102
  %v622 = vunpack.c.l.b16 %v103
  %v623 = vunpack.c.h.b16 %v103
  %v624 = vunpack.c.l.b16 %v104
  %v625 = vunpack.c.h.b16 %v104
  %v626 = vunpack.c.l.b16 %v105
  %v627 = vunpack.c.h.b16 %v105
  %v628 = vunpack.c.l.b16 %v106
  %v629 = vunpack.c.h.b16 %v106
  %v630 = vunpack.c.l.b16 %v107
  %v631 = vunpack.c.h.b16 %v107
  %v632 = vunpack.c.l.b16 %v108
  %v633 = vunpack.c.h.b16 %v108
  %v634 = vunpack.c.l.b16 %v109
  %v635 = vunpack.c.h.b16 %v109
  %v636 = vunpack.c.l.b16 %v110
  %v637 = vunpack.c.h.b16 %v110
  %v638 = vunpack.c.l.b16 %v111
  %v639 = vunpack.c.h.b16 %v111
  %v640 = vunpack.c.l.b16 %v112
  %v641 = vunpack.c.h.b16 %v112
  %v642 = vunpack.c.l.b16 %v113
  %v643 = vunpack.c.h.b16 %v113
  %v644 = vunpack.c.l.b16 %v114
  %v645 = vunpack.c.h.b16 %v114
  %v646 = vunpack.c.l.b16 %v115
  %v647 = vunpack.c.h.b16 %v115
  %v648 = vunpack.c.l.b16 %v116
  %v649 = vunpack.c.h.b16 %v116
  %v650 = vunpack.c.l.b16 %v117
  %v651 = vunpack.c.h.b16 %v117
  %v652 = vunpack.c.l.b16 %v118
  %v653 = vunpack.c.h.b16 %v118
  %v654 = vunpack.c.l.b16 %v119
  %v655 = vunpack.c.h.b16 %v119
  %v656 = vunpack.c.l.b16 %v120
  %v657 = vunpack.c.h.b16 %v120
  %v658 = vunpack.c.l.b16 %v121
  %v659 = vunpack.c.h.b16 %v121
  %v660 = vunpack.c.l.b16 %v122
  %v661 = vunpack.c.h.b16 %v122
  %v662 = vunpack.c.l.b16 %v123
  %v663 = vunpack.c.h.b16 %v123
  %v664 = vunpack.c.l.b16 %v124
  %v665 = vunpack.c.h.b16 %v124
  %v666 = vunpack.c.l.b16 %v125
  %v667 = vunpack.c.h.b16 %v125
  %v668 = vunpack.c.l.b16 %v126
  %v669 = vunpack.c.h.b16 %v126
  %v670 = vunpack.c.l.b16 %v127
  %v671 = vunpack.c.h.b16 %v127
  %v672 = vunpack.c.l.b16 %v128
  %v673 = vunpack.c.h.b16 %v128
  %v674 = vunpack.c.l.b16 %v129
  %v675 = vunpack.c.h.b16 %v129
  %v676 = vunpack.c.l.b16 %v130
  %v677 = vunpack.c.h.b16 %v130
  %v678 = vunpack.c.l.b16 %v131
  %v679 = vunpack.c.h.b16 %v131
  %v680 = vunpack.c.l.b16 %v132
  %v681 = vunpack.c.h.b16 %v132
  %v682 = vunpack.c.l.b16 %v133
  %v683 = vunpack.c.h.b16 %v133
  %v684 = vunpack.c.l.b16 %v134
  %v685 = vunpack.c.h.b16 %v134
  %v686 = vunpack.c.l.b16 %v135
  %v687 = vunpack.c.h.b16 %v135
  %v688 = vunpack.c.l.b16 %v136
  %v689 = vunpack.c.h.b16 %v136
  %v690 = vunpack.c.l.b16 %v137
  %v691 = vunpack.c.h.b16 %v137
  %v692 = vunpack.c.l.b16 %v138
  %v693 = vunpack.c.h.b16 %v138
  %v694 = vunpack.c.l.b16 %v139
  %v695 = vunpack.c.h.b16 %v139
  %v696 = vunpack.c.l.b16 %v140
  %v697 = vunpack.c.h.b16 %v140
  %v698 = vunpack.c.l.b16 %v141
  %v699 = vunpack.c.h.b16 %v141
  %v700 = vunpack.c.l.b16 %v142
  %v701 = vunpack.c.h.b16 %v142
  %v702 = vunpack.c.l.b16 %v143
  %v703 = vunpack.c.h.b16 %v143
  %v704 = vunpack.c.l.b16 %v144
  %v705 = vunpack.c.h.b16 %v144
  %v706 = vunpack.c.l.b16 %v145
  %v707 = vunpack.c.h.b16 %v145
  %v708 = vunpack.c.l.b16 %v146
  %v709 = vunpack.c.h.b16 %v146
  %v710 = vunpack.c.l.b16 %v147
  %v711 = vunpack.c.h.b16 %v147
  %v712 = vunpack.c.l.b16 %v148
  %v713 = vunpack.c.h.b16 %v148
  %v714 = vunpack.c.l.b16 %v149
  %v715 = vunpack.c.h.b16 %v149
  %v716 = vunpack.c.l.b16 %v150
  %v717 = vunpack.c.h.b16 %v150
  %v718 = vunpack.c.l.b16 %v151
  %v719 = vunpack.c.h.b16 %v151
  %v720 = vunpack.c.l.b16 %v152
  %v721 = vunpack.c.h.b16 %v152
  %v722 = vunpack.c.l.b16 %v153
  %v723 = vunpack.c.h.b16 %v153
  %v724 = vunpack.c.l.b16 %v154
  %v725 = vunpack.c.h.b16 %v154
  %v726 = vunpack.c.l.b16 %v155
  %v727 = vunpack.c.h.b16 %v155
  %v728 = vunpack.c.l.b16 %v156
  %v729 = vunpack.c.h.b16 %v156
  %v730 = vunpack.c.l.b16 %v157
  %v731 = vunpack.c.h.b16 %v157
  %v732 = vunpack.c.l.b16 %v158
  %v733 = vunpack.c.h.b16 %v158
  %v734 = vunpack.c.l.b16 %v159
  %v735 = vunpack.c.h.b16 %v159
  %v736 = vunpack.c.l.b16 %v160
  %v737 = vunpack.c.h.b16 %v160
  %v738 = vunpack.c.l.b16 %v161
  %v739 = vunpack.c.h.b16 %v161
  %v740 = vunpack.c.l.b16 %v162
  %v741 = vunpack.c.h.b16 %v162
  %v742 = vunpack.c.l.b16 %v163
  %v743 = vunpack.c.h.b16 %v163
  %v744 = vunpack.c.l.b16 %v164
  %v745 = vunpack.c.h.b16 %v164
  %v746 = vunpack.c.l.b16 %v165
  %v747 = vunpack.c.h.b16 %v165
  %v748 = vunpack.c.l.b16 %v166
  %v749 = vunpack.c.h.b16 %v166
  %v750 = vunpack.c.l.b16 %v167
  %v751 = vunpack.c.h.b16 %v167
  %v752 = vunpack.c.l.b16 %v168
  %v753 = vunpack.c.h.b16 %v168
  %v754 = vunpack.c.l.b16 %v169
  %v755 = vunpack.c.h.b16 %v169
  %v756 = vunpack.c.l.b16 %v170
  %v757 = vunpack.c.h.b16 %v170
  %v758 = vunpack.c.l.b16 %v171
  %v759 = vunpack.c.h.b16 %v171
  %v760 = vunpack.c.l.b16 %v172
  %v761 = vunpack.c.h.b16 %v172
  %v762 = vunpack.c.l.b16 %v173
  %v763 = vunpack.c.h.b16 %v173
  %v764 = vunpack.c.l.b16 %v174
  %v765 = vunpack.c.h.b16 %v174
  %v766 = vunpack.c.l.b16 %v175
  %v767 = vunpack.c.h.b16 %v175
  %v768 = vunpack.c.l.b16 %v176
  %v769 = vunpack.c.h.b16 %v176
  %v770 = vunpack.c.l.b16 %v177
  %v771 = vunpack.c.h.b16 %v177
  %v772 = vunpack.c.l.b16 %v178
  %v773 = vunpack.c.h.b16 %v178
  %v774 = vunpack.c.l.b16 %v179
  %v775 = vunpack.c.h.b16 %v179
  %v776 = vunpack.c.l.b16 %v180
  %v777 = vunpack.c.h.b16 %v180
  %v778 = vunpack.c.l.b16 %v181
  %v779 = vunpack.c.h.b16 %v181
  %v780 = vunpack.c.l.b16 %v182
  %v781 = vunpack.c.h.b16 %v182
  %v782 = vunpack.c.l.b16 %v183
  %v783 = vunpack.c.h.b16 %v183
  %v784 = vunpack.c.l.b16 %v184
  %v785 = vunpack.c.h.b16 %v184
  %v786 = vunpack.c.l.b16 %v185
  %v787 = vunpack.c.h.b16 %v185
  %v788 = vunpack.c.l.b16 %v186
  %v789 = vunpack.c.h.b16 %v186
  %v790 = vunpack.c.l.b16 %v187
  %v791 = vunpack.c.h.b16 %v187
  %v792 = vunpack.c.l.b16 %v188
  %v793 = vunpack.c.h.b16 %v188
  %v794 = vunpack.c.l.b16 %v189
  %v795 = vunpack.c.h.b16 %v189
  %v796 = vunpack.c.l.b16 %v190
  %v797 = vunpack.c.h.b16 %v190
  %v798 = vunpack.c.l.b16 %v191
  %v799 = vunpack.c.h.b16 %v191
  %v800 = vunpack.c.l.b16 %v192
  %v801 = vunpack.c.h.b16 %v192
  %v802 = vunpack.c.l.b16 %v193
  %v803 = vunpack.c.h.b16 %v193
  %v804 = vunpack.c.l.b16 %v194
  %v805 = vunpack.c.h.b16 %v194
  %v806 = vunpack.c.l.b16 %v195
  %v807 = vunpack.c.h.b16 %v195
  %v808 = vunpack.c.l.b16 %v196
  %v809 = vunpack.c.h.b16 %v196
  %v810 = vunpack.c.l.b16 %v197
  %v811 = vunpack.c.h.b16 %v197
  %v812 = vunpack.c.l.b16 %v198
  %v813 = vunpack.c.h.b16 %v198
  %v814 = vunpack.c.l.b16 %v199
  %v815 = vunpack.c.h.b16 %v199
  %v816 = vunpack.c.l.b16 %v200
  %v817 = vunpack.c.h.b16 %v200
  %v818 = vunpack.c.l.b16 %v201
  %v819 = vunpack.c.h.b16 %v201
  %v820 = vunpack.c.l.b16 %v202
  %v821 = vunpack.c.h.b16 %v202
  %v822 = vunpack.c.l.b16 %v203
  %v823 = vunpack.c.h.b16 %v203
  %v824 = vunpack.c.l.b16 %v204
  %v825 = vunpack.c.h.b16 %v204
  %v826 = vunpack.c.l.b16 %v205
  %v827 = vunpack.c.h.b16 %v205
  %v828 = vunpack.c.l.b16 %v206
  %v829 = vunpack.c.h.b16 %v206
  %v830 = vunpack.c.l.b16 %v207
  %v831 = vunpack.c.h.b16 %v207
  %v832 = vunpack.c.l.b16 %v208
  %v833 = vunpack.c.h.b16 %v208
  %v834 = vunpack.c.l.b16 %v209
  %v835 = vunpack.c.h.b16 %v209
  %v836 = vunpack.c.l.b16 %v210
  %v837 = vunpack.c.h.b16 %v210
  %v838 = vunpack.c.l.b16 %v211
  %v839 = vunpack.c.h.b16 %v211
  %v840 = vunpack.c.l.b16 %v212
  %v841 = vunpack.c.h.b16 %v212
  %v842 = vunpack.c.l.b16 %v213
  %v843 = vunpack.c.h.b16 %v213
  %v844 = vunpack.c.l.b16 %v214
  %v845 = vunpack.c.h.b16 %v214
  %v846 = vunpack.c.l.b16 %v215
  %v847 = vunpack.c.h.b16 %v215
  %v848 = vunpack.c.l.b16 %v216
  %v849 = vunpack.c.h.b16 %v216
  %v850 = vunpack.c.l.b16 %v217
  %v851 = vunpack.c.h.b16 %v217
  %v852 = vunpack.c.l.b16 %v218
  %v853 = vunpack.c.h.b16 %v218
  %v854 = vunpack.c.l.b16 %v219
  %v855 = vunpack.c.h.b16 %v219
  %v856 = vunpack.c.l.b16 %v220
  %v857 = vunpack.c.h.b16 %v220
  %v858 = vunpack.c.l.b16 %v221
  %v859 = vunpack.c.h.b16 %v221
  %v860 = vunpack.c.l.b16 %v222
  %v861 = vunpack.c.h.b16 %v222
  %v862 = vunpack.c.l.b16 %v223
  %v863 = vunpack.c.h.b16 %v223
  %v864 = vunpack.c.l.b16 %v224
  %v865 = vunpack.c.h.b16 %v224
  %v866 = vunpack.c.l.b16 %v225
  %v867 = vunpack.c.h.b16 %v225
  %v868 = vunpack.c.l.b16 %v226
  %v869 = vunpack.c.h.b16 %v226
  %v870 = vunpack.c.l.b16 %v227
  %v871 = vunpack.c.h.b16 %v227
  %v872 = vunpack.c.l.b16 %v228
  %v873 = vunpack.c.h.b16 %v228
  %v874 = vpack.c.b16 %v478, %v474
  %v875 = vpack.c.b16 %v479, %v475
  %v876 = vpack.c.b16 %v480, %v476
  %v877 = vpack.c.b16 %v481, %v477
  %v878 = vpack.c.b16 %v486, %v482
  %v879 = vpack.c.b16 %v487, %v483
  %v880 = vpack.c.b16 %v488, %v484
  %v881 = vpack.c.b16 %v489, %v485
  %v882 = vpack.c.b16 %v494, %v490
  %v883 = vpack.c.b16 %v495, %v491
  %v884 = vpack.c.b16 %v496, %v492
  %v885 = vpack.c.b16 %v497, %v493
  %v886 = vpack.c.b16 %v502, %v498
  %v887 = vpack.c.b16 %v503, %v499
  %v888 = vpack.c.b16 %v504, %v500
  %v889 = vpack.c.b16 %v505, %v501
  %v890 = vpack.c.b16 %v510, %v506
  %v891 = vpack.c.b16 %v511, %v507
  %v892 = vpack.c.b16 %v512, %v508
  %v893 = vpack.c.b16 %v513, %v509
  %v894 = vpack.c.b16 %v518, %v514
  %v895 = vpack.c.b16 %v519, %v515
  %v896 = vpack.c.b16 %v520, %v516
  %v897 = vpack.c.b16 %v521, %v517
  %v898 = vpack.c.b16 %v526, %v522
  %v899 = vpack.c.b16 %v527, %v523
  %v900 = vpack.c.b16 %v528, %v524
  %v901 = vpack.c.b16 %v529, %v525
  %v902 = vpack.c.b16 %v534, %v530
  %v903 = vpack.c.b16 %v535, %v531
  %v904 = vpack.c.b16 %v536, %v532
  %v905 = vpack.c.b16 %v537, %v533
  %v906 = vpack.c.b16 %v542, %v538
  %v907 = vpack.c.b16 %v543, %v539
  %v908 = vpack.c.b16 %v544, %v540
  %v909 = vpack.c.b16 %v545, %v541
  %v910 = vpack.c.b16 %v550, %v546
  %v911 = vpack.c.b16 %v551, %v547
  %v912 = vpack.c.b16 %v552, %v548
  %v913 = vpack.c.b16 %v553, %v549
  %v914 = vpack.c.b16 %v558, %v554
  %v915 = vpack.c.b16 %v559, %v555
  %v916 = vpack.c.b16 %v560, %v556
  %v917 = vpack.c.b16 %v561, %v557
  %v918 = vpack.c.b16 %v566, %v562
  %v919 = vpack.c.b16 %v567, %v563
  %v920 = vpack.c.b16 %v568, %v564
  %v921 = vpack.c.b16 %v569, %v565
  %v922 = vpack.c.b16 %v574, %v570
  %v923 = vpack.c.b16 %v575, %v571
  %v924 = vpack.c.b16 %v576, %v572
  %v925 = vpack.c.b16 %v577, %v573
  %v926 = vpack.c.b16 %v582, %v578
  %v927 = vpack.c.b16 %v583, %v579
  %v928 = vpack.c.b16 %v584, %v580
  %v929 = vpack.c.b16 %v585, %v581
  %v930 = vpack.c.b16 %v590, %v586
  %v931 = vpack.c.b16 %v591, %v587
  %v932 = vpack.c.b16 %v592, %v588
  %v933 = vpack.c.b16 %v593, %v589
  %v934 = vpack.c.b16 %v598, %v594
  %v935 = vpack.c.b16 %v599, %v595
  %v936 = vpack.c.b16 %v600, %v596
  %v937 = vpack.c.b16 %v601, %v597
  %v938 = vpack.c.b16 %v606, %v602
  %v939 = vpack.c.b16 %v607, %v603
  %v940 = vpack.c.b16 %v608, %v604
  %v941 = vpack.c.b16 %v609, %v605
  %v942 = vpack.c.b16 %v614, %v610
  %v943 = vpack.c.b16 %v615, %v611
  %v944 = vpack.c.b16 %v616, %v612
  %v945 = vpack.c.b16 %v617, %v613
  %v946 = vpack.c.b16 %v622, %v618
  %v947 = vpack.c.b16 %v623, %v619
  %v948 = vpack.c.b16 %v624, %v620
  %v949 = vpack.c.b16 %v625, %v621
  %v950 = vpack.c.b16 %v630, %v626
  %v951 = vpack.c.b16 %v631, %v627
  %v952 = vpack.c.b16 %v632, %v628
  %v953 = vpack.c.b16 %v633, %v629
  %v954 = vpack.c.b16 %v638, %v634
  %v955 = vpack.c.b16 %v639, %v635
  %v956 = vpack.c.b16 %v640, %v636
  %v957 = vpack.c.b16 %v641, %v637
  %v958 = vpack.c.b16 %v646, %v642
  %v959 = vpack.c.b16 %v647, %v643
  %v960 = vpack.c.b16 %v648, %v644
  %v961 = vpack.c.b16 %v649, %v645
  %v962 = vpack.c.b16 %v654, %v650
  %v963 = vpack.c.b16 %v655, %v651
  %v964 = vpack.c.b16 %v656, %v652
  %v965 = vpack.c.b16 %v657, %v653
  %v966 = vpack.c.b16 %v662, %v658
  %v967 = vpack.c.b16 %v663, %v659
  %v968 = vpack.c.b16 %v664, %v660
  %v969 = vpack.c.b16 %v665, %v661
  %v970 = vpack.c.b16 %v670, %v666
  %v971 = vpack.c.b16 %v671, %v667
  %v972 = vpack.c.b16 %v672, %v668
  %v973 = vpack.c.b16 %v673, %v669
  %v974 = vpack.c.b16 %v678, %v674
  %v975 = vpack.c.b16 %v679, %v675
  %v976 = vpack.c.b16 %v680, %v676
  %v977 = vpack.c.b16 %v681, %v677
  %v978 = vpack.c.b16 %v686, %v682
  %v979 = vpack.c.b16 %v687, %v683
  %v980 = vpack.c.b16 %v688, %v684
  %v981 = vpack.c.b16 %v689, %v685
  %v982 = vpack.c.b16 %v694, %v690
  %v983 = vpack.c.b16 %v695, %v691
  %v984 = vpack.c.b16 %v696, %v692
  %v985 = vpack.c.b16 %v697, %v693
  %v986 = vpack.c.b16 %v702, %v698
  %v987 = vpack.c.b16 %v703, %v699
  %v988 = vpack.c.b16 %v704, %v700
  %v989 = vpack.c.b16 %v705, %v701
  %v990 = vpack.c.b16 %v710, %v706
  %v991 = vpack.c.b16 %v711, %v707
  %v992 = vpack.c.b16 %v712, %v708
  %v993 = vpack.c.b16 %v713, %v709
  %v994 = vpack.c.b16 %v718, %v714
  %v995 = vpack.c.b16 %v719, %v715
  %v996 = vpack.c.b16 %v720, %v716
  %v997 = vpack.c.b16 %v721, %v717
  %v998 = vpack.c.b16 %v726, %v722
  %v999 = vpack.c.b16 %v727, %v723
  %v1000 = vpack.c.b16 %v728, %v724
  %v1001 = vpack.c.b16 %v729, %v725
  %v1002 = vpack.c.b16 %v734, %v730
  %v1003 = vpack.c.b16 %v735, %v731
  %v1004 = vpack.c.b16 %v736, %v732
  %v1005 = vpack.c.b16 %v737, %v733
  %v1006 = vpack.c.b16 %v742, %v738
  %v1007 = vpack.c.b16 %v743, %v739
  %v1008 = vpack.c.b16 %v744, %v740
  %v1009 = vpack.c.b16 %v745, %v741
  %v1010 = vpack.c.b16 %v750, %v746
  %v1011 = vpack.c.b16 %v751, %v747
  %v1012 = vpack.c.b16 %v752, %v748
  %v1013 = vpack.c.b16 %v753, %v749
  %v1014 = vpack.c.b16 %v758, %v754
  %v1015 = vpack.c.b16 %v759, %v755
  %v1016 = vpack.c.b16 %v760, %v756
  %v1017 = vpack.c.b16 %v761, %v757
  %v1018 = vpack.c.b16 %v766, %v762
  %v1019 = vpack.c.b16 %v767, %v763
  %v1020 = vpack.c.b16 %v768, %v764
  %v1021 = vpack.c.b16 %v769, %v765
  %v1022 = vpack.c.b16 %v774, %v770
  %v1023 = vpack.c.b16 %v775, %v771
  %v1024 = vpack.c.b16 %v776, %v772
  %v1025 = vpack.c.b16 %v777, %v773
  %v1026 = vpack.c.b16 %v782, %v778
  %v1027 = vpack.c.b16 %v783, %v779
  %v1028 = vpack.c.b16 %v784, %v780
  %v1029 = vpack.c.b16 %v785, %v781
  %v1030 = vpack.c.b16 %v790, %v786
  %v1031 = vpack.c.b16 %v791, %v787
  %v1032 = vpack.c.b16 %v792, %v788
  %v1033 = vpack.c.b16 %v793, %v789
  %v1034 = vpack.c.b16 %v798, %v794
  %v1035 = vpack.c.b16 %v799, %v795
  %v1036 = vpack.c.b16 %v800, %v796
  %v1037 = vpack.c.b16 %v801, %v797
  %v1038 = vpack.c.b16 %v806, %v802
  %v1039 = vpack.c.b16 %v807, %v803
  %v1040 = vpack.c.b16 %v808, %v804
  %v1041 = vpack.c.b16 %v809, %v805
  %v1042 = vpack.c.b16 %v814, %v810
  %v1043 = vpack.c.b16 %v815, %v811
  %v1044 = vpack.c.b16 %v816, %v812
  %v1045 = vpack.c.b16 %v817, %v813
  %v1046 = vpack.c.b16 %v822, %v818
  %v1047 = vpack.c.b16 %v823, %v819
  %v1048 = vpack.c.b16 %v824, %v820
  %v1049 = vpack.c.b16 %v825, %v821
  %v1050 = vpack.c.b16 %v830, %v826
  %v1051 = vpack.c.b16 %v831, %v827
  %v1052 = vpack.c.b16 %v832, %v828
  %v1053 = vpack.c.b16 %v833, %v829
  %v1054 = vpack.c.b16 %v838, %v834
  %v1055 = vpack.c.b16 %v839, %v835
  %v1056 = vpack.c.b16 %v840, %v836
  %v1057 = vpack.c.b16 %v841, %v837
  %v1058 = vpack.c.b16 %v846, %v842
  %v1059 = vpack.c.b16 %v847, %v843
  %v1060 = vpack.c.b16 %v848, %v844
  %v1061 = vpack.c.b16 %v849, %v845
  %v1062 = vpack.c.b16 %v854, %v850
  %v1063 = vpack.c.b16 %v855, %v851
  %v1064 = vpack.c.b16 %v856, %v852
  %v1065 = vpack.c.b16 %v857, %v853
  %v1066 = vpack.c.b16 %v862, %v858
  %v1067 = vpack.c.b16 %v863, %v859
  %v1068 = vpack.c.b16 %v864, %v860
  %v1069 = vpack.c.b16 %v865, %v861
  %v1070 = vpack.c.b16 %v870, %v866
  %v1071 = vpack.c.b16 %v871, %v867
  %v1072 = vpack.c.b16 %v872, %v868
  %v1073 = vpack.c.b16 %v873, %v869
  %vm1274 = vcmask 261120
  %v1276 = vsel %vm1274, %v267, 0
  %1278 = vmatpush.bf16.msra.mxu0 %v902
  %1279 = vmatpush.bf16.msra.mxu0 %v898
  %1280 = vmatpush.bf16.msra.mxu0 %v894
  %1281 = vmatpush.bf16.msra.mxu0 %v890
  %1282 = vmatpush.bf16.msra.mxu0 %v886
  %1283 = vmatpush.bf16.msra.mxu0 %v882
  %1284 = vmatpush.bf16.msra.mxu0 %v878
  %1285 = vmatpush.bf16.msra.mxu0 %v874
  %1286 = vmatmul.bf16.gmra.mxu0 %v261
  %v1287 = vpop.f32.mrf.mxu0
  %v1288 = vadd.f32 %v231, %v1287
  %v1289 = vpop.f32.mrf.mxu0
  %v1290 = vadd.f32 %v231, %v1289
  %1291 = vdwg.mxu0
  %1292 = vmatpush.bf16.msra.mxu0 %v934
  %1293 = vmatpush.bf16.msra.mxu0 %v930
  %1294 = vmatpush.bf16.msra.mxu0 %v926
  %1295 = vmatpush.bf16.msra.mxu0 %v922
  %1296 = vmatpush.bf16.msra.mxu0 %v918
  %1297 = vmatpush.bf16.msra.mxu0 %v914
  %1298 = vmatpush.bf16.msra.mxu0 %v910
  %1299 = vmatpush.bf16.msra.mxu0 %v906
  %1300 = vmatmul.bf16.gmra.mxu0 %v262
  %v1301 = vpop.f32.mrf.mxu0
  %v1302 = vadd.f32 %v1288, %v1301
  %v1303 = vpop.f32.mrf.mxu0
  %v1304 = vadd.f32 %v1290, %v1303
  %1305 = vdwg.mxu0
  %1306 = vmatpush.bf16.msra.mxu0 %v966
  %1307 = vmatpush.bf16.msra.mxu0 %v962
  %1308 = vmatpush.bf16.msra.mxu0 %v958
  %1309 = vmatpush.bf16.msra.mxu0 %v954
  %1310 = vmatpush.bf16.msra.mxu0 %v950
  %1311 = vmatpush.bf16.msra.mxu0 %v946
  %1312 = vmatpush.bf16.msra.mxu0 %v942
  %1313 = vmatpush.bf16.msra.mxu0 %v938
  %1314 = vmatmul.bf16.gmra.mxu0 %v263
  %v1315 = vpop.f32.mrf.mxu0
  %v1316 = vadd.f32 %v1302, %v1315
  %v1317 = vpop.f32.mrf.mxu0
  %v1318 = vadd.f32 %v1304, %v1317
  %1319 = vdwg.mxu0
  %1320 = vmatpush.bf16.msra.mxu0 %v998
  %1321 = vmatpush.bf16.msra.mxu0 %v994
  %1322 = vmatpush.bf16.msra.mxu0 %v990
  %1323 = vmatpush.bf16.msra.mxu0 %v986
  %1324 = vmatpush.bf16.msra.mxu0 %v982
  %1325 = vmatpush.bf16.msra.mxu0 %v978
  %1326 = vmatpush.bf16.msra.mxu0 %v974
  %1327 = vmatpush.bf16.msra.mxu0 %v970
  %1328 = vmatmul.bf16.gmra.mxu0 %v264
  %v1329 = vpop.f32.mrf.mxu0
  %v1330 = vadd.f32 %v1316, %v1329
  %v1331 = vpop.f32.mrf.mxu0
  %v1332 = vadd.f32 %v1318, %v1331
  %1333 = vdwg.mxu0
  %1334 = vmatpush.bf16.msra.mxu0 %v1030
  %1335 = vmatpush.bf16.msra.mxu0 %v1026
  %1336 = vmatpush.bf16.msra.mxu0 %v1022
  %1337 = vmatpush.bf16.msra.mxu0 %v1018
  %1338 = vmatpush.bf16.msra.mxu0 %v1014
  %1339 = vmatpush.bf16.msra.mxu0 %v1010
  %1340 = vmatpush.bf16.msra.mxu0 %v1006
  %1341 = vmatpush.bf16.msra.mxu0 %v1002
  %1342 = vmatmul.bf16.gmra.mxu0 %v265
  %v1343 = vpop.f32.mrf.mxu0
  %v1344 = vadd.f32 %v1330, %v1343
  %v1345 = vpop.f32.mrf.mxu0
  %v1346 = vadd.f32 %v1332, %v1345
  %1347 = vdwg.mxu0
  %1348 = vmatpush.bf16.msra.mxu0 %v1062
  %1349 = vmatpush.bf16.msra.mxu0 %v1058
  %1350 = vmatpush.bf16.msra.mxu0 %v1054
  %1351 = vmatpush.bf16.msra.mxu0 %v1050
  %1352 = vmatpush.bf16.msra.mxu0 %v1046
  %1353 = vmatpush.bf16.msra.mxu0 %v1042
  %1354 = vmatpush.bf16.msra.mxu0 %v1038
  %1355 = vmatpush.bf16.msra.mxu0 %v1034
  %1356 = vmatmul.bf16.gmra.mxu0 %v266
  %v1357 = vpop.f32.mrf.mxu0
  %v1358 = vadd.f32 %v1344, %v1357
  %v1359 = vpop.f32.mrf.mxu0
  %v1360 = vadd.f32 %v1346, %v1359
  %1361 = vdwg.mxu0
  %1362 = vmatpush.bf16.msra.mxu0 0
  %1363 = vmatpush.bf16.msra.mxu0 0
  %1364 = vmatpush.bf16.msra.mxu0 0
  %1365 = vmatpush.bf16.msra.mxu0 0
  %1366 = vmatpush.bf16.msra.mxu0 0
  %1367 = vmatpush.bf16.msra.mxu0 0
  %1368 = vmatpush.bf16.msra.mxu0 %v1070
  %1369 = vmatpush.bf16.msra.mxu0 %v1066
  %1370 = vmatmul.bf16.gmra.mxu0 %v1276
  %v1371 = vpop.f32.mrf.mxu0
  %v1372 = vadd.f32 %v1358, %v1371
  %v1373 = vpop.f32.mrf.mxu0
  %v1374 = vadd.f32 %v1360, %v1373
  %1375 = vdwg.mxu0
  %1376 = vmatpush.bf16.msra.mxu0 %v903
  %1377 = vmatpush.bf16.msra.mxu0 %v899
  %1378 = vmatpush.bf16.msra.mxu0 %v895
  %1379 = vmatpush.bf16.msra.mxu0 %v891
  %1380 = vmatpush.bf16.msra.mxu0 %v887
  %1381 = vmatpush.bf16.msra.mxu0 %v883
  %1382 = vmatpush.bf16.msra.mxu0 %v879
  %1383 = vmatpush.bf16.msra.mxu0 %v875
  %1384 = vmatmul.bf16.gmra.mxu0 %v261
  %v1385 = vpop.f32.mrf.mxu0
  %v1386 = vadd.f32 %v232, %v1385
  %v1387 = vpop.f32.mrf.mxu0
  %v1388 = vadd.f32 %v232, %v1387
  %1389 = vdwg.mxu0
  %1390 = vmatpush.bf16.msra.mxu0 %v935
  %1391 = vmatpush.bf16.msra.mxu0 %v931
  %1392 = vmatpush.bf16.msra.mxu0 %v927
  %1393 = vmatpush.bf16.msra.mxu0 %v923
  %1394 = vmatpush.bf16.msra.mxu0 %v919
  %1395 = vmatpush.bf16.msra.mxu0 %v915
  %1396 = vmatpush.bf16.msra.mxu0 %v911
  %1397 = vmatpush.bf16.msra.mxu0 %v907
  %1398 = vmatmul.bf16.gmra.mxu0 %v262
  %v1399 = vpop.f32.mrf.mxu0
  %v1400 = vadd.f32 %v1386, %v1399
  %v1401 = vpop.f32.mrf.mxu0
  %v1402 = vadd.f32 %v1388, %v1401
  %1403 = vdwg.mxu0
  %1404 = vmatpush.bf16.msra.mxu0 %v967
  %1405 = vmatpush.bf16.msra.mxu0 %v963
  %1406 = vmatpush.bf16.msra.mxu0 %v959
  %1407 = vmatpush.bf16.msra.mxu0 %v955
  %1408 = vmatpush.bf16.msra.mxu0 %v951
  %1409 = vmatpush.bf16.msra.mxu0 %v947
  %1410 = vmatpush.bf16.msra.mxu0 %v943
  %1411 = vmatpush.bf16.msra.mxu0 %v939
  %1412 = vmatmul.bf16.gmra.mxu0 %v263
  %v1413 = vpop.f32.mrf.mxu0
  %v1414 = vadd.f32 %v1400, %v1413
  %v1415 = vpop.f32.mrf.mxu0
  %v1416 = vadd.f32 %v1402, %v1415
  %1417 = vdwg.mxu0
  %1418 = vmatpush.bf16.msra.mxu0 %v999
  %1419 = vmatpush.bf16.msra.mxu0 %v995
  %1420 = vmatpush.bf16.msra.mxu0 %v991
  %1421 = vmatpush.bf16.msra.mxu0 %v987
  %1422 = vmatpush.bf16.msra.mxu0 %v983
  %1423 = vmatpush.bf16.msra.mxu0 %v979
  %1424 = vmatpush.bf16.msra.mxu0 %v975
  %1425 = vmatpush.bf16.msra.mxu0 %v971
  %1426 = vmatmul.bf16.gmra.mxu0 %v264
  %v1427 = vpop.f32.mrf.mxu0
  %v1428 = vadd.f32 %v1414, %v1427
  %v1429 = vpop.f32.mrf.mxu0
  %v1430 = vadd.f32 %v1416, %v1429
  %1431 = vdwg.mxu0
  %1432 = vmatpush.bf16.msra.mxu0 %v1031
  %1433 = vmatpush.bf16.msra.mxu0 %v1027
  %1434 = vmatpush.bf16.msra.mxu0 %v1023
  %1435 = vmatpush.bf16.msra.mxu0 %v1019
  %1436 = vmatpush.bf16.msra.mxu0 %v1015
  %1437 = vmatpush.bf16.msra.mxu0 %v1011
  %1438 = vmatpush.bf16.msra.mxu0 %v1007
  %1439 = vmatpush.bf16.msra.mxu0 %v1003
  %1440 = vmatmul.bf16.gmra.mxu0 %v265
  %v1441 = vpop.f32.mrf.mxu0
  %v1442 = vadd.f32 %v1428, %v1441
  %v1443 = vpop.f32.mrf.mxu0
  %v1444 = vadd.f32 %v1430, %v1443
  %1445 = vdwg.mxu0
  %1446 = vmatpush.bf16.msra.mxu0 %v1063
  %1447 = vmatpush.bf16.msra.mxu0 %v1059
  %1448 = vmatpush.bf16.msra.mxu0 %v1055
  %1449 = vmatpush.bf16.msra.mxu0 %v1051
  %1450 = vmatpush.bf16.msra.mxu0 %v1047
  %1451 = vmatpush.bf16.msra.mxu0 %v1043
  %1452 = vmatpush.bf16.msra.mxu0 %v1039
  %1453 = vmatpush.bf16.msra.mxu0 %v1035
  %1454 = vmatmul.bf16.gmra.mxu0 %v266
  %v1455 = vpop.f32.mrf.mxu0
  %v1456 = vadd.f32 %v1442, %v1455
  %v1457 = vpop.f32.mrf.mxu0
  %v1458 = vadd.f32 %v1444, %v1457
  %1459 = vdwg.mxu0
  %1460 = vmatpush.bf16.msra.mxu0 0
  %1461 = vmatpush.bf16.msra.mxu0 0
  %1462 = vmatpush.bf16.msra.mxu0 0
  %1463 = vmatpush.bf16.msra.mxu0 0
  %1464 = vmatpush.bf16.msra.mxu0 0
  %1465 = vmatpush.bf16.msra.mxu0 0
  %1466 = vmatpush.bf16.msra.mxu0 %v1071
  %1467 = vmatpush.bf16.msra.mxu0 %v1067
  %1468 = vmatmul.bf16.gmra.mxu0 %v1276
  %v1469 = vpop.f32.mrf.mxu0
  %v1470 = vadd.f32 %v1456, %v1469
  %v1471 = vpop.f32.mrf.mxu0
  %v1472 = vadd.f32 %v1458, %v1471
  %1473 = vdwg.mxu0
  %1474 = vmatpush.bf16.msra.mxu0 %v904
  %1475 = vmatpush.bf16.msra.mxu0 %v900
  %1476 = vmatpush.bf16.msra.mxu0 %v896
  %1477 = vmatpush.bf16.msra.mxu0 %v892
  %1478 = vmatpush.bf16.msra.mxu0 %v888
  %1479 = vmatpush.bf16.msra.mxu0 %v884
  %1480 = vmatpush.bf16.msra.mxu0 %v880
  %1481 = vmatpush.bf16.msra.mxu0 %v876
  %1482 = vmatmul.bf16.gmra.mxu0 %v261
  %v1483 = vpop.f32.mrf.mxu0
  %v1484 = vadd.f32 %v233, %v1483
  %v1485 = vpop.f32.mrf.mxu0
  %v1486 = vadd.f32 %v233, %v1485
  %1487 = vdwg.mxu0
  %1488 = vmatpush.bf16.msra.mxu0 %v936
  %1489 = vmatpush.bf16.msra.mxu0 %v932
  %1490 = vmatpush.bf16.msra.mxu0 %v928
  %1491 = vmatpush.bf16.msra.mxu0 %v924
  %1492 = vmatpush.bf16.msra.mxu0 %v920
  %1493 = vmatpush.bf16.msra.mxu0 %v916
  %1494 = vmatpush.bf16.msra.mxu0 %v912
  %1495 = vmatpush.bf16.msra.mxu0 %v908
  %1496 = vmatmul.bf16.gmra.mxu0 %v262
  %v1497 = vpop.f32.mrf.mxu0
  %v1498 = vadd.f32 %v1484, %v1497
  %v1499 = vpop.f32.mrf.mxu0
  %v1500 = vadd.f32 %v1486, %v1499
  %1501 = vdwg.mxu0
  %1502 = vmatpush.bf16.msra.mxu0 %v968
  %1503 = vmatpush.bf16.msra.mxu0 %v964
  %1504 = vmatpush.bf16.msra.mxu0 %v960
  %1505 = vmatpush.bf16.msra.mxu0 %v956
  %1506 = vmatpush.bf16.msra.mxu0 %v952
  %1507 = vmatpush.bf16.msra.mxu0 %v948
  %1508 = vmatpush.bf16.msra.mxu0 %v944
  %1509 = vmatpush.bf16.msra.mxu0 %v940
  %1510 = vmatmul.bf16.gmra.mxu0 %v263
  %v1511 = vpop.f32.mrf.mxu0
  %v1512 = vadd.f32 %v1498, %v1511
  %v1513 = vpop.f32.mrf.mxu0
  %v1514 = vadd.f32 %v1500, %v1513
  %1515 = vdwg.mxu0
  %1516 = vmatpush.bf16.msra.mxu0 %v1000
  %1517 = vmatpush.bf16.msra.mxu0 %v996
  %1518 = vmatpush.bf16.msra.mxu0 %v992
  %1519 = vmatpush.bf16.msra.mxu0 %v988
  %1520 = vmatpush.bf16.msra.mxu0 %v984
  %1521 = vmatpush.bf16.msra.mxu0 %v980
  %1522 = vmatpush.bf16.msra.mxu0 %v976
  %1523 = vmatpush.bf16.msra.mxu0 %v972
  %1524 = vmatmul.bf16.gmra.mxu0 %v264
  %v1525 = vpop.f32.mrf.mxu0
  %v1526 = vadd.f32 %v1512, %v1525
  %v1527 = vpop.f32.mrf.mxu0
  %v1528 = vadd.f32 %v1514, %v1527
  %1529 = vdwg.mxu0
  %1530 = vmatpush.bf16.msra.mxu0 %v1032
  %1531 = vmatpush.bf16.msra.mxu0 %v1028
  %1532 = vmatpush.bf16.msra.mxu0 %v1024
  %1533 = vmatpush.bf16.msra.mxu0 %v1020
  %1534 = vmatpush.bf16.msra.mxu0 %v1016
  %1535 = vmatpush.bf16.msra.mxu0 %v1012
  %1536 = vmatpush.bf16.msra.mxu0 %v1008
  %1537 = vmatpush.bf16.msra.mxu0 %v1004
  %1538 = vmatmul.bf16.gmra.mxu0 %v265
  %v1539 = vpop.f32.mrf.mxu0
  %v1540 = vadd.f32 %v1526, %v1539
  %v1541 = vpop.f32.mrf.mxu0
  %v1542 = vadd.f32 %v1528, %v1541
  %1543 = vdwg.mxu0
  %1544 = vmatpush.bf16.msra.mxu0 %v1064
  %1545 = vmatpush.bf16.msra.mxu0 %v1060
  %1546 = vmatpush.bf16.msra.mxu0 %v1056
  %1547 = vmatpush.bf16.msra.mxu0 %v1052
  %1548 = vmatpush.bf16.msra.mxu0 %v1048
  %1549 = vmatpush.bf16.msra.mxu0 %v1044
  %1550 = vmatpush.bf16.msra.mxu0 %v1040
  %1551 = vmatpush.bf16.msra.mxu0 %v1036
  %1552 = vmatmul.bf16.gmra.mxu0 %v266
  %v1553 = vpop.f32.mrf.mxu0
  %v1554 = vadd.f32 %v1540, %v1553
  %v1555 = vpop.f32.mrf.mxu0
  %v1556 = vadd.f32 %v1542, %v1555
  %1557 = vdwg.mxu0
  %1558 = vmatpush.bf16.msra.mxu0 0
  %1559 = vmatpush.bf16.msra.mxu0 0
  %1560 = vmatpush.bf16.msra.mxu0 0
  %1561 = vmatpush.bf16.msra.mxu0 0
  %1562 = vmatpush.bf16.msra.mxu0 0
  %1563 = vmatpush.bf16.msra.mxu0 0
  %1564 = vmatpush.bf16.msra.mxu0 %v1072
  %1565 = vmatpush.bf16.msra.mxu0 %v1068
  %1566 = vmatmul.bf16.gmra.mxu0 %v1276
  %v1567 = vpop.f32.mrf.mxu0
  %v1568 = vadd.f32 %v1554, %v1567
  %v1569 = vpop.f32.mrf.mxu0
  %v1570 = vadd.f32 %v1556, %v1569
  %1571 = vdwg.mxu0
  %1572 = vmatpush.bf16.msra.mxu0 %v905
  %1573 = vmatpush.bf16.msra.mxu0 %v901
  %1574 = vmatpush.bf16.msra.mxu0 %v897
  %1575 = vmatpush.bf16.msra.mxu0 %v893
  %1576 = vmatpush.bf16.msra.mxu0 %v889
  %1577 = vmatpush.bf16.msra.mxu0 %v885
  %1578 = vmatpush.bf16.msra.mxu0 %v881
  %1579 = vmatpush.bf16.msra.mxu0 %v877
  %1580 = vmatmul.bf16.gmra.mxu0 %v261
  %v1581 = vpop.f32.mrf.mxu0
  %v1582 = vadd.f32 %v234, %v1581
  %v1583 = vpop.f32.mrf.mxu0
  %v1584 = vadd.f32 %v234, %v1583
  %1585 = vdwg.mxu0
  %1586 = vmatpush.bf16.msra.mxu0 %v937
  %1587 = vmatpush.bf16.msra.mxu0 %v933
  %1588 = vmatpush.bf16.msra.mxu0 %v929
  %1589 = vmatpush.bf16.msra.mxu0 %v925
  %1590 = vmatpush.bf16.msra.mxu0 %v921
  %1591 = vmatpush.bf16.msra.mxu0 %v917
  %1592 = vmatpush.bf16.msra.mxu0 %v913
  %1593 = vmatpush.bf16.msra.mxu0 %v909
  %1594 = vmatmul.bf16.gmra.mxu0 %v262
  %v1595 = vpop.f32.mrf.mxu0
  %v1596 = vadd.f32 %v1582, %v1595
  %v1597 = vpop.f32.mrf.mxu0
  %v1598 = vadd.f32 %v1584, %v1597
  %1599 = vdwg.mxu0
  %1600 = vmatpush.bf16.msra.mxu0 %v969
  %1601 = vmatpush.bf16.msra.mxu0 %v965
  %1602 = vmatpush.bf16.msra.mxu0 %v961
  %1603 = vmatpush.bf16.msra.mxu0 %v957
  %1604 = vmatpush.bf16.msra.mxu0 %v953
  %1605 = vmatpush.bf16.msra.mxu0 %v949
  %1606 = vmatpush.bf16.msra.mxu0 %v945
  %1607 = vmatpush.bf16.msra.mxu0 %v941
  %1608 = vmatmul.bf16.gmra.mxu0 %v263
  %v1609 = vpop.f32.mrf.mxu0
  %v1610 = vadd.f32 %v1596, %v1609
  %v1611 = vpop.f32.mrf.mxu0
  %v1612 = vadd.f32 %v1598, %v1611
  %1613 = vdwg.mxu0
  %1614 = vmatpush.bf16.msra.mxu0 %v1001
  %1615 = vmatpush.bf16.msra.mxu0 %v997
  %1616 = vmatpush.bf16.msra.mxu0 %v993
  %1617 = vmatpush.bf16.msra.mxu0 %v989
  %1618 = vmatpush.bf16.msra.mxu0 %v985
  %1619 = vmatpush.bf16.msra.mxu0 %v981
  %1620 = vmatpush.bf16.msra.mxu0 %v977
  %1621 = vmatpush.bf16.msra.mxu0 %v973
  %1622 = vmatmul.bf16.gmra.mxu0 %v264
  %v1623 = vpop.f32.mrf.mxu0
  %v1624 = vadd.f32 %v1610, %v1623
  %v1625 = vpop.f32.mrf.mxu0
  %v1626 = vadd.f32 %v1612, %v1625
  %1627 = vdwg.mxu0
  %1628 = vmatpush.bf16.msra.mxu0 %v1033
  %1629 = vmatpush.bf16.msra.mxu0 %v1029
  %1630 = vmatpush.bf16.msra.mxu0 %v1025
  %1631 = vmatpush.bf16.msra.mxu0 %v1021
  %1632 = vmatpush.bf16.msra.mxu0 %v1017
  %1633 = vmatpush.bf16.msra.mxu0 %v1013
  %1634 = vmatpush.bf16.msra.mxu0 %v1009
  %1635 = vmatpush.bf16.msra.mxu0 %v1005
  %1636 = vmatmul.bf16.gmra.mxu0 %v265
  %v1637 = vpop.f32.mrf.mxu0
  %v1638 = vadd.f32 %v1624, %v1637
  %v1639 = vpop.f32.mrf.mxu0
  %v1640 = vadd.f32 %v1626, %v1639
  %1641 = vdwg.mxu0
  %1642 = vmatpush.bf16.msra.mxu0 %v1065
  %1643 = vmatpush.bf16.msra.mxu0 %v1061
  %1644 = vmatpush.bf16.msra.mxu0 %v1057
  %1645 = vmatpush.bf16.msra.mxu0 %v1053
  %1646 = vmatpush.bf16.msra.mxu0 %v1049
  %1647 = vmatpush.bf16.msra.mxu0 %v1045
  %1648 = vmatpush.bf16.msra.mxu0 %v1041
  %1649 = vmatpush.bf16.msra.mxu0 %v1037
  %1650 = vmatmul.bf16.gmra.mxu0 %v266
  %v1651 = vpop.f32.mrf.mxu0
  %v1652 = vadd.f32 %v1638, %v1651
  %v1653 = vpop.f32.mrf.mxu0
  %v1654 = vadd.f32 %v1640, %v1653
  %1655 = vdwg.mxu0
  %1656 = vmatpush.bf16.msra.mxu0 0
  %1657 = vmatpush.bf16.msra.mxu0 0
  %1658 = vmatpush.bf16.msra.mxu0 0
  %1659 = vmatpush.bf16.msra.mxu0 0
  %1660 = vmatpush.bf16.msra.mxu0 0
  %1661 = vmatpush.bf16.msra.mxu0 0
  %1662 = vmatpush.bf16.msra.mxu0 %v1073
  %1663 = vmatpush.bf16.msra.mxu0 %v1069
  %1664 = vmatmul.bf16.gmra.mxu0 %v1276
  %v1665 = vpop.f32.mrf.mxu0
  %v1666 = vadd.f32 %v1652, %v1665
  %v1667 = vpop.f32.mrf.mxu0
  %v1668 = vadd.f32 %v1654, %v1667
  %1669 = vdwg.mxu0
  %v1670 = vmax.f32 %v1372, 0.0
  %v1671 = vmax.f32 %v1470, 0.0
  %v1672 = vmax.f32 %v1568, 0.0
  %v1673 = vmax.f32 %v1666, 0.0
  %v1674 = vmax.f32 %v1374, 0.0
  %v1675 = vmax.f32 %v1472, 0.0
  %v1676 = vmax.f32 %v1570, 0.0
  %v1677 = vmax.f32 %v1668, 0.0
  %v1678 = vpack.c.bf16 %v1674, %v1670
  %v1679 = vpack.c.bf16 %v1675, %v1671
  %v1680 = vpack.c.bf16 %v1676, %v1672
  %v1681 = vpack.c.bf16 %v1677, %v1673
  %v1682 = vld [vmem:[%s3] sm:$0xf]
  %v1683 = vld [vmem:[%s3 + $0x4] sm:$0xf]
  %v1684 = vld [vmem:[%s3 + $0x8] sm:$0xf]
  %v1685 = vld [vmem:[%s3 + $0xc] sm:$0xf]
  %v1686 = vld [vmem:[%s3 + $0x10] sm:$0xf]
  %v1687 = vld [vmem:[%s3 + $0x14] sm:$0xf]
  %v1688 = vld [vmem:[%s3 + $0x18] sm:$0xf]
  %v1689 = vld [vmem:[%s3 + $0x1c] sm:$0xf]
  %v1690 = vld [vmem:[%s3 + $0x20] sm:$0xf]
  %v1691 = vld [vmem:[%s3 + $0x24] sm:$0xf]
  %v1692 = vld [vmem:[%s3 + $0x28] sm:$0xf]
  %v1693 = vld [vmem:[%s3 + $0x2c] sm:$0xf]
  %v1694 = vld [vmem:[%s3 + $0x30] sm:$0xf]
  %v1695 = vld [vmem:[%s3 + $0x34] sm:$0xf]
  %v1696 = vld [vmem:[%s3 + $0x38] sm:$0xf]
  %v1697 = vld [vmem:[%s3 + $0x3c] sm:$0xf]
  %v1698 = vld [vmem:[%s3 + $0x40] sm:$0xf]
  %v1699 = vld [vmem:[%s3 + $0x44] sm:$0xf]
  %v1700 = vld [vmem:[%s3 + $0x48] sm:$0xf]
  %v1701 = vld [vmem:[%s3 + $0x4c] sm:$0xf]
  %v1702 = vld [vmem:[%s3 + $0x50] sm:$0xf]
  %v1703 = vld [vmem:[%s3 + $0x54] sm:$0xf]
  %v1704 = vld [vmem:[%s3 + $0x58] sm:$0xf]
  %v1705 = vld [vmem:[%s3 + $0x5c] sm:$0xf]
  %v1706 = vld [vmem:[%s3 + $0x60] sm:$0xf]
  %v1707 = vld [vmem:[%s3 + $0x64] sm:$0xf]
  %v1708 = vld [vmem:[%s3 + $0x68] sm:$0xf]
  %v1709 = vld [vmem:[%s3 + $0x6c] sm:$0xf]
  %v1710 = vld [vmem:[%s3 + $0x70] sm:$0xf]
  %v1711 = vld [vmem:[%s3 + $0x74] sm:$0xf]
  %v1712 = vld [vmem:[%s3 + $0x78] sm:$0xf]
  %v1713 = vld [vmem:[%s3 + $0x7c] sm:$0xf]
  %v1714 = vld [vmem:[%s3 + $0x80] sm:$0xf]
  %v1715 = vld [vmem:[%s3 + $0x84] sm:$0xf]
  %v1716 = vld [vmem:[%s3 + $0x88] sm:$0xf]
  %v1717 = vld [vmem:[%s3 + $0x8c] sm:$0xf]
  %v1718 = vld [vmem:[%s3 + $0x90] sm:$0xf]
  %v1719 = vld [vmem:[%s3 + $0x94] sm:$0xf]
  %v1720 = vld [vmem:[%s3 + $0x98] sm:$0xf]
  %v1721 = vld [vmem:[%s3 + $0x9c] sm:$0xf]
  %v1722 = vld [vmem:[%s3 + $0xa0] sm:$0xf]
  %v1723 = vld [vmem:[%s3 + $0xa4] sm:$0xf]
  %v1724 = vld [vmem:[%s3 + $0xa8] sm:$0xf]
  %v1725 = vld [vmem:[%s3 + $0xac] sm:$0xf]
  %v1726 = vld [vmem:[%s3 + $0xb0] sm:$0xf]
  %v1727 = vld [vmem:[%s3 + $0xb4] sm:$0xf]
  %v1728 = vld [vmem:[%s3 + $0xb8] sm:$0xf]
  %v1729 = vld [vmem:[%s3 + $0xbc] sm:$0xf]
  %v1730 = vld [vmem:[%s3 + $0xc0] sm:$0xf]
  %v1731 = vld [vmem:[%s3 + $0xc4] sm:$0xf]
  %v1732 = vld [vmem:[%s3 + $0xc8] sm:$0xf]
  %v1733 = vld [vmem:[%s3 + $0xcc] sm:$0xf]
  %v1734 = vld [vmem:[%s3 + $0xd0] sm:$0xf]
  %v1735 = vld [vmem:[%s3 + $0xd4] sm:$0xf]
  %v1736 = vld [vmem:[%s3 + $0xd8] sm:$0xf]
  %v1737 = vld [vmem:[%s3 + $0xdc] sm:$0xf]
  %v1738 = vld [vmem:[%s3 + $0xe0] sm:$0xf]
  %v1739 = vld [vmem:[%s3 + $0xe4] sm:$0xf]
  %v1740 = vld [vmem:[%s3 + $0xe8] sm:$0xf]
  %v1741 = vld [vmem:[%s3 + $0xec] sm:$0xf]
  %v1742 = vld [vmem:[%s3 + $0xf0] sm:$0xf]
  %v1743 = vld [vmem:[%s3 + $0xf4] sm:$0xf]
  %v1744 = vld [vmem:[%s3 + $0xf8] sm:$0x3]
  %v1745 = vld [vmem:[%s4] sm:$0x1]
  %v1747 = vperm.slane %v1745, 0
  %v1812 = vunpack.c.l.b16 %v1682
  %v1813 = vunpack.c.l.b16 %v1683
  %v1814 = vunpack.c.l.b16 %v1684
  %v1815 = vunpack.c.l.b16 %v1685
  %v1816 = vunpack.c.l.b16 %v1686
  %v1817 = vunpack.c.l.b16 %v1687
  %v1818 = vunpack.c.l.b16 %v1688
  %v1819 = vunpack.c.l.b16 %v1689
  %v1820 = vunpack.c.l.b16 %v1690
  %v1821 = vunpack.c.l.b16 %v1691
  %v1822 = vunpack.c.l.b16 %v1692
  %v1823 = vunpack.c.l.b16 %v1693
  %v1824 = vunpack.c.l.b16 %v1694
  %v1825 = vunpack.c.l.b16 %v1695
  %v1826 = vunpack.c.l.b16 %v1696
  %v1827 = vunpack.c.l.b16 %v1697
  %v1828 = vunpack.c.l.b16 %v1698
  %v1829 = vunpack.c.l.b16 %v1699
  %v1830 = vunpack.c.l.b16 %v1700
  %v1831 = vunpack.c.l.b16 %v1701
  %v1832 = vunpack.c.l.b16 %v1702
  %v1833 = vunpack.c.l.b16 %v1703
  %v1834 = vunpack.c.l.b16 %v1704
  %v1835 = vunpack.c.l.b16 %v1705
  %v1836 = vunpack.c.l.b16 %v1706
  %v1837 = vunpack.c.l.b16 %v1707
  %v1838 = vunpack.c.l.b16 %v1708
  %v1839 = vunpack.c.l.b16 %v1709
  %v1840 = vunpack.c.l.b16 %v1710
  %v1841 = vunpack.c.l.b16 %v1711
  %v1842 = vunpack.c.l.b16 %v1712
  %v1843 = vunpack.c.l.b16 %v1713
  %v1844 = vunpack.c.l.b16 %v1714
  %v1845 = vunpack.c.l.b16 %v1715
  %v1846 = vunpack.c.l.b16 %v1716
  %v1847 = vunpack.c.l.b16 %v1717
  %v1848 = vunpack.c.l.b16 %v1718
  %v1849 = vunpack.c.l.b16 %v1719
  %v1850 = vunpack.c.l.b16 %v1720
  %v1851 = vunpack.c.l.b16 %v1721
  %v1852 = vunpack.c.l.b16 %v1722
  %v1853 = vunpack.c.l.b16 %v1723
  %v1854 = vunpack.c.l.b16 %v1724
  %v1855 = vunpack.c.l.b16 %v1725
  %v1856 = vunpack.c.l.b16 %v1726
  %v1857 = vunpack.c.l.b16 %v1727
  %v1858 = vunpack.c.l.b16 %v1728
  %v1859 = vunpack.c.l.b16 %v1729
  %v1860 = vunpack.c.l.b16 %v1730
  %v1861 = vunpack.c.l.b16 %v1731
  %v1862 = vunpack.c.l.b16 %v1732
  %v1863 = vunpack.c.l.b16 %v1733
  %v1864 = vunpack.c.l.b16 %v1734
  %v1865 = vunpack.c.l.b16 %v1735
  %v1866 = vunpack.c.l.b16 %v1736
  %v1867 = vunpack.c.l.b16 %v1737
  %v1868 = vunpack.c.l.b16 %v1738
  %v1869 = vunpack.c.l.b16 %v1739
  %v1870 = vunpack.c.l.b16 %v1740
  %v1871 = vunpack.c.l.b16 %v1741
  %v1872 = vunpack.c.l.b16 %v1742
  %v1873 = vunpack.c.l.b16 %v1743
  %v1874 = vunpack.c.l.b16 %v1744
  %v1875 = vpack.c.b16 %v1813, %v1812
  %v1876 = vpack.c.b16 %v1815, %v1814
  %v1877 = vpack.c.b16 %v1817, %v1816
  %v1878 = vpack.c.b16 %v1819, %v1818
  %v1879 = vpack.c.b16 %v1821, %v1820
  %v1880 = vpack.c.b16 %v1823, %v1822
  %v1881 = vpack.c.b16 %v1825, %v1824
  %v1882 = vpack.c.b16 %v1827, %v1826
  %v1883 = vpack.c.b16 %v1829, %v1828
  %v1884 = vpack.c.b16 %v1831, %v1830
  %v1885 = vpack.c.b16 %v1833, %v1832
  %v1886 = vpack.c.b16 %v1835, %v1834
  %v1887 = vpack.c.b16 %v1837, %v1836
  %v1888 = vpack.c.b16 %v1839, %v1838
  %v1889 = vpack.c.b16 %v1841, %v1840
  %v1890 = vpack.c.b16 %v1843, %v1842
  %v1891 = vpack.c.b16 %v1845, %v1844
  %v1892 = vpack.c.b16 %v1847, %v1846
  %v1893 = vpack.c.b16 %v1849, %v1848
  %v1894 = vpack.c.b16 %v1851, %v1850
  %v1895 = vpack.c.b16 %v1853, %v1852
  %v1896 = vpack.c.b16 %v1855, %v1854
  %v1897 = vpack.c.b16 %v1857, %v1856
  %v1898 = vpack.c.b16 %v1859, %v1858
  %v1899 = vpack.c.b16 %v1861, %v1860
  %v1900 = vpack.c.b16 %v1863, %v1862
  %v1901 = vpack.c.b16 %v1865, %v1864
  %v1902 = vpack.c.b16 %v1867, %v1866
  %v1903 = vpack.c.b16 %v1869, %v1868
  %v1904 = vpack.c.b16 %v1871, %v1870
  %v1905 = vpack.c.b16 %v1873, %v1872
  %v1906 = vpack.c.b16 %v1874, %v1874
  %vm1938 = vcmask 949248
  %v1940 = vsel %vm1938, %v1681, 0
  %vm1942 = vcmask 1041408
  %v1944 = vsel %vm1942, %v1906, 0
  %1946 = vmatpush.bf16.msra.mxu0 %v1882
  %1947 = vmatpush.bf16.msra.mxu0 %v1881
  %1948 = vmatpush.bf16.msra.mxu0 %v1880
  %1949 = vmatpush.bf16.msra.mxu0 %v1879
  %1950 = vmatpush.bf16.msra.mxu0 %v1878
  %1951 = vmatpush.bf16.msra.mxu0 %v1877
  %1952 = vmatpush.bf16.msra.mxu0 %v1876
  %1953 = vmatpush.bf16.msra.mxu0 %v1875
  %1954 = vmatmul.bf16.gmra.mxu0 %v1678
  %v1955 = vpop.f32.mrf.mxu0
  %v1956 = vadd.f32 %v1747, %v1955
  %v1957 = vpop.f32.mrf.mxu0
  %v1958 = vadd.f32 %v1747, %v1957
  %1959 = vdwg.mxu0
  %1960 = vmatpush.bf16.msra.mxu0 %v1890
  %1961 = vmatpush.bf16.msra.mxu0 %v1889
  %1962 = vmatpush.bf16.msra.mxu0 %v1888
  %1963 = vmatpush.bf16.msra.mxu0 %v1887
  %1964 = vmatpush.bf16.msra.mxu0 %v1886
  %1965 = vmatpush.bf16.msra.mxu0 %v1885
  %1966 = vmatpush.bf16.msra.mxu0 %v1884
  %1967 = vmatpush.bf16.msra.mxu0 %v1883
  %1968 = vmatmul.bf16.gmra.mxu0 %v1679
  %v1969 = vpop.f32.mrf.mxu0
  %v1970 = vadd.f32 %v1956, %v1969
  %v1971 = vpop.f32.mrf.mxu0
  %v1972 = vadd.f32 %v1958, %v1971
  %1973 = vdwg.mxu0
  %1974 = vmatpush.bf16.msra.mxu0 %v1898
  %1975 = vmatpush.bf16.msra.mxu0 %v1897
  %1976 = vmatpush.bf16.msra.mxu0 %v1896
  %1977 = vmatpush.bf16.msra.mxu0 %v1895
  %1978 = vmatpush.bf16.msra.mxu0 %v1894
  %1979 = vmatpush.bf16.msra.mxu0 %v1893
  %1980 = vmatpush.bf16.msra.mxu0 %v1892
  %1981 = vmatpush.bf16.msra.mxu0 %v1891
  %1982 = vmatmul.bf16.gmra.mxu0 %v1680
  %v1983 = vpop.f32.mrf.mxu0
  %v1984 = vadd.f32 %v1970, %v1983
  %v1985 = vpop.f32.mrf.mxu0
  %v1986 = vadd.f32 %v1972, %v1985
  %1987 = vdwg.mxu0
  %1988 = vmatpush.bf16.msra.mxu0 %v1944
  %1989 = vmatpush.bf16.msra.mxu0 %v1905
  %1990 = vmatpush.bf16.msra.mxu0 %v1904
  %1991 = vmatpush.bf16.msra.mxu0 %v1903
  %1992 = vmatpush.bf16.msra.mxu0 %v1902
  %1993 = vmatpush.bf16.msra.mxu0 %v1901
  %1994 = vmatpush.bf16.msra.mxu0 %v1900
  %1995 = vmatpush.bf16.msra.mxu0 %v1899
  %1996 = vmatmul.bf16.gmra.mxu0 %v1940
  %v1997 = vpop.f32.mrf.mxu0
  %v1998 = vadd.f32 %v1984, %v1997
  %v1999 = vpop.f32.mrf.mxu0
  %v2000 = vadd.f32 %v1986, %v1999
  %2001 = vdwg.mxu0
  %2002 = vmax.xlane.f32.xlu0 %v1998
  %v2003 = vpop.xlane.xlu0 %2002
  %2004 = vmax.xlane.f32.xlu0 %v2000
  %v2005 = vpop.xlane.xlu0 %2004
  %v2006 = vsub.f32 %v1998, %v2003
  %v2007 = vsub.f32 %v2000, %v2005
  %v2008 = vmul.f32 %v2006, 1.442695
  %v2009 = vpow.pop %v2008
  %v2010 = vmul.f32 %v2007, 1.442695
  %v2011 = vpow.pop %v2010
  %2012 = vadd.xlane.f32.xlu0 %v2009
  %v2013 = vpop.xlane.xlu0 %2012
  %2014 = vadd.xlane.f32.xlu0 %v2011
  %v2015 = vpop.xlane.xlu0 %2014
  %v2016 = vlog2.pop %v2013
  %v2017 = vmul.f32 %v2016, 0.6931472
  %v2018 = vlog2.pop %v2015
  %v2019 = vmul.f32 %v2018, 0.6931472
  %v2020 = vsub.f32 %v2006, %v2017
  %v2021 = vsub.f32 %v2007, %v2019
  %2022 = vst [vmem:[%s5] sm:$0xff] %v2020
  %2023 = vst [vmem:[%s5 + $0x8] sm:$0xff] %v2021
  // Predicated region
  $region22: #{net_forward.5} parent=0 // pred_check
    _
  $region23: #{net_forward.5} parent=0 // pred_check_branch
    %2025 = sbr.rel (0) target = $region25
  $region24: #{net_forward.5} parent=0 // pred_region
    _
  $region25: #{net_forward.5} parent=0 // pred_fallthru
    _
  // Predicated region
  $region26: #{net_forward.5} parent=0 // pred_check
    _
  $region27: #{net_forward.5} parent=0 // pred_check_branch
    %2027 = sbr.rel (0) target = $region29
  $region28: #{net_forward.5} parent=0 // pred_region
    _
  $region29: #{net_forward.5} parent=0 // pred_fallthru
    _

</llo_original>
